<compile_context>
chip_gen: v7x
topology: tpu7x:2x2x1
jax: 0.10.0
libtpu: 0.0.40
codegen_flags: <defaults>
</compile_context>

<pallas_src>
import functools

import jax
import jax.numpy as jnp
from jax.experimental import pallas as pl
from jax.experimental.pallas import tpu as pltpu

FILTER_SIZES = (3, 4, 5)
LANE = 128
SUBLANE = 8
TB_ALIGN = 16          # bf16 packs 16 sublanes per vreg -> keep TB % 16 == 0


def _round_up(x, m):
    return ((x + m - 1) // m) * m


def _make_kernel(TB, S, Lp, Ep, Fp):
    """Kernel closed over static shape/layout parameters."""
    max_fs = max(FILTER_SIZES)
    nb = len(FILTER_SIZES)

    def kernel(x_ref, wconv_ref, bconv_ref, wfc_ref, bfc_ref, out_ref):
        # x_ref block: [S_im, TB, Ep] bf16, time-major.  Leading-dim slices are
        # free; merging [Lp, TB] into one M dim is layout preserving (TB%16==0).
        x = x_ref[...]

        # im2col: fold the conv taps into the lane (K) dimension -> one
        # K-dense MXU matmul covers all three filter banks.
        lhs = jnp.concatenate([x[k:k + Lp] for k in range(max_fs)], axis=-1)
        lhs = lhs.reshape(Lp * TB, max_fs * Ep)                 # [M, 5*Ep]
        y = jnp.dot(lhs, wconv_ref[...],
                    preferred_element_type=jnp.float32)         # [M, 3*Fp] f32
        y = y.reshape(Lp, TB, nb * Fp)

        # Per filter size: max-pool over its valid window positions only.
        # (Positions >= S-fs+1 include zero-padded time rows with nonzero
        #  weights for that bank, so they must be excluded from the max.)
        feats = jnp.concatenate(
            [jnp.max(y[0:S - fs + 1, :, i * Fp:(i + 1) * Fp], axis=0)
             for i, fs in enumerate(FILTER_SIZES)], axis=-1)     # [TB, 3*Fp]

        # bias + ReLU commute with the time max (both monotone); applied once.
        feats = jnp.maximum(feats + bconv_ref[...], 0.0)

        # Dropout(0.5): identity at inference.
        logits = jnp.dot(feats.astype(wfc_ref.dtype), wfc_ref[...],
                         preferred_element_type=jnp.float32) + bfc_ref[...]
        out_ref[...] = logits.astype(out_ref.dtype)              # [TB, Cp]

    return kernel


def pack_params(params):
    """One-time packing of weights into the lane-dense kernel layouts.

    Call OUTSIDE the jitted forward and reuse the result across calls.
    """
    E = params["embedding"].shape[1]
    F = params["w3"].shape[-1]
    C = params["bfc"].shape[-1]
    Ep = _round_up(E, LANE)
    Fp = _round_up(F, LANE)
    Cp = _round_up(C, LANE)
    max_fs = max(FILTER_SIZES)
    nb = len(FILTER_SIZES)

    # Embedding table padded to Ep lanes, bf16 (gather then produces lane-dense
    # bf16 activations directly).
    table = jnp.pad(params["embedding"], ((0, 0), (0, Ep - E))
                    ).astype(jnp.bfloat16)

    # Conv weight: [max_fs*Ep, nb*Fp]; row block k / col block idx holds
    # W_{fs}[k] for k < fs, zeros elsewhere (padded E rows, padded F cols,
    # taps beyond fs).
    w_conv = jnp.zeros((max_fs * Ep, nb * Fp), jnp.float32)
    for idx, fs in enumerate(FILTER_SIZES):
        w = params[f"w{fs}"]                                   # [fs, E, F]
        for k in range(fs):
            w_conv = w_conv.at[k * Ep:k * Ep + E,
                               idx * Fp:idx * Fp + F].set(w[k])
    w_conv = w_conv.astype(jnp.bfloat16)

    # All three conv biases in one lane-dense row [1, nb*Fp] (f32).
    b_conv = jnp.concatenate(
        [jnp.pad(params[f"b{fs}"], ((0, 0), (0, Fp - F)))
         for fs in FILTER_SIZES], axis=-1).astype(jnp.float32)

    # FC weight [3F, C] -> [nb*Fp, Cp]; padded rows/cols zero.
    wfc = params["wfc"]
    wfc_p = jnp.zeros((nb * Fp, Cp), jnp.float32)
    for idx in range(nb):
        wfc_p = wfc_p.at[idx * Fp:idx * Fp + F, :C].set(
            wfc[idx * F:(idx + 1) * F, :])
    wfc_p = wfc_p.astype(jnp.bfloat16)
    bfc_p = jnp.pad(params["bfc"], ((0, 0), (0, Cp - C))).astype(jnp.float32)

    return {"table": table, "w_conv": w_conv, "b_conv": b_conv,
            "wfc": wfc_p, "bfc": bfc_p}


@functools.partial(jax.jit, static_argnames=("num_classes", "tb"))
def re_cnn_forward(input_ids, packed, *, num_classes, tb=32):
    assert tb % TB_ALIGN == 0, "batch tile must be a multiple of 16 (bf16)"
    table = packed["table"]                    # [V, Ep] bf16
    Ep = table.shape[1]
    Fp = packed["b_conv"].shape[-1] // len(FILTER_SIZES)
    Cp = packed["bfc"].shape[-1]

    B, S = input_ids.shape
    max_fs, min_fs = max(FILTER_SIZES), min(FILTER_SIZES)
    assert S >= max_fs

    # Batch tile: as large as requested, but keep >= 2 grid steps when
    # possible so both v7x TensorCores stay busy (harmless on v5e/v6e).
    TB = min(tb, _round_up(B, TB_ALIGN))
    if _round_up(B, TB) == TB and TB % (2 * TB_ALIGN) == 0:
        TB //= 2
    Bp = _round_up(B, TB)

    # im2col window positions (valid range of the smallest filter) and the
    # padded time extent the window taps may touch.
    Lp = S - min_fs + 1
    S_im = _round_up(Lp + max_fs - 1, SUBLANE)

    ids = input_ids
    if Bp != B:
        ids = jnp.pad(ids, ((0, Bp - B), (0, 0)))        # pad batch (token 0)
    # Embedding gather straight into time-major [S, Bp, Ep] bf16 (glue op).
    emb_t = jnp.take(table, ids.T, axis=0)
    if S_im != S:
        emb_t = jnp.pad(emb_t, ((0, S_im - S), (0, 0), (0, 0)))

    kernel = _make_kernel(TB, S, Lp, Ep, Fp)

    out = pl.pallas_call(
        kernel,
        out_shape=jax.ShapeDtypeStruct((Bp, Cp), jnp.float32),
        grid_spec=pltpu.PrefetchScalarGridSpec(
            num_scalar_prefetch=0,
            grid=(Bp // TB,),
            in_specs=[
                pl.BlockSpec((S_im, TB, Ep), lambda b: (0, b, 0)),
                pl.BlockSpec(packed["w_conv"].shape, lambda b: (0, 0)),
                pl.BlockSpec(packed["b_conv"].shape, lambda b: (0, 0)),
                pl.BlockSpec(packed["wfc"].shape, lambda b: (0, 0)),
                pl.BlockSpec(packed["bfc"].shape, lambda b: (0, 0)),
            ],
            out_specs=pl.BlockSpec((TB, Cp), lambda b: (b, 0)),
        ),
        compiler_params=pltpu.CompilerParams(
            dimension_semantics=("parallel",),
            vmem_limit_bytes=48 * 1024 * 1024),   # stays under v7x's 64 MiB
    )(emb_t, packed["w_conv"], packed["b_conv"], packed["wfc"], packed["bfc"])

    return out[:B, :num_classes]


def init_params(key, vocab_size, num_classes, embedding_dim, num_filters):
    ks = jax.random.split(key, 9)
    params = {
        "embedding": jax.random.normal(ks[0], (vocab_size, embedding_dim),
                                       jnp.float32) * 0.1,
    }
    # Conv weights as [fs, E, F] (torch Conv2d weight [F, 1, fs, E] transposed).
    for i, fs in enumerate(FILTER_SIZES):
        params[f"w{fs}"] = jax.random.normal(
            ks[1 + 2 * i], (fs, embedding_dim, num_filters), jnp.float32) * 0.05
        params[f"b{fs}"] = jax.random.normal(
            ks[2 + 2 * i], (1, num_filters), jnp.float32) * 0.05
    # FC weight as [3F, C] (torch Linear weight [C, 3F] transposed).
    params["wfc"] = jax.random.normal(
        ks[7], (len(FILTER_SIZES) * num_filters, num_classes),
        jnp.float32) * 0.05
    params["bfc"] = jax.random.normal(ks[8], (1, num_classes),
                                      jnp.float32) * 0.05
    return params


def re_cnn_reference(input_ids, params):
    """Plain-JAX forward matching the PyTorch module in eval mode (f32)."""
    emb = jnp.take(params["embedding"], input_ids, axis=0)       # [B, S, E]
    S = emb.shape[1]
    feats = []
    for fs in FILTER_SIZES:
        w, b = params[f"w{fs}"], params[f"b{fs}"]
        L = S - fs + 1
        conv = sum(jnp.einsum("bse,ef->bsf", emb[:, k:k + L, :], w[k])
                   for k in range(fs)) + b[None]
        feats.append(jnp.max(jax.nn.relu(conv), axis=1))         # [B, F]
    x = jnp.concatenate(feats, axis=-1)
    return x @ params["wfc"] + params["bfc"]


if __name__ == "__main__":
    vocab_size = 50
    num_classes = 4
    embedding_dim = 32
    num_filters = 8
    batch = 64
    seq = 16

    key = jax.random.PRNGKey(0)
    k_par, k_ids = jax.random.split(key)
    params = init_params(k_par, vocab_size, num_classes, embedding_dim,
                         num_filters)
    packed = pack_params(params)          # one-time packing, outside jit
    input_ids = jax.random.randint(k_ids, (batch, seq), 0, vocab_size,
                                   jnp.int32)

    logits = re_cnn_forward(input_ids, packed, num_classes=num_classes, tb=32)
    jax.block_until_ready(logits)
    assert logits.shape == (batch, num_classes)

    ref = re_cnn_reference(input_ids, params)
    max_err = float(jnp.max(jnp.abs(logits - ref)))
    assert max_err < 1e-2, f"kernel/reference mismatch: max_err={max_err}"
    print("KERNEL_OK")
</pallas_src>

<mosaic_0001>
module attributes {stable_mosaic.version = 11 : i64} {
  func.func @kernel(%arg0: i32, %arg1: memref<24x32x128xbf16, #tpu.memory_space<vmem>>, %arg2: memref<640x384xbf16, #tpu.memory_space<vmem>>, %arg3: memref<1x384xf32, #tpu.memory_space<vmem>>, %arg4: memref<384x128xbf16, #tpu.memory_space<vmem>>, %arg5: memref<1x128xf32, #tpu.memory_space<vmem>>, %arg6: memref<32x128xf32, #tpu.memory_space<vmem>>) attributes {dimension_semantics = [#tpu.dimension_semantics<parallel>], iteration_bounds = array<i64: 2>, scalar_prefetch = 0 : i64, scratch_operands = 0 : i64, tpu.core_type = #tpu.core_type<tc>, window_params = [{transform_indices = @transform_0, window_bounds = array<i64: 24, 32, 128>}, {pipeline_mode = #tpu.pipeline_mode<synchronous>, transform_indices = @transform_1, window_bounds = array<i64: 640, 384>}, {pipeline_mode = #tpu.pipeline_mode<synchronous>, transform_indices = @transform_2, window_bounds = array<i64: 1, 384>}, {pipeline_mode = #tpu.pipeline_mode<synchronous>, transform_indices = @transform_3, window_bounds = array<i64: 384, 128>}, {pipeline_mode = #tpu.pipeline_mode<synchronous>, transform_indices = @transform_4, window_bounds = array<i64: 1, 128>}, {transform_indices = @transform_5, window_bounds = array<i64: 32, 128>}]} {
    %c0 = arith.constant 0 : index
    %c0_0 = arith.constant 0 : index
    %c0_1 = arith.constant 0 : index
    %0 = vector.load %arg1[%c0, %c0_0, %c0_1] : memref<24x32x128xbf16, #tpu.memory_space<vmem>>, vector<24x32x128xbf16>
    %1 = vector.extract_strided_slice %0 {offsets = [0, 0, 0], sizes = [14, 32, 128], strides = [1, 1, 1]} : vector<24x32x128xbf16> to vector<14x32x128xbf16>
    %2 = vector.extract_strided_slice %0 {offsets = [1, 0, 0], sizes = [14, 32, 128], strides = [1, 1, 1]} : vector<24x32x128xbf16> to vector<14x32x128xbf16>
    %3 = vector.extract_strided_slice %0 {offsets = [2, 0, 0], sizes = [14, 32, 128], strides = [1, 1, 1]} : vector<24x32x128xbf16> to vector<14x32x128xbf16>
    %4 = vector.extract_strided_slice %0 {offsets = [3, 0, 0], sizes = [14, 32, 128], strides = [1, 1, 1]} : vector<24x32x128xbf16> to vector<14x32x128xbf16>
    %5 = vector.extract_strided_slice %0 {offsets = [4, 0, 0], sizes = [14, 32, 128], strides = [1, 1, 1]} : vector<24x32x128xbf16> to vector<14x32x128xbf16>
    %6 = tpu.concatenate %1, %2, %3, %4, %5 in 2 : vector<14x32x128xbf16>, vector<14x32x128xbf16>, vector<14x32x128xbf16>, vector<14x32x128xbf16>, vector<14x32x128xbf16> -> vector<14x32x640xbf16>
    %7 = vector.shape_cast %6 : vector<14x32x640xbf16> to vector<448x640xbf16>
    %c0_2 = arith.constant 0 : index
    %c0_3 = arith.constant 0 : index
    %8 = vector.load %arg2[%c0_2, %c0_3] : memref<640x384xbf16, #tpu.memory_space<vmem>>, vector<640x384xbf16>
    %cst = arith.constant dense<0.000000e+00> : vector<448x384xf32>
    %9 = tpu.matmul %7, %8, %cst {dimension_numbers = #tpu.dot_dimension_numbers<[1], [0], [0], [1], [0, 0, 1, 1], [], []>} : vector<448x640xbf16>, vector<640x384xbf16>, vector<448x384xf32> -> vector<448x384xf32>
    %10 = vector.shape_cast %9 : vector<448x384xf32> to vector<14x32x384xf32>
    %11 = vector.extract_strided_slice %10 {offsets = [0, 0, 0], sizes = [14, 32, 128], strides = [1, 1, 1]} : vector<14x32x384xf32> to vector<14x32x128xf32>
    %cst_4 = arith.constant dense<0xFF800000> : vector<32x128xf32>
    %12 = vector.multi_reduction <maximumf>, %11, %cst_4 [0] : vector<14x32x128xf32> to vector<32x128xf32>
    %13 = vector.extract_strided_slice %10 {offsets = [0, 0, 128], sizes = [13, 32, 128], strides = [1, 1, 1]} : vector<14x32x384xf32> to vector<13x32x128xf32>
    %cst_5 = arith.constant dense<0xFF800000> : vector<32x128xf32>
    %14 = vector.multi_reduction <maximumf>, %13, %cst_5 [0] : vector<13x32x128xf32> to vector<32x128xf32>
    %15 = vector.extract_strided_slice %10 {offsets = [0, 0, 256], sizes = [12, 32, 128], strides = [1, 1, 1]} : vector<14x32x384xf32> to vector<12x32x128xf32>
    %cst_6 = arith.constant dense<0xFF800000> : vector<32x128xf32>
    %16 = vector.multi_reduction <maximumf>, %15, %cst_6 [0] : vector<12x32x128xf32> to vector<32x128xf32>
    %17 = tpu.concatenate %12, %14, %16 in 1 : vector<32x128xf32>, vector<32x128xf32>, vector<32x128xf32> -> vector<32x384xf32>
    %c0_7 = arith.constant 0 : index
    %c0_8 = arith.constant 0 : index
    %18 = vector.load %arg3[%c0_7, %c0_8] : memref<1x384xf32, #tpu.memory_space<vmem>>, vector<1x384xf32>
    %19 = vector.broadcast %18 : vector<1x384xf32> to vector<32x384xf32>
    %20 = arith.addf %17, %19 : vector<32x384xf32>
    %cst_9 = arith.constant 0.000000e+00 : f32
    %21 = vector.broadcast %cst_9 : f32 to vector<32x384xf32>
    %22 = arith.maximumf %20, %21 : vector<32x384xf32>
    %23 = arith.truncf %22 : vector<32x384xf32> to vector<32x384xbf16>
    %c0_10 = arith.constant 0 : index
    %c0_11 = arith.constant 0 : index
    %24 = vector.load %arg4[%c0_10, %c0_11] : memref<384x128xbf16, #tpu.memory_space<vmem>>, vector<384x128xbf16>
    %cst_12 = arith.constant dense<0.000000e+00> : vector<32x128xf32>
    %25 = tpu.matmul %23, %24, %cst_12 {dimension_numbers = #tpu.dot_dimension_numbers<[1], [0], [0], [1], [0, 0, 1, 1], [], []>} : vector<32x384xbf16>, vector<384x128xbf16>, vector<32x128xf32> -> vector<32x128xf32>
    %c0_13 = arith.constant 0 : index
    %c0_14 = arith.constant 0 : index
    %26 = vector.load %arg5[%c0_13, %c0_14] : memref<1x128xf32, #tpu.memory_space<vmem>>, vector<1x128xf32>
    %27 = vector.broadcast %26 : vector<1x128xf32> to vector<32x128xf32>
    %28 = arith.addf %25, %27 : vector<32x128xf32>
    %c0_15 = arith.constant 0 : index
    %c0_16 = arith.constant 0 : index
    %29 = vector.load %arg6[%c0_15, %c0_16] : memref<32x128xf32, #tpu.memory_space<vmem>>, vector<32x128xf32>
    tpu.vector_store %arg6[%c0_15, %c0_16], %28 {strides = array<i32>} : memref<32x128xf32, #tpu.memory_space<vmem>>, vector<32x128xf32>,
    return
  }
  func.func @transform_0(%arg0: i32) -> (i32, i32, i32) {
    %c0_i32 = arith.constant 0 : i32
    %c0_i32_0 = arith.constant 0 : i32
    %c0_i32_1 = arith.constant 0 : i32
    return %c0_i32, %arg0, %c0_i32_0 : i32, i32, i32
  }
  func.func @transform_1(%arg0: i32) -> (i32, i32) {
    %c0_i32 = arith.constant 0 : i32
    %c0_i32_0 = arith.constant 0 : i32
    %c0_i32_1 = arith.constant 0 : i32
    return %c0_i32, %c0_i32_0 : i32, i32
  }
  func.func @transform_2(%arg0: i32) -> (i32, i32) {
    %c0_i32 = arith.constant 0 : i32
    %c0_i32_0 = arith.constant 0 : i32
    %c0_i32_1 = arith.constant 0 : i32
    return %c0_i32, %c0_i32_0 : i32, i32
  }
  func.func @transform_3(%arg0: i32) -> (i32, i32) {
    %c0_i32 = arith.constant 0 : i32
    %c0_i32_0 = arith.constant 0 : i32
    %c0_i32_1 = arith.constant 0 : i32
    return %c0_i32, %c0_i32_0 : i32, i32
  }
  func.func @transform_4(%arg0: i32) -> (i32, i32) {
    %c0_i32 = arith.constant 0 : i32
    %c0_i32_0 = arith.constant 0 : i32
    %c0_i32_1 = arith.constant 0 : i32
    return %c0_i32, %c0_i32_0 : i32, i32
  }
  func.func @transform_5(%arg0: i32) -> (i32, i32) {
    %c0_i32 = arith.constant 0 : i32
    %c0_i32_0 = arith.constant 0 : i32
    return %arg0, %c0_i32 : i32, i32
  }
}

</mosaic_0001>

<llo_original>
// kernel: re_cnn_forward.1
$region0: #{re_cnn_forward.1}
  #allocation0 [shape = 'u32[]', space=smem, size = 0x4, offset = 0x4, fixed_abs, tag = 'smem constant byte address 0x4 - core index']
  #allocation1 [shape = 'u32[144,128]{1,0:T(1,128)}', space=vmem, size = 0x12000, scoped, tag = 'internal scratch']
  %s0 = inlined_call_operand.vmem [shape: bf16[24,64,128], index: 0, kind: input, shape index: {}]
  %s1 = inlined_call_operand.vmem [shape: bf16[640,384], index: 1, kind: input, shape index: {}]
  %s2 = inlined_call_operand.vmem [shape: f32[1,384], index: 2, kind: input, shape index: {}]
  %s3 = inlined_call_operand.vmem [shape: bf16[384,128], index: 3, kind: input, shape index: {}]
  %s4 = inlined_call_operand.vmem [shape: f32[1,128], index: 4, kind: input, shape index: {}]
  %s5 = inlined_call_operand.vmem [shape: f32[64,128], index: 5, kind: output, shape index: {}]
  %s6 = sld [smem:[#allocation0]]
  $region94: #{re_cnn_forward.1} parent=0
    _
  %s8 = ssub.s32 1, %s6
  %s9 = scalar_select 0, %s8, %s6
  $region1: #{re_cnn_forward.1} parent=0
    #allocation2 [shape = 'u8[393216]{0}', space=vmem, size = 0x60000, scoped, tag = 'input window, operand 0']
    loop: start=0, step=1, limit=4
    $region2: #{re_cnn_forward.1} parent=1 // loop_pre_header
      _
    $region3: #{re_cnn_forward.1} parent=1 // loop_header
      %s11 = sphi 0, %s15
      %p12 = scmp.ge.s32.totalorder %s11, 4
      %s21 = sphi 0, %s23
      %s24 = sphi 0, %s21
      %s25 = sphi 0, %s24
      %s41 = sphi 0, %s25
      %s45 = sphi 0, %s45
      %s47 = sphi 0, %s45
      %s48 = sphi 0, %s47
      %s62 = sphi 0, %s48
      %s66 = sphi 0, %s66
      %s68 = sphi 0, %s66
      %s69 = sphi 0, %s68
      %s83 = sphi 0, %s69
      %s87 = sphi 0, %s87
      %s89 = sphi 0, %s87
      %s90 = sphi 0, %s89
      %s104 = sphi 0, %s90
      %s108 = sphi 0, %s108
      %s110 = sphi 0, %s108
      %s111 = sphi 0, %s110
      %s125 = sphi 0, %s111
      %s131 = sphi 0, %s133
      %s134 = sphi 0, %s131
      %s135 = sphi 0, %s134
      %s151 = sphi 0, %s135
    $region4: #{re_cnn_forward.1} parent=1 // loop_header_branch
      %14 = sbr.rel (%p12) target = $region8
    $region5: #{re_cnn_forward.1} parent=1 // loop_body
      %s16 = ssub.s32 %s11, 1
      %s17 = ssub.s32 %s11, 2
      %s18 = sadd.s32 %s11, 1
      %s19 = ssub.s32 %s11, %s18
      %p20 = scmp.eq.s32.totalorder %s19, 0
      %s22 = sadd.s32 %s21, 1
      %s23 = scalar_select %p20, %s21, %s22
      %p26 = pneg %p20
      %p27 = scmp.eq.s32.totalorder %s11, 1
      %p28 = por %p26, %p27
      %p29 = scmp.ne.s32.totalorder %s21, %s24
      %p30 = scmp.eq.s32.totalorder %s11, 0
      %p31 = por %p29, %p30
      %p32 = scmp.ne.s32.totalorder %s21, %s24
      %p33 = scmp.eq.s32.totalorder %s16, 1
      %p34 = por %p32, %p33
      %p35 = scmp.ne.s32.totalorder %s24, %s25
      %p36 = scmp.eq.s32.totalorder %s16, 0
      %p37 = por %p35, %p36
      %p38 = scmp.ne.s32.totalorder %s24, %s25
      %p39 = scmp.eq.s32.totalorder %s17, 1
      %p40 = por %p38, %p39
      %p42 = scmp.ne.s32.totalorder %s25, %s41
      %p43 = scmp.eq.s32.totalorder %s17, 0
      %p44 = por %p42, %p43
      %s46 = sadd.s32 %s45, 1
      %p49 = scmp.eq.s32.totalorder %s11, 1
      %p50 = scmp.ne.s32.totalorder %s45, %s47
      %p51 = scmp.eq.s32.totalorder %s11, 0
      %p52 = por %p50, %p51
      %p53 = scmp.ne.s32.totalorder %s45, %s47
      %p54 = scmp.eq.s32.totalorder %s16, 1
      %p55 = por %p53, %p54
      %p56 = scmp.ne.s32.totalorder %s47, %s48
      %p57 = scmp.eq.s32.totalorder %s16, 0
      %p58 = por %p56, %p57
      %p59 = scmp.ne.s32.totalorder %s47, %s48
      %p60 = scmp.eq.s32.totalorder %s17, 1
      %p61 = por %p59, %p60
      %p63 = scmp.ne.s32.totalorder %s48, %s62
      %p64 = scmp.eq.s32.totalorder %s17, 0
      %p65 = por %p63, %p64
      %s67 = sadd.s32 %s66, 1
      %p70 = scmp.eq.s32.totalorder %s11, 1
      %p71 = scmp.ne.s32.totalorder %s66, %s68
      %p72 = scmp.eq.s32.totalorder %s11, 0
      %p73 = por %p71, %p72
      %p74 = scmp.ne.s32.totalorder %s66, %s68
      %p75 = scmp.eq.s32.totalorder %s16, 1
      %p76 = por %p74, %p75
      %p77 = scmp.ne.s32.totalorder %s68, %s69
      %p78 = scmp.eq.s32.totalorder %s16, 0
      %p79 = por %p77, %p78
      %p80 = scmp.ne.s32.totalorder %s68, %s69
      %p81 = scmp.eq.s32.totalorder %s17, 1
      %p82 = por %p80, %p81
      %p84 = scmp.ne.s32.totalorder %s69, %s83
      %p85 = scmp.eq.s32.totalorder %s17, 0
      %p86 = por %p84, %p85
      %s88 = sadd.s32 %s87, 1
      %p91 = scmp.eq.s32.totalorder %s11, 1
      %p92 = scmp.ne.s32.totalorder %s87, %s89
      %p93 = scmp.eq.s32.totalorder %s11, 0
      %p94 = por %p92, %p93
      %p95 = scmp.ne.s32.totalorder %s87, %s89
      %p96 = scmp.eq.s32.totalorder %s16, 1
      %p97 = por %p95, %p96
      %p98 = scmp.ne.s32.totalorder %s89, %s90
      %p99 = scmp.eq.s32.totalorder %s16, 0
      %p100 = por %p98, %p99
      %p101 = scmp.ne.s32.totalorder %s89, %s90
      %p102 = scmp.eq.s32.totalorder %s17, 1
      %p103 = por %p101, %p102
      %p105 = scmp.ne.s32.totalorder %s90, %s104
      %p106 = scmp.eq.s32.totalorder %s17, 0
      %p107 = por %p105, %p106
      %s109 = sadd.s32 %s108, 1
      %p112 = scmp.eq.s32.totalorder %s11, 1
      %p113 = scmp.ne.s32.totalorder %s108, %s110
      %p114 = scmp.eq.s32.totalorder %s11, 0
      %p115 = por %p113, %p114
      %p116 = scmp.ne.s32.totalorder %s108, %s110
      %p117 = scmp.eq.s32.totalorder %s16, 1
      %p118 = por %p116, %p117
      %p119 = scmp.ne.s32.totalorder %s110, %s111
      %p120 = scmp.eq.s32.totalorder %s16, 0
      %p121 = por %p119, %p120
      %p122 = scmp.ne.s32.totalorder %s110, %s111
      %p123 = scmp.eq.s32.totalorder %s17, 1
      %p124 = por %p122, %p123
      %p126 = scmp.ne.s32.totalorder %s111, %s125
      %p127 = scmp.eq.s32.totalorder %s17, 0
      %p128 = por %p126, %p127
      %s129 = ssub.s32 %s11, %s18
      %p130 = scmp.eq.s32.totalorder %s129, 0
      %s132 = sadd.s32 %s131, 1
      %s133 = scalar_select %p130, %s131, %s132
      %p136 = pneg %p130
      %p137 = scmp.eq.s32.totalorder %s11, 1
      %p138 = por %p136, %p137
      %p139 = scmp.ne.s32.totalorder %s131, %s134
      %p140 = scmp.eq.s32.totalorder %s11, 0
      %p141 = por %p139, %p140
      %p142 = scmp.ne.s32.totalorder %s131, %s134
      %p143 = scmp.eq.s32.totalorder %s16, 1
      %p144 = por %p142, %p143
      %p145 = scmp.ne.s32.totalorder %s134, %s135
      %p146 = scmp.eq.s32.totalorder %s16, 0
      %p147 = por %p145, %p146
      %p148 = scmp.ne.s32.totalorder %s134, %s135
      %p149 = scmp.eq.s32.totalorder %s17, 1
      %p150 = por %p148, %p149
      %p152 = scmp.ne.s32.totalorder %s135, %s151
      %p153 = scmp.eq.s32.totalorder %s17, 0
      %p154 = por %p152, %p153
      %p155 = scmp.le.s32.totalorder 1, %s11
      %p156 = scmp.lt.s32.totalorder %s11, 3
      %p157 = pnand %p155, %p156
      %p158 = pneg %p157
      // Predicated region
      $region9: #{re_cnn_forward.1} parent=5 // pred_check
        _
      $region10: #{re_cnn_forward.1} parent=5 // pred_check_branch
        %160 = sbr.rel (%p157) target = $region12
      $region11: #{re_cnn_forward.1} parent=5 // pred_region
        %s161 = ssub.s32 %s11, 1
        // Predicated region
        $region13: #{re_cnn_forward.1} parent=11 // pred_check
          %p162 = pneg %p58
        $region14: #{re_cnn_forward.1} parent=11 // pred_check_branch
          %164 = sbr.rel (%p162) target = $region16
        $region15: #{re_cnn_forward.1} parent=11 // pred_region
          _
        $region16: #{re_cnn_forward.1} parent=11 // pred_fallthru
          _
        // Predicated region
        $region17: #{re_cnn_forward.1} parent=11 // pred_check
          %p165 = pneg %p79
        $region18: #{re_cnn_forward.1} parent=11 // pred_check_branch
          %167 = sbr.rel (%p165) target = $region20
        $region19: #{re_cnn_forward.1} parent=11 // pred_region
          _
        $region20: #{re_cnn_forward.1} parent=11 // pred_fallthru
          _
        // Predicated region
        $region21: #{re_cnn_forward.1} parent=11 // pred_check
          %p168 = pneg %p100
        $region22: #{re_cnn_forward.1} parent=11 // pred_check_branch
          %170 = sbr.rel (%p168) target = $region24
        $region23: #{re_cnn_forward.1} parent=11 // pred_region
          _
        $region24: #{re_cnn_forward.1} parent=11 // pred_fallthru
          _
        // Predicated region
        $region25: #{re_cnn_forward.1} parent=11 // pred_check
          %p171 = pneg %p121
        $region26: #{re_cnn_forward.1} parent=11 // pred_check_branch
          %173 = sbr.rel (%p171) target = $region28
        $region27: #{re_cnn_forward.1} parent=11 // pred_region
          _
        $region28: #{re_cnn_forward.1} parent=11 // pred_fallthru
          _
      $region12: #{re_cnn_forward.1} parent=5 // pred_fallthru
        _
      %p174 = scmp.lt.s32.totalorder %s11, 2
      // Predicated region
      $region29: #{re_cnn_forward.1} parent=5 // pred_check
        %p175 = pneg %p174
      $region30: #{re_cnn_forward.1} parent=5 // pred_check_branch
        %177 = sbr.rel (%p175) target = $region32
      $region31: #{re_cnn_forward.1} parent=5 // pred_region
        // Predicated region
        $region33: #{re_cnn_forward.1} parent=31 // pred_check
          %p178 = pneg %p31
        $region34: #{re_cnn_forward.1} parent=31 // pred_check_branch
          %180 = sbr.rel (%p178) target = $region36
        $region35: #{re_cnn_forward.1} parent=31 // pred_region
          %s181 = sand.u32 %s21, 1
          %s182 = sand.u32 %s21, 1
          %s183 = smul.addr %s182, 384
          %s184 = scalar_lea.vmem [#allocation2], %s183
          %s185 = smul.u32 4, %s11
          %s186 = smul.addr %s185, 4
          %s187 = scalar_lea.vmem %s0, %s186
          // Predicated region
          $region37: #{re_cnn_forward.1} parent=35 // pred_check
            _
          $region38: #{re_cnn_forward.1} parent=35 // pred_check_branch
            %189 = sbr.rel (0) target = $region40
          $region39: #{re_cnn_forward.1} parent=35 // pred_region
            // Predicated region
            $region41: #{re_cnn_forward.1} parent=39 // pred_check
              _
            $region42: #{re_cnn_forward.1} parent=39 // pred_check_branch
              %191 = sbr.rel target = $region44
            $region43: #{re_cnn_forward.1} parent=39 // pred_region
              // Predicated region
              $region56: #{re_cnn_forward.1} parent=43 // pred_check
                _
              $region57: #{re_cnn_forward.1} parent=43 // pred_check_branch
                %396 = sbr.rel (0) target = $region59
              $region58: #{re_cnn_forward.1} parent=43 // pred_region
                loop: start=0, step=1, limit=1
                $region60: #{re_cnn_forward.1} parent=58 // loop_pre_header
                  _
                $region61: #{re_cnn_forward.1} parent=58 // loop_header
                  %s398 = sphi 0, %s402
                  %p399 = scmp.ge.s32.totalorder %s398, 1
                  %s403 = sphi %s187, %s187
                  %s404 = sphi %s184, %s184
                $region62: #{re_cnn_forward.1} parent=58 // loop_header_branch
                  %401 = sbr.rel (%p399) target = $region66
                $region63: #{re_cnn_forward.1} parent=58 // loop_body
                  _
                $region64: #{re_cnn_forward.1} parent=58 // loop_footer
                  %s402 = sadd.s32 1, %s398
                $region65: #{re_cnn_forward.1} parent=58 // loop_footer_branch
                  %397 = sbr.rel target = $region61
                $region66: #{re_cnn_forward.1} parent=58 // loop_exit
                  _
                loop: start=0, step=1, limit=1
                $region67: #{re_cnn_forward.1} parent=58 // loop_pre_header
                  _
                $region68: #{re_cnn_forward.1} parent=58 // loop_header
                  %s407 = sphi 0, %s411
                  %p408 = scmp.ge.s32.totalorder %s407, 1
                  %s412 = sphi %s187, %s187
                  %s413 = sphi %s184, %s184
                $region69: #{re_cnn_forward.1} parent=58 // loop_header_branch
                  %410 = sbr.rel (%p408) target = $region73
                $region70: #{re_cnn_forward.1} parent=58 // loop_body
                  %v414 = vld [vmem:[%s412] sm:$0xf]
                  %415 = vst [vmem:[%s413] sm:$0xf] %v414
                  %v416 = vld [vmem:[%s412 + $0x4] sm:$0xf]
                  %417 = vst [vmem:[%s413 + $0x4] sm:$0xf] %v416
                  %v418 = vld [vmem:[%s412 + $0x8] sm:$0xf]
                  %419 = vst [vmem:[%s413 + $0x8] sm:$0xf] %v418
                  %v420 = vld [vmem:[%s412 + $0xc] sm:$0xf]
                  %421 = vst [vmem:[%s413 + $0xc] sm:$0xf] %v420
                  %v422 = vld [vmem:[%s412 + $0x20] sm:$0xf]
                  %423 = vst [vmem:[%s413 + $0x10] sm:$0xf] %v422
                  %v424 = vld [vmem:[%s412 + $0x24] sm:$0xf]
                  %425 = vst [vmem:[%s413 + $0x14] sm:$0xf] %v424
                  %v426 = vld [vmem:[%s412 + $0x28] sm:$0xf]
                  %427 = vst [vmem:[%s413 + $0x18] sm:$0xf] %v426
                  %v428 = vld [vmem:[%s412 + $0x2c] sm:$0xf]
                  %429 = vst [vmem:[%s413 + $0x1c] sm:$0xf] %v428
                  %v430 = vld [vmem:[%s412 + $0x40] sm:$0xf]
                  %431 = vst [vmem:[%s413 + $0x20] sm:$0xf] %v430
                  %v432 = vld [vmem:[%s412 + $0x44] sm:$0xf]
                  %433 = vst [vmem:[%s413 + $0x24] sm:$0xf] %v432
                  %v434 = vld [vmem:[%s412 + $0x48] sm:$0xf]
                  %435 = vst [vmem:[%s413 + $0x28] sm:$0xf] %v434
                  %v436 = vld [vmem:[%s412 + $0x4c] sm:$0xf]
                  %437 = vst [vmem:[%s413 + $0x2c] sm:$0xf] %v436
                  %v438 = vld [vmem:[%s412 + $0x60] sm:$0xf]
                  %439 = vst [vmem:[%s413 + $0x30] sm:$0xf] %v438
                  %v440 = vld [vmem:[%s412 + $0x64] sm:$0xf]
                  %441 = vst [vmem:[%s413 + $0x34] sm:$0xf] %v440
                  %v442 = vld [vmem:[%s412 + $0x68] sm:$0xf]
                  %443 = vst [vmem:[%s413 + $0x38] sm:$0xf] %v442
                  %v444 = vld [vmem:[%s412 + $0x6c] sm:$0xf]
                  %445 = vst [vmem:[%s413 + $0x3c] sm:$0xf] %v444
                  %v446 = vld [vmem:[%s412 + $0x80] sm:$0xf]
                  %447 = vst [vmem:[%s413 + $0x40] sm:$0xf] %v446
                  %v448 = vld [vmem:[%s412 + $0x84] sm:$0xf]
                  %449 = vst [vmem:[%s413 + $0x44] sm:$0xf] %v448
                  %v450 = vld [vmem:[%s412 + $0x88] sm:$0xf]
                  %451 = vst [vmem:[%s413 + $0x48] sm:$0xf] %v450
                  %v452 = vld [vmem:[%s412 + $0x8c] sm:$0xf]
                  %453 = vst [vmem:[%s413 + $0x4c] sm:$0xf] %v452
                  %v454 = vld [vmem:[%s412 + $0xa0] sm:$0xf]
                  %455 = vst [vmem:[%s413 + $0x50] sm:$0xf] %v454
                  %v456 = vld [vmem:[%s412 + $0xa4] sm:$0xf]
                  %457 = vst [vmem:[%s413 + $0x54] sm:$0xf] %v456
                  %v458 = vld [vmem:[%s412 + $0xa8] sm:$0xf]
                  %459 = vst [vmem:[%s413 + $0x58] sm:$0xf] %v458
                  %v460 = vld [vmem:[%s412 + $0xac] sm:$0xf]
                  %461 = vst [vmem:[%s413 + $0x5c] sm:$0xf] %v460
                  %v462 = vld [vmem:[%s412 + $0xc0] sm:$0xf]
                  %463 = vst [vmem:[%s413 + $0x60] sm:$0xf] %v462
                  %v464 = vld [vmem:[%s412 + $0xc4] sm:$0xf]
                  %465 = vst [vmem:[%s413 + $0x64] sm:$0xf] %v464
                  %v466 = vld [vmem:[%s412 + $0xc8] sm:$0xf]
                  %467 = vst [vmem:[%s413 + $0x68] sm:$0xf] %v466
                  %v468 = vld [vmem:[%s412 + $0xcc] sm:$0xf]
                  %469 = vst [vmem:[%s413 + $0x6c] sm:$0xf] %v468
                  %v470 = vld [vmem:[%s412 + $0xe0] sm:$0xf]
                  %471 = vst [vmem:[%s413 + $0x70] sm:$0xf] %v470
                  %v472 = vld [vmem:[%s412 + $0xe4] sm:$0xf]
                  %473 = vst [vmem:[%s413 + $0x74] sm:$0xf] %v472
                  %v474 = vld [vmem:[%s412 + $0xe8] sm:$0xf]
                  %475 = vst [vmem:[%s413 + $0x78] sm:$0xf] %v474
                  %v476 = vld [vmem:[%s412 + $0xec] sm:$0xf]
                  %477 = vst [vmem:[%s413 + $0x7c] sm:$0xf] %v476
                  %v478 = vld [vmem:[%s412 + $0x100] sm:$0xf]
                  %479 = vst [vmem:[%s413 + $0x80] sm:$0xf] %v478
                  %v480 = vld [vmem:[%s412 + $0x104] sm:$0xf]
                  %481 = vst [vmem:[%s413 + $0x84] sm:$0xf] %v480
                  %v482 = vld [vmem:[%s412 + $0x108] sm:$0xf]
                  %483 = vst [vmem:[%s413 + $0x88] sm:$0xf] %v482
                  %v484 = vld [vmem:[%s412 + $0x10c] sm:$0xf]
                  %485 = vst [vmem:[%s413 + $0x8c] sm:$0xf] %v484
                  %v486 = vld [vmem:[%s412 + $0x120] sm:$0xf]
                  %487 = vst [vmem:[%s413 + $0x90] sm:$0xf] %v486
                  %v488 = vld [vmem:[%s412 + $0x124] sm:$0xf]
                  %489 = vst [vmem:[%s413 + $0x94] sm:$0xf] %v488
                  %v490 = vld [vmem:[%s412 + $0x128] sm:$0xf]
                  %491 = vst [vmem:[%s413 + $0x98] sm:$0xf] %v490
                  %v492 = vld [vmem:[%s412 + $0x12c] sm:$0xf]
                  %493 = vst [vmem:[%s413 + $0x9c] sm:$0xf] %v492
                  %v494 = vld [vmem:[%s412 + $0x140] sm:$0xf]
                  %495 = vst [vmem:[%s413 + $0xa0] sm:$0xf] %v494
                  %v496 = vld [vmem:[%s412 + $0x144] sm:$0xf]
                  %497 = vst [vmem:[%s413 + $0xa4] sm:$0xf] %v496
                  %v498 = vld [vmem:[%s412 + $0x148] sm:$0xf]
                  %499 = vst [vmem:[%s413 + $0xa8] sm:$0xf] %v498
                  %v500 = vld [vmem:[%s412 + $0x14c] sm:$0xf]
                  %501 = vst [vmem:[%s413 + $0xac] sm:$0xf] %v500
                  %v502 = vld [vmem:[%s412 + $0x160] sm:$0xf]
                  %503 = vst [vmem:[%s413 + $0xb0] sm:$0xf] %v502
                  %v504 = vld [vmem:[%s412 + $0x164] sm:$0xf]
                  %505 = vst [vmem:[%s413 + $0xb4] sm:$0xf] %v504
                  %v506 = vld [vmem:[%s412 + $0x168] sm:$0xf]
                  %507 = vst [vmem:[%s413 + $0xb8] sm:$0xf] %v506
                  %v508 = vld [vmem:[%s412 + $0x16c] sm:$0xf]
                  %509 = vst [vmem:[%s413 + $0xbc] sm:$0xf] %v508
                  %v510 = vld [vmem:[%s412 + $0x180] sm:$0xf]
                  %511 = vst [vmem:[%s413 + $0xc0] sm:$0xf] %v510
                  %v512 = vld [vmem:[%s412 + $0x184] sm:$0xf]
                  %513 = vst [vmem:[%s413 + $0xc4] sm:$0xf] %v512
                  %v514 = vld [vmem:[%s412 + $0x188] sm:$0xf]
                  %515 = vst [vmem:[%s413 + $0xc8] sm:$0xf] %v514
                  %v516 = vld [vmem:[%s412 + $0x18c] sm:$0xf]
                  %517 = vst [vmem:[%s413 + $0xcc] sm:$0xf] %v516
                  %v518 = vld [vmem:[%s412 + $0x1a0] sm:$0xf]
                  %519 = vst [vmem:[%s413 + $0xd0] sm:$0xf] %v518
                  %v520 = vld [vmem:[%s412 + $0x1a4] sm:$0xf]
                  %521 = vst [vmem:[%s413 + $0xd4] sm:$0xf] %v520
                  %v522 = vld [vmem:[%s412 + $0x1a8] sm:$0xf]
                  %523 = vst [vmem:[%s413 + $0xd8] sm:$0xf] %v522
                  %v524 = vld [vmem:[%s412 + $0x1ac] sm:$0xf]
                  %525 = vst [vmem:[%s413 + $0xdc] sm:$0xf] %v524
                  %v526 = vld [vmem:[%s412 + $0x1c0] sm:$0xf]
                  %527 = vst [vmem:[%s413 + $0xe0] sm:$0xf] %v526
                  %v528 = vld [vmem:[%s412 + $0x1c4] sm:$0xf]
                  %529 = vst [vmem:[%s413 + $0xe4] sm:$0xf] %v528
                  %v530 = vld [vmem:[%s412 + $0x1c8] sm:$0xf]
                  %531 = vst [vmem:[%s413 + $0xe8] sm:$0xf] %v530
                  %v532 = vld [vmem:[%s412 + $0x1cc] sm:$0xf]
                  %533 = vst [vmem:[%s413 + $0xec] sm:$0xf] %v532
                  %v534 = vld [vmem:[%s412 + $0x1e0] sm:$0xf]
                  %535 = vst [vmem:[%s413 + $0xf0] sm:$0xf] %v534
                  %v536 = vld [vmem:[%s412 + $0x1e4] sm:$0xf]
                  %537 = vst [vmem:[%s413 + $0xf4] sm:$0xf] %v536
                  %v538 = vld [vmem:[%s412 + $0x1e8] sm:$0xf]
                  %539 = vst [vmem:[%s413 + $0xf8] sm:$0xf] %v538
                  %v540 = vld [vmem:[%s412 + $0x1ec] sm:$0xf]
                  %541 = vst [vmem:[%s413 + $0xfc] sm:$0xf] %v540
                  %v542 = vld [vmem:[%s412 + $0x200] sm:$0xf]
                  %543 = vst [vmem:[%s413 + $0x100] sm:$0xf] %v542
                  %v544 = vld [vmem:[%s412 + $0x204] sm:$0xf]
                  %545 = vst [vmem:[%s413 + $0x104] sm:$0xf] %v544
                  %v546 = vld [vmem:[%s412 + $0x208] sm:$0xf]
                  %547 = vst [vmem:[%s413 + $0x108] sm:$0xf] %v546
                  %v548 = vld [vmem:[%s412 + $0x20c] sm:$0xf]
                  %549 = vst [vmem:[%s413 + $0x10c] sm:$0xf] %v548
                  %v550 = vld [vmem:[%s412 + $0x220] sm:$0xf]
                  %551 = vst [vmem:[%s413 + $0x110] sm:$0xf] %v550
                  %v552 = vld [vmem:[%s412 + $0x224] sm:$0xf]
                  %553 = vst [vmem:[%s413 + $0x114] sm:$0xf] %v552
                  %v554 = vld [vmem:[%s412 + $0x228] sm:$0xf]
                  %555 = vst [vmem:[%s413 + $0x118] sm:$0xf] %v554
                  %v556 = vld [vmem:[%s412 + $0x22c] sm:$0xf]
                  %557 = vst [vmem:[%s413 + $0x11c] sm:$0xf] %v556
                  %v558 = vld [vmem:[%s412 + $0x240] sm:$0xf]
                  %559 = vst [vmem:[%s413 + $0x120] sm:$0xf] %v558
                  %v560 = vld [vmem:[%s412 + $0x244] sm:$0xf]
                  %561 = vst [vmem:[%s413 + $0x124] sm:$0xf] %v560
                  %v562 = vld [vmem:[%s412 + $0x248] sm:$0xf]
                  %563 = vst [vmem:[%s413 + $0x128] sm:$0xf] %v562
                  %v564 = vld [vmem:[%s412 + $0x24c] sm:$0xf]
                  %565 = vst [vmem:[%s413 + $0x12c] sm:$0xf] %v564
                  %v566 = vld [vmem:[%s412 + $0x260] sm:$0xf]
                  %567 = vst [vmem:[%s413 + $0x130] sm:$0xf] %v566
                  %v568 = vld [vmem:[%s412 + $0x264] sm:$0xf]
                  %569 = vst [vmem:[%s413 + $0x134] sm:$0xf] %v568
                  %v570 = vld [vmem:[%s412 + $0x268] sm:$0xf]
                  %571 = vst [vmem:[%s413 + $0x138] sm:$0xf] %v570
                  %v572 = vld [vmem:[%s412 + $0x26c] sm:$0xf]
                  %573 = vst [vmem:[%s413 + $0x13c] sm:$0xf] %v572
                  %v574 = vld [vmem:[%s412 + $0x280] sm:$0xf]
                  %575 = vst [vmem:[%s413 + $0x140] sm:$0xf] %v574
                  %v576 = vld [vmem:[%s412 + $0x284] sm:$0xf]
                  %577 = vst [vmem:[%s413 + $0x144] sm:$0xf] %v576
                  %v578 = vld [vmem:[%s412 + $0x288] sm:$0xf]
                  %579 = vst [vmem:[%s413 + $0x148] sm:$0xf] %v578
                  %v580 = vld [vmem:[%s412 + $0x28c] sm:$0xf]
                  %581 = vst [vmem:[%s413 + $0x14c] sm:$0xf] %v580
                  %v582 = vld [vmem:[%s412 + $0x2a0] sm:$0xf]
                  %583 = vst [vmem:[%s413 + $0x150] sm:$0xf] %v582
                  %v584 = vld [vmem:[%s412 + $0x2a4] sm:$0xf]
                  %585 = vst [vmem:[%s413 + $0x154] sm:$0xf] %v584
                  %v586 = vld [vmem:[%s412 + $0x2a8] sm:$0xf]
                  %587 = vst [vmem:[%s413 + $0x158] sm:$0xf] %v586
                  %v588 = vld [vmem:[%s412 + $0x2ac] sm:$0xf]
                  %589 = vst [vmem:[%s413 + $0x15c] sm:$0xf] %v588
                  %v590 = vld [vmem:[%s412 + $0x2c0] sm:$0xf]
                  %591 = vst [vmem:[%s413 + $0x160] sm:$0xf] %v590
                  %v592 = vld [vmem:[%s412 + $0x2c4] sm:$0xf]
                  %593 = vst [vmem:[%s413 + $0x164] sm:$0xf] %v592
                  %v594 = vld [vmem:[%s412 + $0x2c8] sm:$0xf]
                  %595 = vst [vmem:[%s413 + $0x168] sm:$0xf] %v594
                  %v596 = vld [vmem:[%s412 + $0x2cc] sm:$0xf]
                  %597 = vst [vmem:[%s413 + $0x16c] sm:$0xf] %v596
                  %v598 = vld [vmem:[%s412 + $0x2e0] sm:$0xf]
                  %599 = vst [vmem:[%s413 + $0x170] sm:$0xf] %v598
                  %v600 = vld [vmem:[%s412 + $0x2e4] sm:$0xf]
                  %601 = vst [vmem:[%s413 + $0x174] sm:$0xf] %v600
                  %v602 = vld [vmem:[%s412 + $0x2e8] sm:$0xf]
                  %603 = vst [vmem:[%s413 + $0x178] sm:$0xf] %v602
                  %v604 = vld [vmem:[%s412 + $0x2ec] sm:$0xf]
                  %605 = vst [vmem:[%s413 + $0x17c] sm:$0xf] %v604
                $region71: #{re_cnn_forward.1} parent=58 // loop_footer
                  %s411 = sadd.s32 1, %s407
                $region72: #{re_cnn_forward.1} parent=58 // loop_footer_branch
                  %406 = sbr.rel target = $region68
                $region73: #{re_cnn_forward.1} parent=58 // loop_exit
                  _
              $region59: #{re_cnn_forward.1} parent=43 // pred_fallthru
                _
            $region44: #{re_cnn_forward.1} parent=39 // pred_fallthru
              _
            // Predicated region
            $region45: #{re_cnn_forward.1} parent=39 // pred_check
              _
            $region46: #{re_cnn_forward.1} parent=39 // pred_check_branch
              %193 = sbr.rel (0) target = $region48
            $region47: #{re_cnn_forward.1} parent=39 // pred_region
              loop: start=0, step=1, limit=1
              $region49: #{re_cnn_forward.1} parent=47 // loop_pre_header
                _
              $region50: #{re_cnn_forward.1} parent=47 // loop_header
                %s196 = sphi 0, %s200
                %p197 = scmp.ge.s32.totalorder %s196, 1
                %s201 = sphi %s187, %s187
                %s202 = sphi %s184, %s184
              $region51: #{re_cnn_forward.1} parent=47 // loop_header_branch
                %199 = sbr.rel (%p197) target = $region55
              $region52: #{re_cnn_forward.1} parent=47 // loop_body
                %v203 = vld [vmem:[%s201] sm:$0xf]
                %204 = vst [vmem:[%s202] sm:$0xf] %v203
                %v205 = vld [vmem:[%s201 + $0x4] sm:$0xf]
                %206 = vst [vmem:[%s202 + $0x4] sm:$0xf] %v205
                %v207 = vld [vmem:[%s201 + $0x8] sm:$0xf]
                %208 = vst [vmem:[%s202 + $0x8] sm:$0xf] %v207
                %v209 = vld [vmem:[%s201 + $0xc] sm:$0xf]
                %210 = vst [vmem:[%s202 + $0xc] sm:$0xf] %v209
                %v211 = vld [vmem:[%s201 + $0x20] sm:$0xf]
                %212 = vst [vmem:[%s202 + $0x10] sm:$0xf] %v211
                %v213 = vld [vmem:[%s201 + $0x24] sm:$0xf]
                %214 = vst [vmem:[%s202 + $0x14] sm:$0xf] %v213
                %v215 = vld [vmem:[%s201 + $0x28] sm:$0xf]
                %216 = vst [vmem:[%s202 + $0x18] sm:$0xf] %v215
                %v217 = vld [vmem:[%s201 + $0x2c] sm:$0xf]
                %218 = vst [vmem:[%s202 + $0x1c] sm:$0xf] %v217
                %v219 = vld [vmem:[%s201 + $0x40] sm:$0xf]
                %220 = vst [vmem:[%s202 + $0x20] sm:$0xf] %v219
                %v221 = vld [vmem:[%s201 + $0x44] sm:$0xf]
                %222 = vst [vmem:[%s202 + $0x24] sm:$0xf] %v221
                %v223 = vld [vmem:[%s201 + $0x48] sm:$0xf]
                %224 = vst [vmem:[%s202 + $0x28] sm:$0xf] %v223
                %v225 = vld [vmem:[%s201 + $0x4c] sm:$0xf]
                %226 = vst [vmem:[%s202 + $0x2c] sm:$0xf] %v225
                %v227 = vld [vmem:[%s201 + $0x60] sm:$0xf]
                %228 = vst [vmem:[%s202 + $0x30] sm:$0xf] %v227
                %v229 = vld [vmem:[%s201 + $0x64] sm:$0xf]
                %230 = vst [vmem:[%s202 + $0x34] sm:$0xf] %v229
                %v231 = vld [vmem:[%s201 + $0x68] sm:$0xf]
                %232 = vst [vmem:[%s202 + $0x38] sm:$0xf] %v231
                %v233 = vld [vmem:[%s201 + $0x6c] sm:$0xf]
                %234 = vst [vmem:[%s202 + $0x3c] sm:$0xf] %v233
                %v235 = vld [vmem:[%s201 + $0x80] sm:$0xf]
                %236 = vst [vmem:[%s202 + $0x40] sm:$0xf] %v235
                %v237 = vld [vmem:[%s201 + $0x84] sm:$0xf]
                %238 = vst [vmem:[%s202 + $0x44] sm:$0xf] %v237
                %v239 = vld [vmem:[%s201 + $0x88] sm:$0xf]
                %240 = vst [vmem:[%s202 + $0x48] sm:$0xf] %v239
                %v241 = vld [vmem:[%s201 + $0x8c] sm:$0xf]
                %242 = vst [vmem:[%s202 + $0x4c] sm:$0xf] %v241
                %v243 = vld [vmem:[%s201 + $0xa0] sm:$0xf]
                %244 = vst [vmem:[%s202 + $0x50] sm:$0xf] %v243
                %v245 = vld [vmem:[%s201 + $0xa4] sm:$0xf]
                %246 = vst [vmem:[%s202 + $0x54] sm:$0xf] %v245
                %v247 = vld [vmem:[%s201 + $0xa8] sm:$0xf]
                %248 = vst [vmem:[%s202 + $0x58] sm:$0xf] %v247
                %v249 = vld [vmem:[%s201 + $0xac] sm:$0xf]
                %250 = vst [vmem:[%s202 + $0x5c] sm:$0xf] %v249
                %v251 = vld [vmem:[%s201 + $0xc0] sm:$0xf]
                %252 = vst [vmem:[%s202 + $0x60] sm:$0xf] %v251
                %v253 = vld [vmem:[%s201 + $0xc4] sm:$0xf]
                %254 = vst [vmem:[%s202 + $0x64] sm:$0xf] %v253
                %v255 = vld [vmem:[%s201 + $0xc8] sm:$0xf]
                %256 = vst [vmem:[%s202 + $0x68] sm:$0xf] %v255
                %v257 = vld [vmem:[%s201 + $0xcc] sm:$0xf]
                %258 = vst [vmem:[%s202 + $0x6c] sm:$0xf] %v257
                %v259 = vld [vmem:[%s201 + $0xe0] sm:$0xf]
                %260 = vst [vmem:[%s202 + $0x70] sm:$0xf] %v259
                %v261 = vld [vmem:[%s201 + $0xe4] sm:$0xf]
                %262 = vst [vmem:[%s202 + $0x74] sm:$0xf] %v261
                %v263 = vld [vmem:[%s201 + $0xe8] sm:$0xf]
                %264 = vst [vmem:[%s202 + $0x78] sm:$0xf] %v263
                %v265 = vld [vmem:[%s201 + $0xec] sm:$0xf]
                %266 = vst [vmem:[%s202 + $0x7c] sm:$0xf] %v265
                %v267 = vld [vmem:[%s201 + $0x100] sm:$0xf]
                %268 = vst [vmem:[%s202 + $0x80] sm:$0xf] %v267
                %v269 = vld [vmem:[%s201 + $0x104] sm:$0xf]
                %270 = vst [vmem:[%s202 + $0x84] sm:$0xf] %v269
                %v271 = vld [vmem:[%s201 + $0x108] sm:$0xf]
                %272 = vst [vmem:[%s202 + $0x88] sm:$0xf] %v271
                %v273 = vld [vmem:[%s201 + $0x10c] sm:$0xf]
                %274 = vst [vmem:[%s202 + $0x8c] sm:$0xf] %v273
                %v275 = vld [vmem:[%s201 + $0x120] sm:$0xf]
                %276 = vst [vmem:[%s202 + $0x90] sm:$0xf] %v275
                %v277 = vld [vmem:[%s201 + $0x124] sm:$0xf]
                %278 = vst [vmem:[%s202 + $0x94] sm:$0xf] %v277
                %v279 = vld [vmem:[%s201 + $0x128] sm:$0xf]
                %280 = vst [vmem:[%s202 + $0x98] sm:$0xf] %v279
                %v281 = vld [vmem:[%s201 + $0x12c] sm:$0xf]
                %282 = vst [vmem:[%s202 + $0x9c] sm:$0xf] %v281
                %v283 = vld [vmem:[%s201 + $0x140] sm:$0xf]
                %284 = vst [vmem:[%s202 + $0xa0] sm:$0xf] %v283
                %v285 = vld [vmem:[%s201 + $0x144] sm:$0xf]
                %286 = vst [vmem:[%s202 + $0xa4] sm:$0xf] %v285
                %v287 = vld [vmem:[%s201 + $0x148] sm:$0xf]
                %288 = vst [vmem:[%s202 + $0xa8] sm:$0xf] %v287
                %v289 = vld [vmem:[%s201 + $0x14c] sm:$0xf]
                %290 = vst [vmem:[%s202 + $0xac] sm:$0xf] %v289
                %v291 = vld [vmem:[%s201 + $0x160] sm:$0xf]
                %292 = vst [vmem:[%s202 + $0xb0] sm:$0xf] %v291
                %v293 = vld [vmem:[%s201 + $0x164] sm:$0xf]
                %294 = vst [vmem:[%s202 + $0xb4] sm:$0xf] %v293
                %v295 = vld [vmem:[%s201 + $0x168] sm:$0xf]
                %296 = vst [vmem:[%s202 + $0xb8] sm:$0xf] %v295
                %v297 = vld [vmem:[%s201 + $0x16c] sm:$0xf]
                %298 = vst [vmem:[%s202 + $0xbc] sm:$0xf] %v297
                %v299 = vld [vmem:[%s201 + $0x180] sm:$0xf]
                %300 = vst [vmem:[%s202 + $0xc0] sm:$0xf] %v299
                %v301 = vld [vmem:[%s201 + $0x184] sm:$0xf]
                %302 = vst [vmem:[%s202 + $0xc4] sm:$0xf] %v301
                %v303 = vld [vmem:[%s201 + $0x188] sm:$0xf]
                %304 = vst [vmem:[%s202 + $0xc8] sm:$0xf] %v303
                %v305 = vld [vmem:[%s201 + $0x18c] sm:$0xf]
                %306 = vst [vmem:[%s202 + $0xcc] sm:$0xf] %v305
                %v307 = vld [vmem:[%s201 + $0x1a0] sm:$0xf]
                %308 = vst [vmem:[%s202 + $0xd0] sm:$0xf] %v307
                %v309 = vld [vmem:[%s201 + $0x1a4] sm:$0xf]
                %310 = vst [vmem:[%s202 + $0xd4] sm:$0xf] %v309
                %v311 = vld [vmem:[%s201 + $0x1a8] sm:$0xf]
                %312 = vst [vmem:[%s202 + $0xd8] sm:$0xf] %v311
                %v313 = vld [vmem:[%s201 + $0x1ac] sm:$0xf]
                %314 = vst [vmem:[%s202 + $0xdc] sm:$0xf] %v313
                %v315 = vld [vmem:[%s201 + $0x1c0] sm:$0xf]
                %316 = vst [vmem:[%s202 + $0xe0] sm:$0xf] %v315
                %v317 = vld [vmem:[%s201 + $0x1c4] sm:$0xf]
                %318 = vst [vmem:[%s202 + $0xe4] sm:$0xf] %v317
                %v319 = vld [vmem:[%s201 + $0x1c8] sm:$0xf]
                %320 = vst [vmem:[%s202 + $0xe8] sm:$0xf] %v319
                %v321 = vld [vmem:[%s201 + $0x1cc] sm:$0xf]
                %322 = vst [vmem:[%s202 + $0xec] sm:$0xf] %v321
                %v323 = vld [vmem:[%s201 + $0x1e0] sm:$0xf]
                %324 = vst [vmem:[%s202 + $0xf0] sm:$0xf] %v323
                %v325 = vld [vmem:[%s201 + $0x1e4] sm:$0xf]
                %326 = vst [vmem:[%s202 + $0xf4] sm:$0xf] %v325
                %v327 = vld [vmem:[%s201 + $0x1e8] sm:$0xf]
                %328 = vst [vmem:[%s202 + $0xf8] sm:$0xf] %v327
                %v329 = vld [vmem:[%s201 + $0x1ec] sm:$0xf]
                %330 = vst [vmem:[%s202 + $0xfc] sm:$0xf] %v329
                %v331 = vld [vmem:[%s201 + $0x200] sm:$0xf]
                %332 = vst [vmem:[%s202 + $0x100] sm:$0xf] %v331
                %v333 = vld [vmem:[%s201 + $0x204] sm:$0xf]
                %334 = vst [vmem:[%s202 + $0x104] sm:$0xf] %v333
                %v335 = vld [vmem:[%s201 + $0x208] sm:$0xf]
                %336 = vst [vmem:[%s202 + $0x108] sm:$0xf] %v335
                %v337 = vld [vmem:[%s201 + $0x20c] sm:$0xf]
                %338 = vst [vmem:[%s202 + $0x10c] sm:$0xf] %v337
                %v339 = vld [vmem:[%s201 + $0x220] sm:$0xf]
                %340 = vst [vmem:[%s202 + $0x110] sm:$0xf] %v339
                %v341 = vld [vmem:[%s201 + $0x224] sm:$0xf]
                %342 = vst [vmem:[%s202 + $0x114] sm:$0xf] %v341
                %v343 = vld [vmem:[%s201 + $0x228] sm:$0xf]
                %344 = vst [vmem:[%s202 + $0x118] sm:$0xf] %v343
                %v345 = vld [vmem:[%s201 + $0x22c] sm:$0xf]
                %346 = vst [vmem:[%s202 + $0x11c] sm:$0xf] %v345
                %v347 = vld [vmem:[%s201 + $0x240] sm:$0xf]
                %348 = vst [vmem:[%s202 + $0x120] sm:$0xf] %v347
                %v349 = vld [vmem:[%s201 + $0x244] sm:$0xf]
                %350 = vst [vmem:[%s202 + $0x124] sm:$0xf] %v349
                %v351 = vld [vmem:[%s201 + $0x248] sm:$0xf]
                %352 = vst [vmem:[%s202 + $0x128] sm:$0xf] %v351
                %v353 = vld [vmem:[%s201 + $0x24c] sm:$0xf]
                %354 = vst [vmem:[%s202 + $0x12c] sm:$0xf] %v353
                %v355 = vld [vmem:[%s201 + $0x260] sm:$0xf]
                %356 = vst [vmem:[%s202 + $0x130] sm:$0xf] %v355
                %v357 = vld [vmem:[%s201 + $0x264] sm:$0xf]
                %358 = vst [vmem:[%s202 + $0x134] sm:$0xf] %v357
                %v359 = vld [vmem:[%s201 + $0x268] sm:$0xf]
                %360 = vst [vmem:[%s202 + $0x138] sm:$0xf] %v359
                %v361 = vld [vmem:[%s201 + $0x26c] sm:$0xf]
                %362 = vst [vmem:[%s202 + $0x13c] sm:$0xf] %v361
                %v363 = vld [vmem:[%s201 + $0x280] sm:$0xf]
                %364 = vst [vmem:[%s202 + $0x140] sm:$0xf] %v363
                %v365 = vld [vmem:[%s201 + $0x284] sm:$0xf]
                %366 = vst [vmem:[%s202 + $0x144] sm:$0xf] %v365
                %v367 = vld [vmem:[%s201 + $0x288] sm:$0xf]
                %368 = vst [vmem:[%s202 + $0x148] sm:$0xf] %v367
                %v369 = vld [vmem:[%s201 + $0x28c] sm:$0xf]
                %370 = vst [vmem:[%s202 + $0x14c] sm:$0xf] %v369
                %v371 = vld [vmem:[%s201 + $0x2a0] sm:$0xf]
                %372 = vst [vmem:[%s202 + $0x150] sm:$0xf] %v371
                %v373 = vld [vmem:[%s201 + $0x2a4] sm:$0xf]
                %374 = vst [vmem:[%s202 + $0x154] sm:$0xf] %v373
                %v375 = vld [vmem:[%s201 + $0x2a8] sm:$0xf]
                %376 = vst [vmem:[%s202 + $0x158] sm:$0xf] %v375
                %v377 = vld [vmem:[%s201 + $0x2ac] sm:$0xf]
                %378 = vst [vmem:[%s202 + $0x15c] sm:$0xf] %v377
                %v379 = vld [vmem:[%s201 + $0x2c0] sm:$0xf]
                %380 = vst [vmem:[%s202 + $0x160] sm:$0xf] %v379
                %v381 = vld [vmem:[%s201 + $0x2c4] sm:$0xf]
                %382 = vst [vmem:[%s202 + $0x164] sm:$0xf] %v381
                %v383 = vld [vmem:[%s201 + $0x2c8] sm:$0xf]
                %384 = vst [vmem:[%s202 + $0x168] sm:$0xf] %v383
                %v385 = vld [vmem:[%s201 + $0x2cc] sm:$0xf]
                %386 = vst [vmem:[%s202 + $0x16c] sm:$0xf] %v385
                %v387 = vld [vmem:[%s201 + $0x2e0] sm:$0xf]
                %388 = vst [vmem:[%s202 + $0x170] sm:$0xf] %v387
                %v389 = vld [vmem:[%s201 + $0x2e4] sm:$0xf]
                %390 = vst [vmem:[%s202 + $0x174] sm:$0xf] %v389
                %v391 = vld [vmem:[%s201 + $0x2e8] sm:$0xf]
                %392 = vst [vmem:[%s202 + $0x178] sm:$0xf] %v391
                %v393 = vld [vmem:[%s201 + $0x2ec] sm:$0xf]
                %394 = vst [vmem:[%s202 + $0x17c] sm:$0xf] %v393
              $region53: #{re_cnn_forward.1} parent=47 // loop_footer
                %s200 = sadd.s32 1, %s196
              $region54: #{re_cnn_forward.1} parent=47 // loop_footer_branch
                %195 = sbr.rel target = $region50
              $region55: #{re_cnn_forward.1} parent=47 // loop_exit
                _
            $region48: #{re_cnn_forward.1} parent=39 // pred_fallthru
              _
          $region40: #{re_cnn_forward.1} parent=35 // pred_fallthru
            _
          %606 = vnop
        $region36: #{re_cnn_forward.1} parent=31 // pred_fallthru
          _
      $region32: #{re_cnn_forward.1} parent=5 // pred_fallthru
        _
      %p607 = scmp.le.s32.totalorder 1, %s11
      %p608 = scmp.lt.s32.totalorder %s11, 3
      %p609 = pnand %p607, %p608
      %p610 = pneg %p609
      // Predicated region
      $region74: #{re_cnn_forward.1} parent=5 // pred_check
        _
      $region75: #{re_cnn_forward.1} parent=5 // pred_check_branch
        %612 = sbr.rel (%p609) target = $region77
      $region76: #{re_cnn_forward.1} parent=5 // pred_region
        %s613 = ssub.s32 %s11, 1
        %s614 = sand.u32 %s24, 1
        %s615 = sand.u32 %s24, 1
        %s616 = smul.addr %s615, 384
        %s617 = scalar_lea.vmem [#allocation2], %s616
        // Predicated region
        $region78: #{re_cnn_forward.1} parent=76 // pred_check
          %p618 = pneg %p37
        $region79: #{re_cnn_forward.1} parent=76 // pred_check_branch
          %620 = sbr.rel (%p618) target = $region81
        $region80: #{re_cnn_forward.1} parent=76 // pred_region
          _
        $region81: #{re_cnn_forward.1} parent=76 // pred_fallthru
          _
        %s621 = sand.u32 %s24, 1
        %s622 = sand.u32 %s24, 1
        %s623 = smul.addr %s622, 384
        %s624 = scalar_lea.vmem [#allocation2], %s623
        %p625 = pneg %p37
        %p626 = pneg %p34
        %p627 = pneg %p58
        %p628 = pneg %p55
        %p629 = pneg %p79
        %p630 = pneg %p76
        %p631 = pneg %p100
        %p632 = pneg %p97
        %p633 = pneg %p121
        %p634 = pneg %p118
        %p635 = pneg %p147
        %p636 = pneg %p144
        %s637 = smul.u32 4, %s16
        %p638 = scmp.lt.s32.totalorder %s637, 7
        %s639 = scalar_select %p638, %s637, 7
        %s640 = smul.addr %s639, 8
        %s641 = scalar_lea.vmem %s5, %s640
        %s642 = smul.u32 4, %s16
        %s643 = smul.u32 4, %s16
        %p644 = scmp.lt.s32.totalorder %s643, 7
        %s645 = scalar_select %p644, %s643, 7
        %s646 = smul.addr %s645, 8
        %s647 = scalar_lea.vmem %s5, %s646
        %s648 = smul.u32 4, %s16
        %v650 = vld [vmem:[%s617] sm:$0xf]
        %v651 = vld [vmem:[%s617 + $0x4] sm:$0xf]
        %v652 = vld [vmem:[%s617 + $0x8] sm:$0xf]
        %v653 = vld [vmem:[%s617 + $0xc] sm:$0xf]
        %v654 = vld [vmem:[%s617 + $0x10] sm:$0xf]
        %v655 = vld [vmem:[%s617 + $0x14] sm:$0xf]
        %v656 = vld [vmem:[%s617 + $0x18] sm:$0xf]
        %v657 = vld [vmem:[%s617 + $0x1c] sm:$0xf]
        %v658 = vld [vmem:[%s617 + $0x20] sm:$0xf]
        %v659 = vld [vmem:[%s617 + $0x24] sm:$0xf]
        %v660 = vld [vmem:[%s617 + $0x28] sm:$0xf]
        %v661 = vld [vmem:[%s617 + $0x2c] sm:$0xf]
        %v662 = vld [vmem:[%s617 + $0x30] sm:$0xf]
        %v663 = vld [vmem:[%s617 + $0x34] sm:$0xf]
        %v664 = vld [vmem:[%s617 + $0x38] sm:$0xf]
        %v665 = vld [vmem:[%s617 + $0x3c] sm:$0xf]
        %v666 = vld [vmem:[%s617 + $0x40] sm:$0xf]
        %v667 = vld [vmem:[%s617 + $0x44] sm:$0xf]
        %v668 = vld [vmem:[%s617 + $0x48] sm:$0xf]
        %v669 = vld [vmem:[%s617 + $0x4c] sm:$0xf]
        %v670 = vld [vmem:[%s617 + $0x50] sm:$0xf]
        %v671 = vld [vmem:[%s617 + $0x54] sm:$0xf]
        %v672 = vld [vmem:[%s617 + $0x58] sm:$0xf]
        %v673 = vld [vmem:[%s617 + $0x5c] sm:$0xf]
        %v674 = vld [vmem:[%s617 + $0x60] sm:$0xf]
        %v675 = vld [vmem:[%s617 + $0x64] sm:$0xf]
        %v676 = vld [vmem:[%s617 + $0x68] sm:$0xf]
        %v677 = vld [vmem:[%s617 + $0x6c] sm:$0xf]
        %v678 = vld [vmem:[%s617 + $0x70] sm:$0xf]
        %v679 = vld [vmem:[%s617 + $0x74] sm:$0xf]
        %v680 = vld [vmem:[%s617 + $0x78] sm:$0xf]
        %v681 = vld [vmem:[%s617 + $0x7c] sm:$0xf]
        %v682 = vld [vmem:[%s617 + $0x80] sm:$0xf]
        %v683 = vld [vmem:[%s617 + $0x84] sm:$0xf]
        %v684 = vld [vmem:[%s617 + $0x88] sm:$0xf]
        %v685 = vld [vmem:[%s617 + $0x8c] sm:$0xf]
        %v686 = vld [vmem:[%s617 + $0x90] sm:$0xf]
        %v687 = vld [vmem:[%s617 + $0x94] sm:$0xf]
        %v688 = vld [vmem:[%s617 + $0x98] sm:$0xf]
        %v689 = vld [vmem:[%s617 + $0x9c] sm:$0xf]
        %v690 = vld [vmem:[%s617 + $0xa0] sm:$0xf]
        %v691 = vld [vmem:[%s617 + $0xa4] sm:$0xf]
        %v692 = vld [vmem:[%s617 + $0xa8] sm:$0xf]
        %v693 = vld [vmem:[%s617 + $0xac] sm:$0xf]
        %v694 = vld [vmem:[%s617 + $0xb0] sm:$0xf]
        %v695 = vld [vmem:[%s617 + $0xb4] sm:$0xf]
        %v696 = vld [vmem:[%s617 + $0xb8] sm:$0xf]
        %v697 = vld [vmem:[%s617 + $0xbc] sm:$0xf]
        %v698 = vld [vmem:[%s617 + $0xc0] sm:$0xf]
        %v699 = vld [vmem:[%s617 + $0xc4] sm:$0xf]
        %v700 = vld [vmem:[%s617 + $0xc8] sm:$0xf]
        %v701 = vld [vmem:[%s617 + $0xcc] sm:$0xf]
        %v702 = vld [vmem:[%s617 + $0xd0] sm:$0xf]
        %v703 = vld [vmem:[%s617 + $0xd4] sm:$0xf]
        %v704 = vld [vmem:[%s617 + $0xd8] sm:$0xf]
        %v705 = vld [vmem:[%s617 + $0xdc] sm:$0xf]
        %v706 = vld [vmem:[%s617 + $0xe0] sm:$0xf]
        %v707 = vld [vmem:[%s617 + $0xe4] sm:$0xf]
        %v708 = vld [vmem:[%s617 + $0xe8] sm:$0xf]
        %v709 = vld [vmem:[%s617 + $0xec] sm:$0xf]
        %v710 = vld [vmem:[%s617 + $0xf0] sm:$0xf]
        %v711 = vld [vmem:[%s617 + $0xf4] sm:$0xf]
        %v712 = vld [vmem:[%s617 + $0xf8] sm:$0xf]
        %v713 = vld [vmem:[%s617 + $0xfc] sm:$0xf]
        %v714 = vld [vmem:[%s617 + $0x100] sm:$0xf]
        %v715 = vld [vmem:[%s617 + $0x104] sm:$0xf]
        %v716 = vld [vmem:[%s617 + $0x108] sm:$0xf]
        %v717 = vld [vmem:[%s617 + $0x10c] sm:$0xf]
        %v718 = vld [vmem:[%s617 + $0x110] sm:$0xf]
        %v719 = vld [vmem:[%s617 + $0x114] sm:$0xf]
        %v720 = vld [vmem:[%s617 + $0x118] sm:$0xf]
        %v721 = vld [vmem:[%s617 + $0x11c] sm:$0xf]
        %v778 = vunpack.c.l.b16 %v650
        %v779 = vunpack.c.l.b16 %v651
        %v780 = vunpack.c.l.b16 %v652
        %v781 = vunpack.c.l.b16 %v653
        %v782 = vunpack.c.l.b16 %v654
        %v783 = vunpack.c.l.b16 %v655
        %v784 = vunpack.c.l.b16 %v656
        %v785 = vunpack.c.l.b16 %v657
        %v786 = vunpack.c.l.b16 %v658
        %v787 = vunpack.c.l.b16 %v659
        %v788 = vunpack.c.l.b16 %v660
        %v789 = vunpack.c.l.b16 %v661
        %v790 = vunpack.c.l.b16 %v662
        %v791 = vunpack.c.l.b16 %v663
        %v792 = vunpack.c.l.b16 %v664
        %v793 = vunpack.c.l.b16 %v665
        %v794 = vunpack.c.l.b16 %v666
        %v795 = vunpack.c.l.b16 %v667
        %v796 = vunpack.c.l.b16 %v668
        %v797 = vunpack.c.l.b16 %v669
        %v798 = vunpack.c.l.b16 %v670
        %v799 = vunpack.c.l.b16 %v671
        %v800 = vunpack.c.l.b16 %v672
        %v801 = vunpack.c.l.b16 %v673
        %v802 = vunpack.c.l.b16 %v674
        %v803 = vunpack.c.l.b16 %v675
        %v804 = vunpack.c.l.b16 %v676
        %v805 = vunpack.c.l.b16 %v677
        %v806 = vunpack.c.l.b16 %v678
        %v807 = vunpack.c.l.b16 %v679
        %v808 = vunpack.c.l.b16 %v680
        %v809 = vunpack.c.l.b16 %v681
        %v810 = vunpack.c.l.b16 %v682
        %v811 = vunpack.c.l.b16 %v683
        %v812 = vunpack.c.l.b16 %v684
        %v813 = vunpack.c.l.b16 %v685
        %v814 = vunpack.c.l.b16 %v686
        %v815 = vunpack.c.l.b16 %v687
        %v816 = vunpack.c.l.b16 %v688
        %v817 = vunpack.c.l.b16 %v689
        %v818 = vunpack.c.l.b16 %v690
        %v819 = vunpack.c.l.b16 %v691
        %v820 = vunpack.c.l.b16 %v692
        %v821 = vunpack.c.l.b16 %v693
        %v822 = vunpack.c.l.b16 %v694
        %v823 = vunpack.c.l.b16 %v695
        %v824 = vunpack.c.l.b16 %v696
        %v825 = vunpack.c.l.b16 %v697
        %v826 = vunpack.c.l.b16 %v698
        %v827 = vunpack.c.l.b16 %v699
        %v828 = vunpack.c.l.b16 %v700
        %v829 = vunpack.c.l.b16 %v701
        %v830 = vunpack.c.l.b16 %v702
        %v831 = vunpack.c.l.b16 %v703
        %v832 = vunpack.c.l.b16 %v704
        %v833 = vunpack.c.l.b16 %v705
        %v834 = vpack.c.b16 %v779, %v778
        %v835 = vpack.c.b16 %v781, %v780
        %v836 = vpack.c.b16 %v783, %v782
        %v837 = vpack.c.b16 %v785, %v784
        %v838 = vpack.c.b16 %v787, %v786
        %v839 = vpack.c.b16 %v789, %v788
        %v840 = vpack.c.b16 %v791, %v790
        %v841 = vpack.c.b16 %v793, %v792
        %v842 = vpack.c.b16 %v795, %v794
        %v843 = vpack.c.b16 %v797, %v796
        %v844 = vpack.c.b16 %v799, %v798
        %v845 = vpack.c.b16 %v801, %v800
        %v846 = vpack.c.b16 %v803, %v802
        %v847 = vpack.c.b16 %v805, %v804
        %v848 = vpack.c.b16 %v807, %v806
        %v849 = vpack.c.b16 %v809, %v808
        %v850 = vpack.c.b16 %v811, %v810
        %v851 = vpack.c.b16 %v813, %v812
        %v852 = vpack.c.b16 %v815, %v814
        %v853 = vpack.c.b16 %v817, %v816
        %v854 = vpack.c.b16 %v819, %v818
        %v855 = vpack.c.b16 %v821, %v820
        %v856 = vpack.c.b16 %v823, %v822
        %v857 = vpack.c.b16 %v825, %v824
        %v858 = vpack.c.b16 %v827, %v826
        %v859 = vpack.c.b16 %v829, %v828
        %v860 = vpack.c.b16 %v831, %v830
        %v861 = vpack.c.b16 %v833, %v832
        %v894 = vunpack.c.l.b16 %v706
        %v895 = vunpack.c.l.b16 %v707
        %v896 = vunpack.c.l.b16 %v708
        %v897 = vunpack.c.l.b16 %v709
        %v898 = vpack.c.b16 %v895, %v894
        %v899 = vpack.c.b16 %v897, %v896
        %v906 = vunpack.c.l.b16 %v710
        %v907 = vunpack.c.l.b16 %v711
        %v908 = vunpack.c.l.b16 %v712
        %v909 = vunpack.c.l.b16 %v713
        %v910 = vpack.c.b16 %v907, %v906
        %v911 = vpack.c.b16 %v909, %v908
        %v918 = vunpack.c.l.b16 %v714
        %v919 = vunpack.c.l.b16 %v715
        %v920 = vunpack.c.l.b16 %v716
        %v921 = vunpack.c.l.b16 %v717
        %v922 = vpack.c.b16 %v919, %v918
        %v923 = vpack.c.b16 %v921, %v920
        %v930 = vunpack.c.l.b16 %v718
        %v931 = vunpack.c.l.b16 %v719
        %v932 = vunpack.c.l.b16 %v720
        %v933 = vunpack.c.l.b16 %v721
        %v934 = vpack.c.b16 %v931, %v930
        %v935 = vpack.c.b16 %v933, %v932
        %v938 = vld [vmem:[%s1] sm:$0xff]
        %v939 = vld [vmem:[%s1 + $0x8] sm:$0xf]
        %v940 = vld [vmem:[%s1 + $0xc] sm:$0xff]
        %v941 = vld [vmem:[%s1 + $0x14] sm:$0xf]
        %v942 = vld [vmem:[%s1 + $0x18] sm:$0xff]
        %v943 = vld [vmem:[%s1 + $0x20] sm:$0xf]
        %v944 = vld [vmem:[%s1 + $0x24] sm:$0xff]
        %v945 = vld [vmem:[%s1 + $0x2c] sm:$0xf]
        %v946 = vld [vmem:[%s1 + $0x30] sm:$0xff]
        %v947 = vld [vmem:[%s1 + $0x38] sm:$0xf]
        %v948 = vld [vmem:[%s1 + $0x3c] sm:$0xff]
        %v949 = vld [vmem:[%s1 + $0x44] sm:$0xf]
        %v950 = vld [vmem:[%s1 + $0x48] sm:$0xff]
        %v951 = vld [vmem:[%s1 + $0x50] sm:$0xf]
        %v952 = vld [vmem:[%s1 + $0x54] sm:$0xff]
        %v953 = vld [vmem:[%s1 + $0x5c] sm:$0xf]
        %v954 = vld [vmem:[%s1 + $0x60] sm:$0xff]
        %v955 = vld [vmem:[%s1 + $0x68] sm:$0xf]
        %v956 = vld [vmem:[%s1 + $0x6c] sm:$0xff]
        %v957 = vld [vmem:[%s1 + $0x74] sm:$0xf]
        %v958 = vld [vmem:[%s1 + $0x78] sm:$0xff]
        %v959 = vld [vmem:[%s1 + $0x80] sm:$0xf]
        %v960 = vld [vmem:[%s1 + $0x84] sm:$0xff]
        %v961 = vld [vmem:[%s1 + $0x8c] sm:$0xf]
        %v962 = vld [vmem:[%s1 + $0x90] sm:$0xff]
        %v963 = vld [vmem:[%s1 + $0x98] sm:$0xf]
        %v964 = vld [vmem:[%s1 + $0x9c] sm:$0xff]
        %v965 = vld [vmem:[%s1 + $0xa4] sm:$0xf]
        %v966 = vld [vmem:[%s1 + $0xa8] sm:$0xff]
        %v967 = vld [vmem:[%s1 + $0xb0] sm:$0xf]
        %v968 = vld [vmem:[%s1 + $0xb4] sm:$0xff]
        %v969 = vld [vmem:[%s1 + $0xbc] sm:$0xf]
        %v970 = vld [vmem:[%s1 + $0xc0] sm:$0xff]
        %v971 = vld [vmem:[%s1 + $0xc8] sm:$0xf]
        %v972 = vld [vmem:[%s1 + $0xcc] sm:$0xff]
        %v973 = vld [vmem:[%s1 + $0xd4] sm:$0xf]
        %v974 = vld [vmem:[%s1 + $0xd8] sm:$0xff]
        %v975 = vld [vmem:[%s1 + $0xe0] sm:$0xf]
        %v976 = vld [vmem:[%s1 + $0xe4] sm:$0xff]
        %v977 = vld [vmem:[%s1 + $0xec] sm:$0xf]
        %v978 = vld [vmem:[%s1 + $0xf0] sm:$0xff]
        %v979 = vld [vmem:[%s1 + $0xf8] sm:$0xf]
        %v980 = vld [vmem:[%s1 + $0xfc] sm:$0xff]
        %v981 = vld [vmem:[%s1 + $0x104] sm:$0xf]
        %v982 = vld [vmem:[%s1 + $0x108] sm:$0xff]
        %v983 = vld [vmem:[%s1 + $0x110] sm:$0xf]
        %v984 = vld [vmem:[%s1 + $0x114] sm:$0xff]
        %v985 = vld [vmem:[%s1 + $0x11c] sm:$0xf]
        %v986 = vld [vmem:[%s1 + $0x120] sm:$0xff]
        %v987 = vld [vmem:[%s1 + $0x128] sm:$0xf]
        %v988 = vld [vmem:[%s1 + $0x12c] sm:$0xff]
        %v989 = vld [vmem:[%s1 + $0x134] sm:$0xf]
        %v990 = vld [vmem:[%s1 + $0x138] sm:$0xff]
        %v991 = vld [vmem:[%s1 + $0x140] sm:$0xf]
        %v992 = vld [vmem:[%s1 + $0x144] sm:$0xff]
        %v993 = vld [vmem:[%s1 + $0x14c] sm:$0xf]
        %v994 = vld [vmem:[%s1 + $0x150] sm:$0xff]
        %v995 = vld [vmem:[%s1 + $0x158] sm:$0xf]
        %v996 = vld [vmem:[%s1 + $0x15c] sm:$0xff]
        %v997 = vld [vmem:[%s1 + $0x164] sm:$0xf]
        %v998 = vld [vmem:[%s1 + $0x168] sm:$0xff]
        %v999 = vld [vmem:[%s1 + $0x170] sm:$0xf]
        %v1000 = vld [vmem:[%s1 + $0x174] sm:$0xff]
        %v1001 = vld [vmem:[%s1 + $0x17c] sm:$0xf]
        %v1002 = vld [vmem:[%s1 + $0x180] sm:$0xff]
        %v1003 = vld [vmem:[%s1 + $0x188] sm:$0xf]
        %v1004 = vld [vmem:[%s1 + $0x18c] sm:$0xff]
        %v1005 = vld [vmem:[%s1 + $0x194] sm:$0xf]
        %v1006 = vld [vmem:[%s1 + $0x198] sm:$0xff]
        %v1007 = vld [vmem:[%s1 + $0x1a0] sm:$0xf]
        %v1008 = vld [vmem:[%s1 + $0x1a4] sm:$0xff]
        %v1009 = vld [vmem:[%s1 + $0x1ac] sm:$0xf]
        %v1010 = vld [vmem:[%s1 + $0x1b0] sm:$0xff]
        %v1011 = vld [vmem:[%s1 + $0x1b8] sm:$0xf]
        %v1012 = vld [vmem:[%s1 + $0x1bc] sm:$0xff]
        %v1013 = vld [vmem:[%s1 + $0x1c4] sm:$0xf]
        %v1014 = vld [vmem:[%s1 + $0x1c8] sm:$0xff]
        %v1015 = vld [vmem:[%s1 + $0x1d0] sm:$0xf]
        %v1016 = vld [vmem:[%s1 + $0x1d4] sm:$0xff]
        %v1017 = vld [vmem:[%s1 + $0x1dc] sm:$0xf]
        %v1018 = vld [vmem:[%s1 + $0x1e0] sm:$0xff]
        %v1019 = vld [vmem:[%s1 + $0x1e8] sm:$0xf]
        %v1020 = vld [vmem:[%s1 + $0x1ec] sm:$0xff]
        %v1021 = vld [vmem:[%s1 + $0x1f4] sm:$0xf]
        %v1022 = vld [vmem:[%s1 + $0x1f8] sm:$0xff]
        %v1023 = vld [vmem:[%s1 + $0x200] sm:$0xf]
        %v1024 = vld [vmem:[%s1 + $0x204] sm:$0xff]
        %v1025 = vld [vmem:[%s1 + $0x20c] sm:$0xf]
        %v1026 = vld [vmem:[%s1 + $0x210] sm:$0xff]
        %v1027 = vld [vmem:[%s1 + $0x218] sm:$0xf]
        %v1028 = vld [vmem:[%s1 + $0x21c] sm:$0xff]
        %v1029 = vld [vmem:[%s1 + $0x224] sm:$0xf]
        %v1030 = vld [vmem:[%s1 + $0x228] sm:$0xff]
        %v1031 = vld [vmem:[%s1 + $0x230] sm:$0xf]
        %v1032 = vld [vmem:[%s1 + $0x234] sm:$0xff]
        %v1033 = vld [vmem:[%s1 + $0x23c] sm:$0xf]
        %v1034 = vld [vmem:[%s1 + $0x240] sm:$0xff]
        %v1035 = vld [vmem:[%s1 + $0x248] sm:$0xf]
        %v1036 = vld [vmem:[%s1 + $0x24c] sm:$0xff]
        %v1037 = vld [vmem:[%s1 + $0x254] sm:$0xf]
        %v1038 = vld [vmem:[%s1 + $0x258] sm:$0xff]
        %v1039 = vld [vmem:[%s1 + $0x260] sm:$0xf]
        %v1040 = vld [vmem:[%s1 + $0x264] sm:$0xff]
        %v1041 = vld [vmem:[%s1 + $0x26c] sm:$0xf]
        %v1042 = vld [vmem:[%s1 + $0x270] sm:$0xff]
        %v1043 = vld [vmem:[%s1 + $0x278] sm:$0xf]
        %v1044 = vld [vmem:[%s1 + $0x27c] sm:$0xff]
        %v1045 = vld [vmem:[%s1 + $0x284] sm:$0xf]
        %v1046 = vld [vmem:[%s1 + $0x288] sm:$0xff]
        %v1047 = vld [vmem:[%s1 + $0x290] sm:$0xf]
        %v1048 = vld [vmem:[%s1 + $0x294] sm:$0xff]
        %v1049 = vld [vmem:[%s1 + $0x29c] sm:$0xf]
        %v1050 = vld [vmem:[%s1 + $0x2a0] sm:$0xff]
        %v1051 = vld [vmem:[%s1 + $0x2a8] sm:$0xf]
        %v1052 = vld [vmem:[%s1 + $0x2ac] sm:$0xff]
        %v1053 = vld [vmem:[%s1 + $0x2b4] sm:$0xf]
        %v1054 = vld [vmem:[%s1 + $0x2b8] sm:$0xff]
        %v1055 = vld [vmem:[%s1 + $0x2c0] sm:$0xf]
        %v1056 = vld [vmem:[%s1 + $0x2c4] sm:$0xff]
        %v1057 = vld [vmem:[%s1 + $0x2cc] sm:$0xf]
        %v1058 = vld [vmem:[%s1 + $0x2d0] sm:$0xff]
        %v1059 = vld [vmem:[%s1 + $0x2d8] sm:$0xf]
        %v1060 = vld [vmem:[%s1 + $0x2dc] sm:$0xff]
        %v1061 = vld [vmem:[%s1 + $0x2e4] sm:$0xf]
        %v1062 = vld [vmem:[%s1 + $0x2e8] sm:$0xff]
        %v1063 = vld [vmem:[%s1 + $0x2f0] sm:$0xf]
        %v1064 = vld [vmem:[%s1 + $0x2f4] sm:$0xff]
        %v1065 = vld [vmem:[%s1 + $0x2fc] sm:$0xf]
        %v1066 = vld [vmem:[%s1 + $0x300] sm:$0xff]
        %v1067 = vld [vmem:[%s1 + $0x308] sm:$0xf]
        %v1068 = vld [vmem:[%s1 + $0x30c] sm:$0xff]
        %v1069 = vld [vmem:[%s1 + $0x314] sm:$0xf]
        %v1070 = vld [vmem:[%s1 + $0x318] sm:$0xff]
        %v1071 = vld [vmem:[%s1 + $0x320] sm:$0xf]
        %v1072 = vld [vmem:[%s1 + $0x324] sm:$0xff]
        %v1073 = vld [vmem:[%s1 + $0x32c] sm:$0xf]
        %v1074 = vld [vmem:[%s1 + $0x330] sm:$0xff]
        %v1075 = vld [vmem:[%s1 + $0x338] sm:$0xf]
        %v1076 = vld [vmem:[%s1 + $0x33c] sm:$0xff]
        %v1077 = vld [vmem:[%s1 + $0x344] sm:$0xf]
        %v1078 = vld [vmem:[%s1 + $0x348] sm:$0xff]
        %v1079 = vld [vmem:[%s1 + $0x350] sm:$0xf]
        %v1080 = vld [vmem:[%s1 + $0x354] sm:$0xff]
        %v1081 = vld [vmem:[%s1 + $0x35c] sm:$0xf]
        %v1082 = vld [vmem:[%s1 + $0x360] sm:$0xff]
        %v1083 = vld [vmem:[%s1 + $0x368] sm:$0xf]
        %v1084 = vld [vmem:[%s1 + $0x36c] sm:$0xff]
        %v1085 = vld [vmem:[%s1 + $0x374] sm:$0xf]
        %v1086 = vld [vmem:[%s1 + $0x378] sm:$0xff]
        %v1087 = vld [vmem:[%s1 + $0x380] sm:$0xf]
        %v1088 = vld [vmem:[%s1 + $0x384] sm:$0xff]
        %v1089 = vld [vmem:[%s1 + $0x38c] sm:$0xf]
        %v1090 = vld [vmem:[%s1 + $0x390] sm:$0xff]
        %v1091 = vld [vmem:[%s1 + $0x398] sm:$0xf]
        %v1092 = vld [vmem:[%s1 + $0x39c] sm:$0xff]
        %v1093 = vld [vmem:[%s1 + $0x3a4] sm:$0xf]
        %v1094 = vld [vmem:[%s1 + $0x3a8] sm:$0xff]
        %v1095 = vld [vmem:[%s1 + $0x3b0] sm:$0xf]
        %v1096 = vld [vmem:[%s1 + $0x3b4] sm:$0xff]
        %v1097 = vld [vmem:[%s1 + $0x3bc] sm:$0xf]
        %v1258 = vunpack.c.l.b16 %v938
        %v1259 = vunpack.c.h.b16 %v938
        %v1260 = vunpack.c.l.b16 %v939
        %v1261 = vunpack.c.l.b16 %v940
        %v1262 = vunpack.c.h.b16 %v940
        %v1263 = vunpack.c.l.b16 %v941
        %v1264 = vunpack.c.l.b16 %v942
        %v1265 = vunpack.c.h.b16 %v942
        %v1266 = vunpack.c.l.b16 %v943
        %v1267 = vunpack.c.l.b16 %v944
        %v1268 = vunpack.c.h.b16 %v944
        %v1269 = vunpack.c.l.b16 %v945
        %v1270 = vunpack.c.l.b16 %v946
        %v1271 = vunpack.c.h.b16 %v946
        %v1272 = vunpack.c.l.b16 %v947
        %v1273 = vunpack.c.l.b16 %v948
        %v1274 = vunpack.c.h.b16 %v948
        %v1275 = vunpack.c.l.b16 %v949
        %v1276 = vunpack.c.l.b16 %v950
        %v1277 = vunpack.c.h.b16 %v950
        %v1278 = vunpack.c.l.b16 %v951
        %v1279 = vunpack.c.l.b16 %v952
        %v1280 = vunpack.c.h.b16 %v952
        %v1281 = vunpack.c.l.b16 %v953
        %v1282 = vunpack.c.l.b16 %v954
        %v1283 = vunpack.c.h.b16 %v954
        %v1284 = vunpack.c.l.b16 %v955
        %v1285 = vunpack.c.l.b16 %v956
        %v1286 = vunpack.c.h.b16 %v956
        %v1287 = vunpack.c.l.b16 %v957
        %v1288 = vunpack.c.l.b16 %v958
        %v1289 = vunpack.c.h.b16 %v958
        %v1290 = vunpack.c.l.b16 %v959
        %v1291 = vunpack.c.l.b16 %v960
        %v1292 = vunpack.c.h.b16 %v960
        %v1293 = vunpack.c.l.b16 %v961
        %v1294 = vunpack.c.l.b16 %v962
        %v1295 = vunpack.c.h.b16 %v962
        %v1296 = vunpack.c.l.b16 %v963
        %v1297 = vunpack.c.l.b16 %v964
        %v1298 = vunpack.c.h.b16 %v964
        %v1299 = vunpack.c.l.b16 %v965
        %v1300 = vunpack.c.l.b16 %v966
        %v1301 = vunpack.c.h.b16 %v966
        %v1302 = vunpack.c.l.b16 %v967
        %v1303 = vunpack.c.l.b16 %v968
        %v1304 = vunpack.c.h.b16 %v968
        %v1305 = vunpack.c.l.b16 %v969
        %v1306 = vunpack.c.l.b16 %v970
        %v1307 = vunpack.c.h.b16 %v970
        %v1308 = vunpack.c.l.b16 %v971
        %v1309 = vunpack.c.l.b16 %v972
        %v1310 = vunpack.c.h.b16 %v972
        %v1311 = vunpack.c.l.b16 %v973
        %v1312 = vunpack.c.l.b16 %v974
        %v1313 = vunpack.c.h.b16 %v974
        %v1314 = vunpack.c.l.b16 %v975
        %v1315 = vunpack.c.l.b16 %v976
        %v1316 = vunpack.c.h.b16 %v976
        %v1317 = vunpack.c.l.b16 %v977
        %v1318 = vunpack.c.l.b16 %v978
        %v1319 = vunpack.c.h.b16 %v978
        %v1320 = vunpack.c.l.b16 %v979
        %v1321 = vunpack.c.l.b16 %v980
        %v1322 = vunpack.c.h.b16 %v980
        %v1323 = vunpack.c.l.b16 %v981
        %v1324 = vunpack.c.l.b16 %v982
        %v1325 = vunpack.c.h.b16 %v982
        %v1326 = vunpack.c.l.b16 %v983
        %v1327 = vunpack.c.l.b16 %v984
        %v1328 = vunpack.c.h.b16 %v984
        %v1329 = vunpack.c.l.b16 %v985
        %v1330 = vunpack.c.l.b16 %v986
        %v1331 = vunpack.c.h.b16 %v986
        %v1332 = vunpack.c.l.b16 %v987
        %v1333 = vunpack.c.l.b16 %v988
        %v1334 = vunpack.c.h.b16 %v988
        %v1335 = vunpack.c.l.b16 %v989
        %v1336 = vunpack.c.l.b16 %v990
        %v1337 = vunpack.c.h.b16 %v990
        %v1338 = vunpack.c.l.b16 %v991
        %v1339 = vunpack.c.l.b16 %v992
        %v1340 = vunpack.c.h.b16 %v992
        %v1341 = vunpack.c.l.b16 %v993
        %v1342 = vunpack.c.l.b16 %v994
        %v1343 = vunpack.c.h.b16 %v994
        %v1344 = vunpack.c.l.b16 %v995
        %v1345 = vunpack.c.l.b16 %v996
        %v1346 = vunpack.c.h.b16 %v996
        %v1347 = vunpack.c.l.b16 %v997
        %v1348 = vunpack.c.l.b16 %v998
        %v1349 = vunpack.c.h.b16 %v998
        %v1350 = vunpack.c.l.b16 %v999
        %v1351 = vunpack.c.l.b16 %v1000
        %v1352 = vunpack.c.h.b16 %v1000
        %v1353 = vunpack.c.l.b16 %v1001
        %v1354 = vunpack.c.l.b16 %v1002
        %v1355 = vunpack.c.h.b16 %v1002
        %v1356 = vunpack.c.l.b16 %v1003
        %v1357 = vunpack.c.l.b16 %v1004
        %v1358 = vunpack.c.h.b16 %v1004
        %v1359 = vunpack.c.l.b16 %v1005
        %v1360 = vunpack.c.l.b16 %v1006
        %v1361 = vunpack.c.h.b16 %v1006
        %v1362 = vunpack.c.l.b16 %v1007
        %v1363 = vunpack.c.l.b16 %v1008
        %v1364 = vunpack.c.h.b16 %v1008
        %v1365 = vunpack.c.l.b16 %v1009
        %v1366 = vunpack.c.l.b16 %v1010
        %v1367 = vunpack.c.h.b16 %v1010
        %v1368 = vunpack.c.l.b16 %v1011
        %v1369 = vunpack.c.l.b16 %v1012
        %v1370 = vunpack.c.h.b16 %v1012
        %v1371 = vunpack.c.l.b16 %v1013
        %v1372 = vunpack.c.l.b16 %v1014
        %v1373 = vunpack.c.h.b16 %v1014
        %v1374 = vunpack.c.l.b16 %v1015
        %v1375 = vunpack.c.l.b16 %v1016
        %v1376 = vunpack.c.h.b16 %v1016
        %v1377 = vunpack.c.l.b16 %v1017
        %v1378 = vunpack.c.l.b16 %v1018
        %v1379 = vunpack.c.h.b16 %v1018
        %v1380 = vunpack.c.l.b16 %v1019
        %v1381 = vunpack.c.l.b16 %v1020
        %v1382 = vunpack.c.h.b16 %v1020
        %v1383 = vunpack.c.l.b16 %v1021
        %v1384 = vunpack.c.l.b16 %v1022
        %v1385 = vunpack.c.h.b16 %v1022
        %v1386 = vunpack.c.l.b16 %v1023
        %v1387 = vunpack.c.l.b16 %v1024
        %v1388 = vunpack.c.h.b16 %v1024
        %v1389 = vunpack.c.l.b16 %v1025
        %v1390 = vunpack.c.l.b16 %v1026
        %v1391 = vunpack.c.h.b16 %v1026
        %v1392 = vunpack.c.l.b16 %v1027
        %v1393 = vunpack.c.l.b16 %v1028
        %v1394 = vunpack.c.h.b16 %v1028
        %v1395 = vunpack.c.l.b16 %v1029
        %v1396 = vunpack.c.l.b16 %v1030
        %v1397 = vunpack.c.h.b16 %v1030
        %v1398 = vunpack.c.l.b16 %v1031
        %v1399 = vunpack.c.l.b16 %v1032
        %v1400 = vunpack.c.h.b16 %v1032
        %v1401 = vunpack.c.l.b16 %v1033
        %v1402 = vunpack.c.l.b16 %v1034
        %v1403 = vunpack.c.h.b16 %v1034
        %v1404 = vunpack.c.l.b16 %v1035
        %v1405 = vunpack.c.l.b16 %v1036
        %v1406 = vunpack.c.h.b16 %v1036
        %v1407 = vunpack.c.l.b16 %v1037
        %v1408 = vunpack.c.l.b16 %v1038
        %v1409 = vunpack.c.h.b16 %v1038
        %v1410 = vunpack.c.l.b16 %v1039
        %v1411 = vunpack.c.l.b16 %v1040
        %v1412 = vunpack.c.h.b16 %v1040
        %v1413 = vunpack.c.l.b16 %v1041
        %v1414 = vunpack.c.l.b16 %v1042
        %v1415 = vunpack.c.h.b16 %v1042
        %v1416 = vunpack.c.l.b16 %v1043
        %v1417 = vunpack.c.l.b16 %v1044
        %v1418 = vunpack.c.h.b16 %v1044
        %v1419 = vunpack.c.l.b16 %v1045
        %v1420 = vunpack.c.l.b16 %v1046
        %v1421 = vunpack.c.h.b16 %v1046
        %v1422 = vunpack.c.l.b16 %v1047
        %v1423 = vunpack.c.l.b16 %v1048
        %v1424 = vunpack.c.h.b16 %v1048
        %v1425 = vunpack.c.l.b16 %v1049
        %v1426 = vunpack.c.l.b16 %v1050
        %v1427 = vunpack.c.h.b16 %v1050
        %v1428 = vunpack.c.l.b16 %v1051
        %v1429 = vunpack.c.l.b16 %v1052
        %v1430 = vunpack.c.h.b16 %v1052
        %v1431 = vunpack.c.l.b16 %v1053
        %v1432 = vunpack.c.l.b16 %v1054
        %v1433 = vunpack.c.h.b16 %v1054
        %v1434 = vunpack.c.l.b16 %v1055
        %v1435 = vunpack.c.l.b16 %v1056
        %v1436 = vunpack.c.h.b16 %v1056
        %v1437 = vunpack.c.l.b16 %v1057
        %v1438 = vunpack.c.l.b16 %v1058
        %v1439 = vunpack.c.h.b16 %v1058
        %v1440 = vunpack.c.l.b16 %v1059
        %v1441 = vunpack.c.l.b16 %v1060
        %v1442 = vunpack.c.h.b16 %v1060
        %v1443 = vunpack.c.l.b16 %v1061
        %v1444 = vunpack.c.l.b16 %v1062
        %v1445 = vunpack.c.h.b16 %v1062
        %v1446 = vunpack.c.l.b16 %v1063
        %v1447 = vunpack.c.l.b16 %v1064
        %v1448 = vunpack.c.h.b16 %v1064
        %v1449 = vunpack.c.l.b16 %v1065
        %v1450 = vunpack.c.l.b16 %v1066
        %v1451 = vunpack.c.h.b16 %v1066
        %v1452 = vunpack.c.l.b16 %v1067
        %v1453 = vunpack.c.l.b16 %v1068
        %v1454 = vunpack.c.h.b16 %v1068
        %v1455 = vunpack.c.l.b16 %v1069
        %v1456 = vunpack.c.l.b16 %v1070
        %v1457 = vunpack.c.h.b16 %v1070
        %v1458 = vunpack.c.l.b16 %v1071
        %v1459 = vunpack.c.l.b16 %v1072
        %v1460 = vunpack.c.h.b16 %v1072
        %v1461 = vunpack.c.l.b16 %v1073
        %v1462 = vunpack.c.l.b16 %v1074
        %v1463 = vunpack.c.h.b16 %v1074
        %v1464 = vunpack.c.l.b16 %v1075
        %v1465 = vunpack.c.l.b16 %v1076
        %v1466 = vunpack.c.h.b16 %v1076
        %v1467 = vunpack.c.l.b16 %v1077
        %v1468 = vunpack.c.l.b16 %v1078
        %v1469 = vunpack.c.h.b16 %v1078
        %v1470 = vunpack.c.l.b16 %v1079
        %v1471 = vunpack.c.l.b16 %v1080
        %v1472 = vunpack.c.h.b16 %v1080
        %v1473 = vunpack.c.l.b16 %v1081
        %v1474 = vunpack.c.l.b16 %v1082
        %v1475 = vunpack.c.h.b16 %v1082
        %v1476 = vunpack.c.l.b16 %v1083
        %v1477 = vunpack.c.l.b16 %v1084
        %v1478 = vunpack.c.h.b16 %v1084
        %v1479 = vunpack.c.l.b16 %v1085
        %v1480 = vunpack.c.l.b16 %v1086
        %v1481 = vunpack.c.h.b16 %v1086
        %v1482 = vunpack.c.l.b16 %v1087
        %v1483 = vunpack.c.l.b16 %v1088
        %v1484 = vunpack.c.h.b16 %v1088
        %v1485 = vunpack.c.l.b16 %v1089
        %v1486 = vunpack.c.l.b16 %v1090
        %v1487 = vunpack.c.h.b16 %v1090
        %v1488 = vunpack.c.l.b16 %v1091
        %v1489 = vunpack.c.l.b16 %v1092
        %v1490 = vunpack.c.h.b16 %v1092
        %v1491 = vunpack.c.l.b16 %v1093
        %v1492 = vunpack.c.l.b16 %v1094
        %v1493 = vunpack.c.h.b16 %v1094
        %v1494 = vunpack.c.l.b16 %v1095
        %v1495 = vunpack.c.l.b16 %v1096
        %v1496 = vunpack.c.h.b16 %v1096
        %v1497 = vunpack.c.l.b16 %v1097
        %v1498 = vpack.c.b16 %v1261, %v1258
        %v1499 = vpack.c.b16 %v1262, %v1259
        %v1500 = vpack.c.b16 %v1263, %v1260
        %v1501 = vpack.c.b16 %v1267, %v1264
        %v1502 = vpack.c.b16 %v1268, %v1265
        %v1503 = vpack.c.b16 %v1269, %v1266
        %v1504 = vpack.c.b16 %v1273, %v1270
        %v1505 = vpack.c.b16 %v1274, %v1271
        %v1506 = vpack.c.b16 %v1275, %v1272
        %v1507 = vpack.c.b16 %v1279, %v1276
        %v1508 = vpack.c.b16 %v1280, %v1277
        %v1509 = vpack.c.b16 %v1281, %v1278
        %v1510 = vpack.c.b16 %v1285, %v1282
        %v1511 = vpack.c.b16 %v1286, %v1283
        %v1512 = vpack.c.b16 %v1287, %v1284
        %v1513 = vpack.c.b16 %v1291, %v1288
        %v1514 = vpack.c.b16 %v1292, %v1289
        %v1515 = vpack.c.b16 %v1293, %v1290
        %v1516 = vpack.c.b16 %v1297, %v1294
        %v1517 = vpack.c.b16 %v1298, %v1295
        %v1518 = vpack.c.b16 %v1299, %v1296
        %v1519 = vpack.c.b16 %v1303, %v1300
        %v1520 = vpack.c.b16 %v1304, %v1301
        %v1521 = vpack.c.b16 %v1305, %v1302
        %v1522 = vpack.c.b16 %v1309, %v1306
        %v1523 = vpack.c.b16 %v1310, %v1307
        %v1524 = vpack.c.b16 %v1311, %v1308
        %v1525 = vpack.c.b16 %v1315, %v1312
        %v1526 = vpack.c.b16 %v1316, %v1313
        %v1527 = vpack.c.b16 %v1317, %v1314
        %v1528 = vpack.c.b16 %v1321, %v1318
        %v1529 = vpack.c.b16 %v1322, %v1319
        %v1530 = vpack.c.b16 %v1323, %v1320
        %v1531 = vpack.c.b16 %v1327, %v1324
        %v1532 = vpack.c.b16 %v1328, %v1325
        %v1533 = vpack.c.b16 %v1329, %v1326
        %v1534 = vpack.c.b16 %v1333, %v1330
        %v1535 = vpack.c.b16 %v1334, %v1331
        %v1536 = vpack.c.b16 %v1335, %v1332
        %v1537 = vpack.c.b16 %v1339, %v1336
        %v1538 = vpack.c.b16 %v1340, %v1337
        %v1539 = vpack.c.b16 %v1341, %v1338
        %v1540 = vpack.c.b16 %v1345, %v1342
        %v1541 = vpack.c.b16 %v1346, %v1343
        %v1542 = vpack.c.b16 %v1347, %v1344
        %v1543 = vpack.c.b16 %v1351, %v1348
        %v1544 = vpack.c.b16 %v1352, %v1349
        %v1545 = vpack.c.b16 %v1353, %v1350
        %v1546 = vpack.c.b16 %v1357, %v1354
        %v1547 = vpack.c.b16 %v1358, %v1355
        %v1548 = vpack.c.b16 %v1359, %v1356
        %v1549 = vpack.c.b16 %v1363, %v1360
        %v1550 = vpack.c.b16 %v1364, %v1361
        %v1551 = vpack.c.b16 %v1365, %v1362
        %v1552 = vpack.c.b16 %v1369, %v1366
        %v1553 = vpack.c.b16 %v1370, %v1367
        %v1554 = vpack.c.b16 %v1371, %v1368
        %v1555 = vpack.c.b16 %v1375, %v1372
        %v1556 = vpack.c.b16 %v1376, %v1373
        %v1557 = vpack.c.b16 %v1377, %v1374
        %v1558 = vpack.c.b16 %v1381, %v1378
        %v1559 = vpack.c.b16 %v1382, %v1379
        %v1560 = vpack.c.b16 %v1383, %v1380
        %v1561 = vpack.c.b16 %v1387, %v1384
        %v1562 = vpack.c.b16 %v1388, %v1385
        %v1563 = vpack.c.b16 %v1389, %v1386
        %v1564 = vpack.c.b16 %v1393, %v1390
        %v1565 = vpack.c.b16 %v1394, %v1391
        %v1566 = vpack.c.b16 %v1395, %v1392
        %v1567 = vpack.c.b16 %v1399, %v1396
        %v1568 = vpack.c.b16 %v1400, %v1397
        %v1569 = vpack.c.b16 %v1401, %v1398
        %v1570 = vpack.c.b16 %v1405, %v1402
        %v1571 = vpack.c.b16 %v1406, %v1403
        %v1572 = vpack.c.b16 %v1407, %v1404
        %v1573 = vpack.c.b16 %v1411, %v1408
        %v1574 = vpack.c.b16 %v1412, %v1409
        %v1575 = vpack.c.b16 %v1413, %v1410
        %v1576 = vpack.c.b16 %v1417, %v1414
        %v1577 = vpack.c.b16 %v1418, %v1415
        %v1578 = vpack.c.b16 %v1419, %v1416
        %v1579 = vpack.c.b16 %v1423, %v1420
        %v1580 = vpack.c.b16 %v1424, %v1421
        %v1581 = vpack.c.b16 %v1425, %v1422
        %v1582 = vpack.c.b16 %v1429, %v1426
        %v1583 = vpack.c.b16 %v1430, %v1427
        %v1584 = vpack.c.b16 %v1431, %v1428
        %v1585 = vpack.c.b16 %v1435, %v1432
        %v1586 = vpack.c.b16 %v1436, %v1433
        %v1587 = vpack.c.b16 %v1437, %v1434
        %v1588 = vpack.c.b16 %v1441, %v1438
        %v1589 = vpack.c.b16 %v1442, %v1439
        %v1590 = vpack.c.b16 %v1443, %v1440
        %v1591 = vpack.c.b16 %v1447, %v1444
        %v1592 = vpack.c.b16 %v1448, %v1445
        %v1593 = vpack.c.b16 %v1449, %v1446
        %v1594 = vpack.c.b16 %v1453, %v1450
        %v1595 = vpack.c.b16 %v1454, %v1451
        %v1596 = vpack.c.b16 %v1455, %v1452
        %v1597 = vpack.c.b16 %v1459, %v1456
        %v1598 = vpack.c.b16 %v1460, %v1457
        %v1599 = vpack.c.b16 %v1461, %v1458
        %v1600 = vpack.c.b16 %v1465, %v1462
        %v1601 = vpack.c.b16 %v1466, %v1463
        %v1602 = vpack.c.b16 %v1467, %v1464
        %v1603 = vpack.c.b16 %v1471, %v1468
        %v1604 = vpack.c.b16 %v1472, %v1469
        %v1605 = vpack.c.b16 %v1473, %v1470
        %v1606 = vpack.c.b16 %v1477, %v1474
        %v1607 = vpack.c.b16 %v1478, %v1475
        %v1608 = vpack.c.b16 %v1479, %v1476
        %v1609 = vpack.c.b16 %v1483, %v1480
        %v1610 = vpack.c.b16 %v1484, %v1481
        %v1611 = vpack.c.b16 %v1485, %v1482
        %v1612 = vpack.c.b16 %v1489, %v1486
        %v1613 = vpack.c.b16 %v1490, %v1487
        %v1614 = vpack.c.b16 %v1491, %v1488
        %v1615 = vpack.c.b16 %v1495, %v1492
        %v1616 = vpack.c.b16 %v1496, %v1493
        %v1617 = vpack.c.b16 %v1497, %v1494
        %1738 = vmatprep.subr.bf16.mxu0 %v1499
        %1739 = vmatpush1.bf16.msra.mxu0 %v1498
        %1740 = vmatprep.subr.bf16.mxu0 %v1502
        %1741 = vmatpush1.bf16.msra.mxu0 %v1501
        %1742 = vmatprep.subr.bf16.mxu0 %v1505
        %1743 = vmatpush1.bf16.msra.mxu0 %v1504
        %1744 = vmatprep.subr.bf16.mxu0 %v1508
        %1745 = vmatpush1.bf16.msra.mxu0 %v1507
        %1746 = vmatprep.subr.bf16.mxu0 %v1511
        %1747 = vmatpush1.bf16.msra.mxu0 %v1510
        %1748 = vmatprep.subr.bf16.mxu0 %v1514
        %1749 = vmatpush1.bf16.msra.mxu0 %v1513
        %1750 = vmatprep.subr.bf16.mxu0 %v1517
        %1751 = vmatpush1.bf16.msra.mxu0 %v1516
        %1752 = vmatprep.subr.bf16.mxu0 %v1520
        %1753 = vmatpush1.bf16.msra.mxu0 %v1519
        %1754 = vmatprep.subr.bf16.mxu0 %v1523
        %1755 = vmatpush1.bf16.msra.mxu0 %v1522
        %1756 = vmatprep.subr.bf16.mxu0 %v1526
        %1757 = vmatpush1.bf16.msra.mxu0 %v1525
        %1758 = vmatprep.subr.bf16.mxu0 %v1529
        %1759 = vmatpush1.bf16.msra.mxu0 %v1528
        %1760 = vmatprep.subr.bf16.mxu0 %v1532
        %1761 = vmatpush1.bf16.msra.mxu0 %v1531
        %1762 = vmatprep.subr.bf16.mxu0 %v1535
        %1763 = vmatpush1.bf16.msra.mxu0 %v1534
        %1764 = vmatprep.subr.bf16.mxu0 %v1538
        %1765 = vmatpush1.bf16.msra.mxu0 %v1537
        %1766 = vmatprep.subr.bf16.mxu0 %v1541
        %1767 = vmatpush1.bf16.msra.mxu0 %v1540
        %1768 = vmatprep.subr.bf16.mxu0 %v1544
        %1769 = vmatpush1.bf16.msra.mxu0 %v1543
        %1770 = vmatprep.mubr.bf16.mxu0 %v836
        %1771 = vmatmul.mubr.bf16.gmra.mrb[0].mxu0 %v834
        %v1772 = vpop.f32.mrb[0].mxu0
        %v1773 = vadd.f32 0.0, %v1772
        %v1774 = vpop.f32.mrb[0].mxu0
        %v1775 = vadd.f32 0.0, %v1774
        %v1776 = vpop.f32.mrb[0].mxu0
        %v1777 = vadd.f32 0.0, %v1776
        %v1778 = vpop.f32.mrb[0].mxu0
        %v1779 = vadd.f32 0.0, %v1778
        %1780 = vmatprep.mubr.bf16.mxu0 %v837
        %1781 = vmatmul.mubr.bf16.gmra.mrb[0].mxu0 %v835
        %v1782 = vpop.f32.mrb[0].mxu0
        %v1783 = vadd.f32 0.0, %v1782
        %v1784 = vpop.f32.mrb[0].mxu0
        %v1785 = vadd.f32 0.0, %v1784
        %v1786 = vpop.f32.mrb[0].mxu0
        %v1787 = vadd.f32 0.0, %v1786
        %v1788 = vpop.f32.mrb[0].mxu0
        %v1789 = vadd.f32 0.0, %v1788
        %1790 = vmatprep.mubr.bf16.mxu0 %v838
        %1791 = vmatmul.mubr.bf16.gmra.mrb[0].mxu0 %v836
        %v1792 = vpop.f32.mrb[0].mxu0
        %v1793 = vadd.f32 0.0, %v1792
        %v1794 = vpop.f32.mrb[0].mxu0
        %v1795 = vadd.f32 0.0, %v1794
        %v1796 = vpop.f32.mrb[0].mxu0
        %v1797 = vadd.f32 0.0, %v1796
        %v1798 = vpop.f32.mrb[0].mxu0
        %v1799 = vadd.f32 0.0, %v1798
        %1800 = vmatprep.mubr.bf16.mxu0 %v839
        %1801 = vmatmul.mubr.bf16.gmra.mrb[0].mxu0 %v837
        %v1802 = vpop.f32.mrb[0].mxu0
        %v1803 = vadd.f32 0.0, %v1802
        %v1804 = vpop.f32.mrb[0].mxu0
        %v1805 = vadd.f32 0.0, %v1804
        %v1806 = vpop.f32.mrb[0].mxu0
        %v1807 = vadd.f32 0.0, %v1806
        %v1808 = vpop.f32.mrb[0].mxu0
        %v1809 = vadd.f32 0.0, %v1808
        %1810 = vmatprep.mubr.bf16.mxu0 %v840
        %1811 = vmatmul.mubr.bf16.gmra.mrb[0].mxu0 %v838
        %v1812 = vpop.f32.mrb[0].mxu0
        %v1813 = vadd.f32 0.0, %v1812
        %v1814 = vpop.f32.mrb[0].mxu0
        %v1815 = vadd.f32 0.0, %v1814
        %v1816 = vpop.f32.mrb[0].mxu0
        %v1817 = vadd.f32 0.0, %v1816
        %v1818 = vpop.f32.mrb[0].mxu0
        %v1819 = vadd.f32 0.0, %v1818
        %1820 = vmatprep.mubr.bf16.mxu0 %v841
        %1821 = vmatmul.mubr.bf16.gmra.mrb[0].mxu0 %v839
        %v1822 = vpop.f32.mrb[0].mxu0
        %v1823 = vadd.f32 0.0, %v1822
        %v1824 = vpop.f32.mrb[0].mxu0
        %v1825 = vadd.f32 0.0, %v1824
        %v1826 = vpop.f32.mrb[0].mxu0
        %v1827 = vadd.f32 0.0, %v1826
        %v1828 = vpop.f32.mrb[0].mxu0
        %v1829 = vadd.f32 0.0, %v1828
        %1830 = vmatprep.mubr.bf16.mxu0 %v842
        %1831 = vmatmul.mubr.bf16.gmra.mrb[0].mxu0 %v840
        %v1832 = vpop.f32.mrb[0].mxu0
        %v1833 = vadd.f32 0.0, %v1832
        %v1834 = vpop.f32.mrb[0].mxu0
        %v1835 = vadd.f32 0.0, %v1834
        %v1836 = vpop.f32.mrb[0].mxu0
        %v1837 = vadd.f32 0.0, %v1836
        %v1838 = vpop.f32.mrb[0].mxu0
        %v1839 = vadd.f32 0.0, %v1838
        %1840 = vmatprep.mubr.bf16.mxu0 %v843
        %1841 = vmatmul.mubr.bf16.gmra.mrb[0].mxu0 %v841
        %v1842 = vpop.f32.mrb[0].mxu0
        %v1843 = vadd.f32 0.0, %v1842
        %v1844 = vpop.f32.mrb[0].mxu0
        %v1845 = vadd.f32 0.0, %v1844
        %v1846 = vpop.f32.mrb[0].mxu0
        %v1847 = vadd.f32 0.0, %v1846
        %v1848 = vpop.f32.mrb[0].mxu0
        %v1849 = vadd.f32 0.0, %v1848
        %1850 = vmatprep.mubr.bf16.mxu0 %v844
        %1851 = vmatmul.mubr.bf16.gmra.mrb[0].mxu0 %v842
        %v1852 = vpop.f32.mrb[0].mxu0
        %v1853 = vadd.f32 0.0, %v1852
        %v1854 = vpop.f32.mrb[0].mxu0
        %v1855 = vadd.f32 0.0, %v1854
        %v1856 = vpop.f32.mrb[0].mxu0
        %v1857 = vadd.f32 0.0, %v1856
        %v1858 = vpop.f32.mrb[0].mxu0
        %v1859 = vadd.f32 0.0, %v1858
        %1860 = vmatprep.mubr.bf16.mxu0 %v845
        %1861 = vmatmul.mubr.bf16.gmra.mrb[0].mxu0 %v843
        %v1862 = vpop.f32.mrb[0].mxu0
        %v1863 = vadd.f32 0.0, %v1862
        %v1864 = vpop.f32.mrb[0].mxu0
        %v1865 = vadd.f32 0.0, %v1864
        %v1866 = vpop.f32.mrb[0].mxu0
        %v1867 = vadd.f32 0.0, %v1866
        %v1868 = vpop.f32.mrb[0].mxu0
        %v1869 = vadd.f32 0.0, %v1868
        %1870 = vmatprep.mubr.bf16.mxu0 %v846
        %1871 = vmatmul.mubr.bf16.gmra.mrb[0].mxu0 %v844
        %v1872 = vpop.f32.mrb[0].mxu0
        %v1873 = vadd.f32 0.0, %v1872
        %v1874 = vpop.f32.mrb[0].mxu0
        %v1875 = vadd.f32 0.0, %v1874
        %v1876 = vpop.f32.mrb[0].mxu0
        %v1877 = vadd.f32 0.0, %v1876
        %v1878 = vpop.f32.mrb[0].mxu0
        %v1879 = vadd.f32 0.0, %v1878
        %1880 = vmatprep.mubr.bf16.mxu0 %v847
        %1881 = vmatmul.mubr.bf16.gmra.mrb[0].mxu0 %v845
        %v1882 = vpop.f32.mrb[0].mxu0
        %v1883 = vadd.f32 0.0, %v1882
        %v1884 = vpop.f32.mrb[0].mxu0
        %v1885 = vadd.f32 0.0, %v1884
        %v1886 = vpop.f32.mrb[0].mxu0
        %v1887 = vadd.f32 0.0, %v1886
        %v1888 = vpop.f32.mrb[0].mxu0
        %v1889 = vadd.f32 0.0, %v1888
        %1890 = vmatprep.mubr.bf16.mxu0 %v848
        %1891 = vmatmul.mubr.bf16.gmra.mrb[0].mxu0 %v846
        %v1892 = vpop.f32.mrb[0].mxu0
        %v1893 = vadd.f32 0.0, %v1892
        %v1894 = vpop.f32.mrb[0].mxu0
        %v1895 = vadd.f32 0.0, %v1894
        %v1896 = vpop.f32.mrb[0].mxu0
        %v1897 = vadd.f32 0.0, %v1896
        %v1898 = vpop.f32.mrb[0].mxu0
        %v1899 = vadd.f32 0.0, %v1898
        %1900 = vmatprep.mubr.bf16.mxu0 %v849
        %1901 = vmatmul.mubr.bf16.gmra.mrb[0].mxu0 %v847
        %v1902 = vpop.f32.mrb[0].mxu0
        %v1903 = vadd.f32 0.0, %v1902
        %v1904 = vpop.f32.mrb[0].mxu0
        %v1905 = vadd.f32 0.0, %v1904
        %v1906 = vpop.f32.mrb[0].mxu0
        %v1907 = vadd.f32 0.0, %v1906
        %v1908 = vpop.f32.mrb[0].mxu0
        %v1909 = vadd.f32 0.0, %v1908
        %1910 = vmatprep.mubr.bf16.mxu0 %v850
        %1911 = vmatmul.mubr.bf16.gmra.mrb[0].mxu0 %v848
        %v1912 = vpop.f32.mrb[0].mxu0
        %v1913 = vadd.f32 0.0, %v1912
        %v1914 = vpop.f32.mrb[0].mxu0
        %v1915 = vadd.f32 0.0, %v1914
        %v1916 = vpop.f32.mrb[0].mxu0
        %v1917 = vadd.f32 0.0, %v1916
        %v1918 = vpop.f32.mrb[0].mxu0
        %v1919 = vadd.f32 0.0, %v1918
        %1920 = vmatprep.mubr.bf16.mxu0 %v851
        %1921 = vmatmul.mubr.bf16.gmra.mrb[0].mxu0 %v849
        %v1922 = vpop.f32.mrb[0].mxu0
        %v1923 = vadd.f32 0.0, %v1922
        %v1924 = vpop.f32.mrb[0].mxu0
        %v1925 = vadd.f32 0.0, %v1924
        %v1926 = vpop.f32.mrb[0].mxu0
        %v1927 = vadd.f32 0.0, %v1926
        %v1928 = vpop.f32.mrb[0].mxu0
        %v1929 = vadd.f32 0.0, %v1928
        %1930 = vmatprep.mubr.bf16.mxu0 %v852
        %1931 = vmatmul.mubr.bf16.gmra.mrb[0].mxu0 %v850
        %v1932 = vpop.f32.mrb[0].mxu0
        %v1933 = vadd.f32 0.0, %v1932
        %v1934 = vpop.f32.mrb[0].mxu0
        %v1935 = vadd.f32 0.0, %v1934
        %v1936 = vpop.f32.mrb[0].mxu0
        %v1937 = vadd.f32 0.0, %v1936
        %v1938 = vpop.f32.mrb[0].mxu0
        %v1939 = vadd.f32 0.0, %v1938
        %1940 = vmatprep.mubr.bf16.mxu0 %v853
        %1941 = vmatmul.mubr.bf16.gmra.mrb[0].mxu0 %v851
        %v1942 = vpop.f32.mrb[0].mxu0
        %v1943 = vadd.f32 0.0, %v1942
        %v1944 = vpop.f32.mrb[0].mxu0
        %v1945 = vadd.f32 0.0, %v1944
        %v1946 = vpop.f32.mrb[0].mxu0
        %v1947 = vadd.f32 0.0, %v1946
        %v1948 = vpop.f32.mrb[0].mxu0
        %v1949 = vadd.f32 0.0, %v1948
        %1950 = vmatprep.mubr.bf16.mxu0 %v854
        %1951 = vmatmul.mubr.bf16.gmra.mrb[0].mxu0 %v852
        %v1952 = vpop.f32.mrb[0].mxu0
        %v1953 = vadd.f32 0.0, %v1952
        %v1954 = vpop.f32.mrb[0].mxu0
        %v1955 = vadd.f32 0.0, %v1954
        %v1956 = vpop.f32.mrb[0].mxu0
        %v1957 = vadd.f32 0.0, %v1956
        %v1958 = vpop.f32.mrb[0].mxu0
        %v1959 = vadd.f32 0.0, %v1958
        %1960 = vmatprep.mubr.bf16.mxu0 %v855
        %1961 = vmatmul.mubr.bf16.gmra.mrb[0].mxu0 %v853
        %v1962 = vpop.f32.mrb[0].mxu0
        %v1963 = vadd.f32 0.0, %v1962
        %v1964 = vpop.f32.mrb[0].mxu0
        %v1965 = vadd.f32 0.0, %v1964
        %v1966 = vpop.f32.mrb[0].mxu0
        %v1967 = vadd.f32 0.0, %v1966
        %v1968 = vpop.f32.mrb[0].mxu0
        %v1969 = vadd.f32 0.0, %v1968
        %1970 = vmatprep.mubr.bf16.mxu0 %v856
        %1971 = vmatmul.mubr.bf16.gmra.mrb[0].mxu0 %v854
        %v1972 = vpop.f32.mrb[0].mxu0
        %v1973 = vadd.f32 0.0, %v1972
        %v1974 = vpop.f32.mrb[0].mxu0
        %v1975 = vadd.f32 0.0, %v1974
        %v1976 = vpop.f32.mrb[0].mxu0
        %v1977 = vadd.f32 0.0, %v1976
        %v1978 = vpop.f32.mrb[0].mxu0
        %v1979 = vadd.f32 0.0, %v1978
        %1980 = vmatprep.mubr.bf16.mxu0 %v857
        %1981 = vmatmul.mubr.bf16.gmra.mrb[0].mxu0 %v855
        %v1982 = vpop.f32.mrb[0].mxu0
        %v1983 = vadd.f32 0.0, %v1982
        %v1984 = vpop.f32.mrb[0].mxu0
        %v1985 = vadd.f32 0.0, %v1984
        %v1986 = vpop.f32.mrb[0].mxu0
        %v1987 = vadd.f32 0.0, %v1986
        %v1988 = vpop.f32.mrb[0].mxu0
        %v1989 = vadd.f32 0.0, %v1988
        %1990 = vmatprep.mubr.bf16.mxu0 %v858
        %1991 = vmatmul.mubr.bf16.gmra.mrb[0].mxu0 %v856
        %v1992 = vpop.f32.mrb[0].mxu0
        %v1993 = vadd.f32 0.0, %v1992
        %v1994 = vpop.f32.mrb[0].mxu0
        %v1995 = vadd.f32 0.0, %v1994
        %v1996 = vpop.f32.mrb[0].mxu0
        %v1997 = vadd.f32 0.0, %v1996
        %v1998 = vpop.f32.mrb[0].mxu0
        %v1999 = vadd.f32 0.0, %v1998
        %2000 = vmatprep.mubr.bf16.mxu0 %v859
        %2001 = vmatmul.mubr.bf16.gmra.mrb[0].mxu0 %v857
        %v2002 = vpop.f32.mrb[0].mxu0
        %v2003 = vadd.f32 0.0, %v2002
        %v2004 = vpop.f32.mrb[0].mxu0
        %v2005 = vadd.f32 0.0, %v2004
        %v2006 = vpop.f32.mrb[0].mxu0
        %v2007 = vadd.f32 0.0, %v2006
        %v2008 = vpop.f32.mrb[0].mxu0
        %v2009 = vadd.f32 0.0, %v2008
        %2010 = vmatprep.mubr.bf16.mxu0 %v860
        %2011 = vmatmul.mubr.bf16.gmra.mrb[0].mxu0 %v858
        %v2012 = vpop.f32.mrb[0].mxu0
        %v2013 = vadd.f32 0.0, %v2012
        %v2014 = vpop.f32.mrb[0].mxu0
        %v2015 = vadd.f32 0.0, %v2014
        %v2016 = vpop.f32.mrb[0].mxu0
        %v2017 = vadd.f32 0.0, %v2016
        %v2018 = vpop.f32.mrb[0].mxu0
        %v2019 = vadd.f32 0.0, %v2018
        %2020 = vmatprep.mubr.bf16.mxu0 %v861
        %2021 = vmatmul.mubr.bf16.gmra.mrb[0].mxu0 %v859
        %v2022 = vpop.f32.mrb[0].mxu0
        %v2023 = vadd.f32 0.0, %v2022
        %v2024 = vpop.f32.mrb[0].mxu0
        %v2025 = vadd.f32 0.0, %v2024
        %v2026 = vpop.f32.mrb[0].mxu0
        %v2027 = vadd.f32 0.0, %v2026
        %v2028 = vpop.f32.mrb[0].mxu0
        %v2029 = vadd.f32 0.0, %v2028
        %2030 = vmatprep.mubr.bf16.mxu0 %v898
        %2031 = vmatmul.mubr.bf16.gmra.mrb[0].mxu0 %v860
        %v2032 = vpop.f32.mrb[0].mxu0
        %v2033 = vadd.f32 0.0, %v2032
        %v2034 = vpop.f32.mrb[0].mxu0
        %v2035 = vpop.f32.mrb[0].mxu0
        %v2036 = vadd.f32 0.0, %v2035
        %v2037 = vpop.f32.mrb[0].mxu0
        %2038 = vmatprep.mubr.bf16.mxu0 %v899
        %2039 = vmatmul.mubr.bf16.gmra.mrb[0].mxu0 %v861
        %v2040 = vpop.f32.mrb[0].mxu0
        %v2041 = vadd.f32 0.0, %v2040
        %v2042 = vpop.f32.mrb[0].mxu0
        %v2043 = vpop.f32.mrb[0].mxu0
        %v2044 = vadd.f32 0.0, %v2043
        %v2045 = vpop.f32.mrb[0].mxu0
        %2046 = vdwg.mxu0
        %2047 = vmatprep.subr.bf16.mxu0 %v1547
        %2048 = vmatpush1.bf16.msra.mxu0 %v1546
        %2049 = vmatprep.subr.bf16.mxu0 %v1550
        %2050 = vmatpush1.bf16.msra.mxu0 %v1549
        %2051 = vmatprep.subr.bf16.mxu0 %v1553
        %2052 = vmatpush1.bf16.msra.mxu0 %v1552
        %2053 = vmatprep.subr.bf16.mxu0 %v1556
        %2054 = vmatpush1.bf16.msra.mxu0 %v1555
        %2055 = vmatprep.subr.bf16.mxu0 %v1559
        %2056 = vmatpush1.bf16.msra.mxu0 %v1558
        %2057 = vmatprep.subr.bf16.mxu0 %v1562
        %2058 = vmatpush1.bf16.msra.mxu0 %v1561
        %2059 = vmatprep.subr.bf16.mxu0 %v1565
        %2060 = vmatpush1.bf16.msra.mxu0 %v1564
        %2061 = vmatprep.subr.bf16.mxu0 %v1568
        %2062 = vmatpush1.bf16.msra.mxu0 %v1567
        %2063 = vmatprep.subr.bf16.mxu0 %v1571
        %2064 = vmatpush1.bf16.msra.mxu0 %v1570
        %2065 = vmatprep.subr.bf16.mxu0 %v1574
        %2066 = vmatpush1.bf16.msra.mxu0 %v1573
        %2067 = vmatprep.subr.bf16.mxu0 %v1577
        %2068 = vmatpush1.bf16.msra.mxu0 %v1576
        %2069 = vmatprep.subr.bf16.mxu0 %v1580
        %2070 = vmatpush1.bf16.msra.mxu0 %v1579
        %2071 = vmatprep.subr.bf16.mxu0 %v1583
        %2072 = vmatpush1.bf16.msra.mxu0 %v1582
        %2073 = vmatprep.subr.bf16.mxu0 %v1586
        %2074 = vmatpush1.bf16.msra.mxu0 %v1585
        %2075 = vmatprep.subr.bf16.mxu0 %v1589
        %2076 = vmatpush1.bf16.msra.mxu0 %v1588
        %2077 = vmatprep.subr.bf16.mxu0 %v1592
        %2078 = vmatpush1.bf16.msra.mxu0 %v1591
        %2079 = vmatprep.mubr.bf16.mxu0 %v840
        %2080 = vmatmul.mubr.bf16.gmra.mrb[0].mxu0 %v838
        %v2081 = vpop.f32.mrb[0].mxu0
        %v2082 = vadd.f32 %v1773, %v2081
        %v2083 = vpop.f32.mrb[0].mxu0
        %v2084 = vadd.f32 %v1775, %v2083
        %v2085 = vpop.f32.mrb[0].mxu0
        %v2086 = vadd.f32 %v1777, %v2085
        %v2087 = vpop.f32.mrb[0].mxu0
        %v2088 = vadd.f32 %v1779, %v2087
        %2089 = vmatprep.mubr.bf16.mxu0 %v841
        %2090 = vmatmul.mubr.bf16.gmra.mrb[0].mxu0 %v839
        %v2091 = vpop.f32.mrb[0].mxu0
        %v2092 = vadd.f32 %v1783, %v2091
        %v2093 = vpop.f32.mrb[0].mxu0
        %v2094 = vadd.f32 %v1785, %v2093
        %v2095 = vpop.f32.mrb[0].mxu0
        %v2096 = vadd.f32 %v1787, %v2095
        %v2097 = vpop.f32.mrb[0].mxu0
        %v2098 = vadd.f32 %v1789, %v2097
        %2099 = vmatprep.mubr.bf16.mxu0 %v842
        %2100 = vmatmul.mubr.bf16.gmra.mrb[0].mxu0 %v840
        %v2101 = vpop.f32.mrb[0].mxu0
        %v2102 = vadd.f32 %v1793, %v2101
        %v2103 = vpop.f32.mrb[0].mxu0
        %v2104 = vadd.f32 %v1795, %v2103
        %v2105 = vpop.f32.mrb[0].mxu0
        %v2106 = vadd.f32 %v1797, %v2105
        %v2107 = vpop.f32.mrb[0].mxu0
        %v2108 = vadd.f32 %v1799, %v2107
        %2109 = vmatprep.mubr.bf16.mxu0 %v843
        %2110 = vmatmul.mubr.bf16.gmra.mrb[0].mxu0 %v841
        %v2111 = vpop.f32.mrb[0].mxu0
        %v2112 = vadd.f32 %v1803, %v2111
        %v2113 = vpop.f32.mrb[0].mxu0
        %v2114 = vadd.f32 %v1805, %v2113
        %v2115 = vpop.f32.mrb[0].mxu0
        %v2116 = vadd.f32 %v1807, %v2115
        %v2117 = vpop.f32.mrb[0].mxu0
        %v2118 = vadd.f32 %v1809, %v2117
        %2119 = vmatprep.mubr.bf16.mxu0 %v844
        %2120 = vmatmul.mubr.bf16.gmra.mrb[0].mxu0 %v842
        %v2121 = vpop.f32.mrb[0].mxu0
        %v2122 = vadd.f32 %v1813, %v2121
        %v2123 = vpop.f32.mrb[0].mxu0
        %v2124 = vadd.f32 %v1815, %v2123
        %v2125 = vpop.f32.mrb[0].mxu0
        %v2126 = vadd.f32 %v1817, %v2125
        %v2127 = vpop.f32.mrb[0].mxu0
        %v2128 = vadd.f32 %v1819, %v2127
        %2129 = vmatprep.mubr.bf16.mxu0 %v845
        %2130 = vmatmul.mubr.bf16.gmra.mrb[0].mxu0 %v843
        %v2131 = vpop.f32.mrb[0].mxu0
        %v2132 = vadd.f32 %v1823, %v2131
        %v2133 = vpop.f32.mrb[0].mxu0
        %v2134 = vadd.f32 %v1825, %v2133
        %v2135 = vpop.f32.mrb[0].mxu0
        %v2136 = vadd.f32 %v1827, %v2135
        %v2137 = vpop.f32.mrb[0].mxu0
        %v2138 = vadd.f32 %v1829, %v2137
        %2139 = vmatprep.mubr.bf16.mxu0 %v846
        %2140 = vmatmul.mubr.bf16.gmra.mrb[0].mxu0 %v844
        %v2141 = vpop.f32.mrb[0].mxu0
        %v2142 = vadd.f32 %v1833, %v2141
        %v2143 = vpop.f32.mrb[0].mxu0
        %v2144 = vadd.f32 %v1835, %v2143
        %v2145 = vpop.f32.mrb[0].mxu0
        %v2146 = vadd.f32 %v1837, %v2145
        %v2147 = vpop.f32.mrb[0].mxu0
        %v2148 = vadd.f32 %v1839, %v2147
        %2149 = vmatprep.mubr.bf16.mxu0 %v847
        %2150 = vmatmul.mubr.bf16.gmra.mrb[0].mxu0 %v845
        %v2151 = vpop.f32.mrb[0].mxu0
        %v2152 = vadd.f32 %v1843, %v2151
        %v2153 = vpop.f32.mrb[0].mxu0
        %v2154 = vadd.f32 %v1845, %v2153
        %v2155 = vpop.f32.mrb[0].mxu0
        %v2156 = vadd.f32 %v1847, %v2155
        %v2157 = vpop.f32.mrb[0].mxu0
        %v2158 = vadd.f32 %v1849, %v2157
        %2159 = vmatprep.mubr.bf16.mxu0 %v848
        %2160 = vmatmul.mubr.bf16.gmra.mrb[0].mxu0 %v846
        %v2161 = vpop.f32.mrb[0].mxu0
        %v2162 = vadd.f32 %v1853, %v2161
        %v2163 = vpop.f32.mrb[0].mxu0
        %v2164 = vadd.f32 %v1855, %v2163
        %v2165 = vpop.f32.mrb[0].mxu0
        %v2166 = vadd.f32 %v1857, %v2165
        %v2167 = vpop.f32.mrb[0].mxu0
        %v2168 = vadd.f32 %v1859, %v2167
        %2169 = vmatprep.mubr.bf16.mxu0 %v849
        %2170 = vmatmul.mubr.bf16.gmra.mrb[0].mxu0 %v847
        %v2171 = vpop.f32.mrb[0].mxu0
        %v2172 = vadd.f32 %v1863, %v2171
        %v2173 = vpop.f32.mrb[0].mxu0
        %v2174 = vadd.f32 %v1865, %v2173
        %v2175 = vpop.f32.mrb[0].mxu0
        %v2176 = vadd.f32 %v1867, %v2175
        %v2177 = vpop.f32.mrb[0].mxu0
        %v2178 = vadd.f32 %v1869, %v2177
        %2179 = vmatprep.mubr.bf16.mxu0 %v850
        %2180 = vmatmul.mubr.bf16.gmra.mrb[0].mxu0 %v848
        %v2181 = vpop.f32.mrb[0].mxu0
        %v2182 = vadd.f32 %v1873, %v2181
        %v2183 = vpop.f32.mrb[0].mxu0
        %v2184 = vadd.f32 %v1875, %v2183
        %v2185 = vpop.f32.mrb[0].mxu0
        %v2186 = vadd.f32 %v1877, %v2185
        %v2187 = vpop.f32.mrb[0].mxu0
        %v2188 = vadd.f32 %v1879, %v2187
        %2189 = vmatprep.mubr.bf16.mxu0 %v851
        %2190 = vmatmul.mubr.bf16.gmra.mrb[0].mxu0 %v849
        %v2191 = vpop.f32.mrb[0].mxu0
        %v2192 = vadd.f32 %v1883, %v2191
        %v2193 = vpop.f32.mrb[0].mxu0
        %v2194 = vadd.f32 %v1885, %v2193
        %v2195 = vpop.f32.mrb[0].mxu0
        %v2196 = vadd.f32 %v1887, %v2195
        %v2197 = vpop.f32.mrb[0].mxu0
        %v2198 = vadd.f32 %v1889, %v2197
        %2199 = vmatprep.mubr.bf16.mxu0 %v852
        %2200 = vmatmul.mubr.bf16.gmra.mrb[0].mxu0 %v850
        %v2201 = vpop.f32.mrb[0].mxu0
        %v2202 = vadd.f32 %v1893, %v2201
        %v2203 = vpop.f32.mrb[0].mxu0
        %v2204 = vadd.f32 %v1895, %v2203
        %v2205 = vpop.f32.mrb[0].mxu0
        %v2206 = vadd.f32 %v1897, %v2205
        %v2207 = vpop.f32.mrb[0].mxu0
        %v2208 = vadd.f32 %v1899, %v2207
        %2209 = vmatprep.mubr.bf16.mxu0 %v853
        %2210 = vmatmul.mubr.bf16.gmra.mrb[0].mxu0 %v851
        %v2211 = vpop.f32.mrb[0].mxu0
        %v2212 = vadd.f32 %v1903, %v2211
        %v2213 = vpop.f32.mrb[0].mxu0
        %v2214 = vadd.f32 %v1905, %v2213
        %v2215 = vpop.f32.mrb[0].mxu0
        %v2216 = vadd.f32 %v1907, %v2215
        %v2217 = vpop.f32.mrb[0].mxu0
        %v2218 = vadd.f32 %v1909, %v2217
        %2219 = vmatprep.mubr.bf16.mxu0 %v854
        %2220 = vmatmul.mubr.bf16.gmra.mrb[0].mxu0 %v852
        %v2221 = vpop.f32.mrb[0].mxu0
        %v2222 = vadd.f32 %v1913, %v2221
        %v2223 = vpop.f32.mrb[0].mxu0
        %v2224 = vadd.f32 %v1915, %v2223
        %v2225 = vpop.f32.mrb[0].mxu0
        %v2226 = vadd.f32 %v1917, %v2225
        %v2227 = vpop.f32.mrb[0].mxu0
        %v2228 = vadd.f32 %v1919, %v2227
        %2229 = vmatprep.mubr.bf16.mxu0 %v855
        %2230 = vmatmul.mubr.bf16.gmra.mrb[0].mxu0 %v853
        %v2231 = vpop.f32.mrb[0].mxu0
        %v2232 = vadd.f32 %v1923, %v2231
        %v2233 = vpop.f32.mrb[0].mxu0
        %v2234 = vadd.f32 %v1925, %v2233
        %v2235 = vpop.f32.mrb[0].mxu0
        %v2236 = vadd.f32 %v1927, %v2235
        %v2237 = vpop.f32.mrb[0].mxu0
        %v2238 = vadd.f32 %v1929, %v2237
        %2239 = vmatprep.mubr.bf16.mxu0 %v856
        %2240 = vmatmul.mubr.bf16.gmra.mrb[0].mxu0 %v854
        %v2241 = vpop.f32.mrb[0].mxu0
        %v2242 = vadd.f32 %v1933, %v2241
        %v2243 = vpop.f32.mrb[0].mxu0
        %v2244 = vadd.f32 %v1935, %v2243
        %v2245 = vpop.f32.mrb[0].mxu0
        %v2246 = vadd.f32 %v1937, %v2245
        %v2247 = vpop.f32.mrb[0].mxu0
        %v2248 = vadd.f32 %v1939, %v2247
        %2249 = vmatprep.mubr.bf16.mxu0 %v857
        %2250 = vmatmul.mubr.bf16.gmra.mrb[0].mxu0 %v855
        %v2251 = vpop.f32.mrb[0].mxu0
        %v2252 = vadd.f32 %v1943, %v2251
        %v2253 = vpop.f32.mrb[0].mxu0
        %v2254 = vadd.f32 %v1945, %v2253
        %v2255 = vpop.f32.mrb[0].mxu0
        %v2256 = vadd.f32 %v1947, %v2255
        %v2257 = vpop.f32.mrb[0].mxu0
        %v2258 = vadd.f32 %v1949, %v2257
        %2259 = vmatprep.mubr.bf16.mxu0 %v858
        %2260 = vmatmul.mubr.bf16.gmra.mrb[0].mxu0 %v856
        %v2261 = vpop.f32.mrb[0].mxu0
        %v2262 = vadd.f32 %v1953, %v2261
        %v2263 = vpop.f32.mrb[0].mxu0
        %v2264 = vadd.f32 %v1955, %v2263
        %v2265 = vpop.f32.mrb[0].mxu0
        %v2266 = vadd.f32 %v1957, %v2265
        %v2267 = vpop.f32.mrb[0].mxu0
        %v2268 = vadd.f32 %v1959, %v2267
        %2269 = vmatprep.mubr.bf16.mxu0 %v859
        %2270 = vmatmul.mubr.bf16.gmra.mrb[0].mxu0 %v857
        %v2271 = vpop.f32.mrb[0].mxu0
        %v2272 = vadd.f32 %v1963, %v2271
        %v2273 = vpop.f32.mrb[0].mxu0
        %v2274 = vadd.f32 %v1965, %v2273
        %v2275 = vpop.f32.mrb[0].mxu0
        %v2276 = vadd.f32 %v1967, %v2275
        %v2277 = vpop.f32.mrb[0].mxu0
        %v2278 = vadd.f32 %v1969, %v2277
        %2279 = vmatprep.mubr.bf16.mxu0 %v860
        %2280 = vmatmul.mubr.bf16.gmra.mrb[0].mxu0 %v858
        %v2281 = vpop.f32.mrb[0].mxu0
        %v2282 = vadd.f32 %v1973, %v2281
        %v2283 = vpop.f32.mrb[0].mxu0
        %v2284 = vadd.f32 %v1975, %v2283
        %v2285 = vpop.f32.mrb[0].mxu0
        %v2286 = vadd.f32 %v1977, %v2285
        %v2287 = vpop.f32.mrb[0].mxu0
        %v2288 = vadd.f32 %v1979, %v2287
        %2289 = vmatprep.mubr.bf16.mxu0 %v861
        %2290 = vmatmul.mubr.bf16.gmra.mrb[0].mxu0 %v859
        %v2291 = vpop.f32.mrb[0].mxu0
        %v2292 = vadd.f32 %v1983, %v2291
        %v2293 = vpop.f32.mrb[0].mxu0
        %v2294 = vadd.f32 %v1985, %v2293
        %v2295 = vpop.f32.mrb[0].mxu0
        %v2296 = vadd.f32 %v1987, %v2295
        %v2297 = vpop.f32.mrb[0].mxu0
        %v2298 = vadd.f32 %v1989, %v2297
        %2299 = vmatprep.mubr.bf16.mxu0 %v898
        %2300 = vmatmul.mubr.bf16.gmra.mrb[0].mxu0 %v860
        %v2301 = vpop.f32.mrb[0].mxu0
        %v2302 = vadd.f32 %v1993, %v2301
        %v2303 = vpop.f32.mrb[0].mxu0
        %v2304 = vadd.f32 %v1995, %v2303
        %v2305 = vpop.f32.mrb[0].mxu0
        %v2306 = vadd.f32 %v1997, %v2305
        %v2307 = vpop.f32.mrb[0].mxu0
        %v2308 = vadd.f32 %v1999, %v2307
        %2309 = vmatprep.mubr.bf16.mxu0 %v899
        %2310 = vmatmul.mubr.bf16.gmra.mrb[0].mxu0 %v861
        %v2311 = vpop.f32.mrb[0].mxu0
        %v2312 = vadd.f32 %v2003, %v2311
        %v2313 = vpop.f32.mrb[0].mxu0
        %v2314 = vadd.f32 %v2005, %v2313
        %v2315 = vpop.f32.mrb[0].mxu0
        %v2316 = vadd.f32 %v2007, %v2315
        %v2317 = vpop.f32.mrb[0].mxu0
        %v2318 = vadd.f32 %v2009, %v2317
        %2319 = vmatprep.mubr.bf16.mxu0 %v910
        %2320 = vmatmul.mubr.bf16.gmra.mrb[0].mxu0 %v898
        %v2321 = vpop.f32.mrb[0].mxu0
        %v2322 = vadd.f32 %v2013, %v2321
        %v2323 = vpop.f32.mrb[0].mxu0
        %v2324 = vadd.f32 %v2015, %v2323
        %v2325 = vpop.f32.mrb[0].mxu0
        %v2326 = vadd.f32 %v2017, %v2325
        %v2327 = vpop.f32.mrb[0].mxu0
        %v2328 = vadd.f32 %v2019, %v2327
        %2329 = vmatprep.mubr.bf16.mxu0 %v911
        %2330 = vmatmul.mubr.bf16.gmra.mrb[0].mxu0 %v899
        %v2331 = vpop.f32.mrb[0].mxu0
        %v2332 = vadd.f32 %v2023, %v2331
        %v2333 = vpop.f32.mrb[0].mxu0
        %v2334 = vadd.f32 %v2025, %v2333
        %v2335 = vpop.f32.mrb[0].mxu0
        %v2336 = vadd.f32 %v2027, %v2335
        %v2337 = vpop.f32.mrb[0].mxu0
        %v2338 = vadd.f32 %v2029, %v2337
        %2339 = vmatprep.mubr.bf16.mxu0 %v922
        %2340 = vmatmul.mubr.bf16.gmra.mrb[0].mxu0 %v910
        %v2341 = vpop.f32.mrb[0].mxu0
        %v2342 = vadd.f32 %v2033, %v2341
        %v2343 = vpop.f32.mrb[0].mxu0
        %v2344 = vpop.f32.mrb[0].mxu0
        %v2345 = vadd.f32 %v2036, %v2344
        %v2346 = vpop.f32.mrb[0].mxu0
        %2347 = vmatprep.mubr.bf16.mxu0 %v923
        %2348 = vmatmul.mubr.bf16.gmra.mrb[0].mxu0 %v911
        %v2349 = vpop.f32.mrb[0].mxu0
        %v2350 = vadd.f32 %v2041, %v2349
        %v2351 = vpop.f32.mrb[0].mxu0
        %v2352 = vpop.f32.mrb[0].mxu0
        %v2353 = vadd.f32 %v2044, %v2352
        %v2354 = vpop.f32.mrb[0].mxu0
        %2355 = vdwg.mxu0
        %2356 = vmatprep.subr.bf16.mxu0 %v1595
        %2357 = vmatpush1.bf16.msra.mxu0 %v1594
        %2358 = vmatprep.subr.bf16.mxu0 %v1598
        %2359 = vmatpush1.bf16.msra.mxu0 %v1597
        %2360 = vmatprep.subr.bf16.mxu0 %v1601
        %2361 = vmatpush1.bf16.msra.mxu0 %v1600
        %2362 = vmatprep.subr.bf16.mxu0 %v1604
        %2363 = vmatpush1.bf16.msra.mxu0 %v1603
        %2364 = vmatprep.subr.bf16.mxu0 %v1607
        %2365 = vmatpush1.bf16.msra.mxu0 %v1606
        %2366 = vmatprep.subr.bf16.mxu0 %v1610
        %2367 = vmatpush1.bf16.msra.mxu0 %v1609
        %2368 = vmatprep.subr.bf16.mxu0 %v1613
        %2369 = vmatpush1.bf16.msra.mxu0 %v1612
        %2370 = vmatprep.subr.bf16.mxu0 %v1616
        %2371 = vmatpush1.bf16.msra.mxu0 %v1615
        %2372 = vmatprep.subr.bf16.mxu0 0
        %2373 = vmatpush1.bf16.msra.mxu0 0
        %2374 = vmatprep.subr.bf16.mxu0 0
        %2375 = vmatpush1.bf16.msra.mxu0 0
        %2376 = vmatprep.subr.bf16.mxu0 0
        %2377 = vmatpush1.bf16.msra.mxu0 0
        %2378 = vmatprep.subr.bf16.mxu0 0
        %2379 = vmatpush1.bf16.msra.mxu0 0
        %2380 = vmatprep.subr.bf16.mxu0 0
        %2381 = vmatpush1.bf16.msra.mxu0 0
        %2382 = vmatprep.subr.bf16.mxu0 0
        %2383 = vmatpush1.bf16.msra.mxu0 0
        %2384 = vmatprep.subr.bf16.mxu0 0
        %2385 = vmatpush1.bf16.msra.mxu0 0
        %2386 = vmatprep.subr.bf16.mxu0 0
        %2387 = vmatpush1.bf16.msra.mxu0 0
        %2388 = vmatprep.mubr.bf16.mxu0 0
        %2389 = vmatmul.mubr.bf16.gmra.mrb[0].mxu0 %v842
        %v2390 = vpop.f32.mrb[0].mxu0
        %v2391 = vadd.f32 %v2082, %v2390
        %v2392 = vpop.f32.mrb[0].mxu0
        %v2393 = vadd.f32 %v2084, %v2392
        %v2394 = vpop.f32.mrb[0].mxu0
        %v2395 = vadd.f32 %v2086, %v2394
        %v2396 = vpop.f32.mrb[0].mxu0
        %v2397 = vadd.f32 %v2088, %v2396
        %2398 = vmatprep.mubr.bf16.mxu0 0
        %2399 = vmatmul.mubr.bf16.gmra.mrb[0].mxu0 %v843
        %v2400 = vpop.f32.mrb[0].mxu0
        %v2401 = vadd.f32 %v2092, %v2400
        %v2402 = vpop.f32.mrb[0].mxu0
        %v2403 = vadd.f32 %v2094, %v2402
        %v2404 = vpop.f32.mrb[0].mxu0
        %v2405 = vadd.f32 %v2096, %v2404
        %v2406 = vpop.f32.mrb[0].mxu0
        %v2407 = vadd.f32 %v2098, %v2406
        %2408 = vmatprep.mubr.bf16.mxu0 0
        %2409 = vmatmul.mubr.bf16.gmra.mrb[0].mxu0 %v844
        %v2410 = vpop.f32.mrb[0].mxu0
        %v2411 = vadd.f32 %v2102, %v2410
        %v2412 = vpop.f32.mrb[0].mxu0
        %v2413 = vadd.f32 %v2104, %v2412
        %v2414 = vpop.f32.mrb[0].mxu0
        %v2415 = vadd.f32 %v2106, %v2414
        %v2416 = vpop.f32.mrb[0].mxu0
        %v2417 = vadd.f32 %v2108, %v2416
        %2418 = vmatprep.mubr.bf16.mxu0 0
        %2419 = vmatmul.mubr.bf16.gmra.mrb[0].mxu0 %v845
        %v2420 = vpop.f32.mrb[0].mxu0
        %v2421 = vadd.f32 %v2112, %v2420
        %v2422 = vpop.f32.mrb[0].mxu0
        %v2423 = vadd.f32 %v2114, %v2422
        %v2424 = vpop.f32.mrb[0].mxu0
        %v2425 = vadd.f32 %v2116, %v2424
        %v2426 = vpop.f32.mrb[0].mxu0
        %v2427 = vadd.f32 %v2118, %v2426
        %2428 = vmatprep.mubr.bf16.mxu0 0
        %2429 = vmatmul.mubr.bf16.gmra.mrb[0].mxu0 %v846
        %v2430 = vpop.f32.mrb[0].mxu0
        %v2431 = vadd.f32 %v2122, %v2430
        %v2432 = vpop.f32.mrb[0].mxu0
        %v2433 = vadd.f32 %v2124, %v2432
        %v2434 = vpop.f32.mrb[0].mxu0
        %v2435 = vadd.f32 %v2126, %v2434
        %v2436 = vpop.f32.mrb[0].mxu0
        %v2437 = vadd.f32 %v2128, %v2436
        %2438 = vmatprep.mubr.bf16.mxu0 0
        %2439 = vmatmul.mubr.bf16.gmra.mrb[0].mxu0 %v847
        %v2440 = vpop.f32.mrb[0].mxu0
        %v2441 = vadd.f32 %v2132, %v2440
        %v2442 = vpop.f32.mrb[0].mxu0
        %v2443 = vadd.f32 %v2134, %v2442
        %v2444 = vpop.f32.mrb[0].mxu0
        %v2445 = vadd.f32 %v2136, %v2444
        %v2446 = vpop.f32.mrb[0].mxu0
        %v2447 = vadd.f32 %v2138, %v2446
        %2448 = vmatprep.mubr.bf16.mxu0 0
        %2449 = vmatmul.mubr.bf16.gmra.mrb[0].mxu0 %v848
        %v2450 = vpop.f32.mrb[0].mxu0
        %v2451 = vadd.f32 %v2142, %v2450
        %v2452 = vpop.f32.mrb[0].mxu0
        %v2453 = vadd.f32 %v2144, %v2452
        %v2454 = vpop.f32.mrb[0].mxu0
        %v2455 = vadd.f32 %v2146, %v2454
        %v2456 = vpop.f32.mrb[0].mxu0
        %v2457 = vadd.f32 %v2148, %v2456
        %2458 = vmatprep.mubr.bf16.mxu0 0
        %2459 = vmatmul.mubr.bf16.gmra.mrb[0].mxu0 %v849
        %v2460 = vpop.f32.mrb[0].mxu0
        %v2461 = vadd.f32 %v2152, %v2460
        %v2462 = vpop.f32.mrb[0].mxu0
        %v2463 = vadd.f32 %v2154, %v2462
        %v2464 = vpop.f32.mrb[0].mxu0
        %v2465 = vadd.f32 %v2156, %v2464
        %v2466 = vpop.f32.mrb[0].mxu0
        %v2467 = vadd.f32 %v2158, %v2466
        %2468 = vmatprep.mubr.bf16.mxu0 0
        %2469 = vmatmul.mubr.bf16.gmra.mrb[0].mxu0 %v850
        %v2470 = vpop.f32.mrb[0].mxu0
        %v2471 = vadd.f32 %v2162, %v2470
        %v2472 = vpop.f32.mrb[0].mxu0
        %v2473 = vadd.f32 %v2164, %v2472
        %v2474 = vpop.f32.mrb[0].mxu0
        %v2475 = vadd.f32 %v2166, %v2474
        %v2476 = vpop.f32.mrb[0].mxu0
        %v2477 = vadd.f32 %v2168, %v2476
        %2478 = vmatprep.mubr.bf16.mxu0 0
        %2479 = vmatmul.mubr.bf16.gmra.mrb[0].mxu0 %v851
        %v2480 = vpop.f32.mrb[0].mxu0
        %v2481 = vadd.f32 %v2172, %v2480
        %v2482 = vpop.f32.mrb[0].mxu0
        %v2483 = vadd.f32 %v2174, %v2482
        %v2484 = vpop.f32.mrb[0].mxu0
        %v2485 = vadd.f32 %v2176, %v2484
        %v2486 = vpop.f32.mrb[0].mxu0
        %v2487 = vadd.f32 %v2178, %v2486
        %2488 = vmatprep.mubr.bf16.mxu0 0
        %2489 = vmatmul.mubr.bf16.gmra.mrb[0].mxu0 %v852
        %v2490 = vpop.f32.mrb[0].mxu0
        %v2491 = vadd.f32 %v2182, %v2490
        %v2492 = vpop.f32.mrb[0].mxu0
        %v2493 = vadd.f32 %v2184, %v2492
        %v2494 = vpop.f32.mrb[0].mxu0
        %v2495 = vadd.f32 %v2186, %v2494
        %v2496 = vpop.f32.mrb[0].mxu0
        %v2497 = vadd.f32 %v2188, %v2496
        %2498 = vmatprep.mubr.bf16.mxu0 0
        %2499 = vmatmul.mubr.bf16.gmra.mrb[0].mxu0 %v853
        %v2500 = vpop.f32.mrb[0].mxu0
        %v2501 = vadd.f32 %v2192, %v2500
        %v2502 = vpop.f32.mrb[0].mxu0
        %v2503 = vadd.f32 %v2194, %v2502
        %v2504 = vpop.f32.mrb[0].mxu0
        %v2505 = vadd.f32 %v2196, %v2504
        %v2506 = vpop.f32.mrb[0].mxu0
        %v2507 = vadd.f32 %v2198, %v2506
        %2508 = vmatprep.mubr.bf16.mxu0 0
        %2509 = vmatmul.mubr.bf16.gmra.mrb[0].mxu0 %v854
        %v2510 = vpop.f32.mrb[0].mxu0
        %v2511 = vadd.f32 %v2202, %v2510
        %v2512 = vpop.f32.mrb[0].mxu0
        %v2513 = vadd.f32 %v2204, %v2512
        %v2514 = vpop.f32.mrb[0].mxu0
        %v2515 = vadd.f32 %v2206, %v2514
        %v2516 = vpop.f32.mrb[0].mxu0
        %v2517 = vadd.f32 %v2208, %v2516
        %2518 = vmatprep.mubr.bf16.mxu0 0
        %2519 = vmatmul.mubr.bf16.gmra.mrb[0].mxu0 %v855
        %v2520 = vpop.f32.mrb[0].mxu0
        %v2521 = vadd.f32 %v2212, %v2520
        %v2522 = vpop.f32.mrb[0].mxu0
        %v2523 = vadd.f32 %v2214, %v2522
        %v2524 = vpop.f32.mrb[0].mxu0
        %v2525 = vadd.f32 %v2216, %v2524
        %v2526 = vpop.f32.mrb[0].mxu0
        %v2527 = vadd.f32 %v2218, %v2526
        %2528 = vmatprep.mubr.bf16.mxu0 0
        %2529 = vmatmul.mubr.bf16.gmra.mrb[0].mxu0 %v856
        %v2530 = vpop.f32.mrb[0].mxu0
        %v2531 = vadd.f32 %v2222, %v2530
        %v2532 = vpop.f32.mrb[0].mxu0
        %v2533 = vadd.f32 %v2224, %v2532
        %v2534 = vpop.f32.mrb[0].mxu0
        %v2535 = vadd.f32 %v2226, %v2534
        %v2536 = vpop.f32.mrb[0].mxu0
        %v2537 = vadd.f32 %v2228, %v2536
        %2538 = vmatprep.mubr.bf16.mxu0 0
        %2539 = vmatmul.mubr.bf16.gmra.mrb[0].mxu0 %v857
        %v2540 = vpop.f32.mrb[0].mxu0
        %v2541 = vadd.f32 %v2232, %v2540
        %v2542 = vpop.f32.mrb[0].mxu0
        %v2543 = vadd.f32 %v2234, %v2542
        %v2544 = vpop.f32.mrb[0].mxu0
        %v2545 = vadd.f32 %v2236, %v2544
        %v2546 = vpop.f32.mrb[0].mxu0
        %v2547 = vadd.f32 %v2238, %v2546
        %2548 = vmatprep.mubr.bf16.mxu0 0
        %2549 = vmatmul.mubr.bf16.gmra.mrb[0].mxu0 %v858
        %v2550 = vpop.f32.mrb[0].mxu0
        %v2551 = vadd.f32 %v2242, %v2550
        %v2552 = vpop.f32.mrb[0].mxu0
        %v2553 = vadd.f32 %v2244, %v2552
        %v2554 = vpop.f32.mrb[0].mxu0
        %v2555 = vadd.f32 %v2246, %v2554
        %v2556 = vpop.f32.mrb[0].mxu0
        %v2557 = vadd.f32 %v2248, %v2556
        %2558 = vmatprep.mubr.bf16.mxu0 0
        %2559 = vmatmul.mubr.bf16.gmra.mrb[0].mxu0 %v859
        %v2560 = vpop.f32.mrb[0].mxu0
        %v2561 = vadd.f32 %v2252, %v2560
        %v2562 = vpop.f32.mrb[0].mxu0
        %v2563 = vadd.f32 %v2254, %v2562
        %v2564 = vpop.f32.mrb[0].mxu0
        %v2565 = vadd.f32 %v2256, %v2564
        %v2566 = vpop.f32.mrb[0].mxu0
        %v2567 = vadd.f32 %v2258, %v2566
        %2568 = vmatprep.mubr.bf16.mxu0 0
        %2569 = vmatmul.mubr.bf16.gmra.mrb[0].mxu0 %v860
        %v2570 = vpop.f32.mrb[0].mxu0
        %v2571 = vadd.f32 %v2262, %v2570
        %v2572 = vpop.f32.mrb[0].mxu0
        %v2573 = vadd.f32 %v2264, %v2572
        %v2574 = vpop.f32.mrb[0].mxu0
        %v2575 = vadd.f32 %v2266, %v2574
        %v2576 = vpop.f32.mrb[0].mxu0
        %v2577 = vadd.f32 %v2268, %v2576
        %2578 = vmatprep.mubr.bf16.mxu0 0
        %2579 = vmatmul.mubr.bf16.gmra.mrb[0].mxu0 %v861
        %v2580 = vpop.f32.mrb[0].mxu0
        %v2581 = vadd.f32 %v2272, %v2580
        %v2582 = vpop.f32.mrb[0].mxu0
        %v2583 = vadd.f32 %v2274, %v2582
        %v2584 = vpop.f32.mrb[0].mxu0
        %v2585 = vadd.f32 %v2276, %v2584
        %v2586 = vpop.f32.mrb[0].mxu0
        %v2587 = vadd.f32 %v2278, %v2586
        %2588 = vmatprep.mubr.bf16.mxu0 0
        %2589 = vmatmul.mubr.bf16.gmra.mrb[0].mxu0 %v898
        %v2590 = vpop.f32.mrb[0].mxu0
        %v2591 = vadd.f32 %v2282, %v2590
        %v2592 = vpop.f32.mrb[0].mxu0
        %v2593 = vadd.f32 %v2284, %v2592
        %v2594 = vpop.f32.mrb[0].mxu0
        %v2595 = vadd.f32 %v2286, %v2594
        %v2596 = vpop.f32.mrb[0].mxu0
        %v2597 = vadd.f32 %v2288, %v2596
        %2598 = vmatprep.mubr.bf16.mxu0 0
        %2599 = vmatmul.mubr.bf16.gmra.mrb[0].mxu0 %v899
        %v2600 = vpop.f32.mrb[0].mxu0
        %v2601 = vadd.f32 %v2292, %v2600
        %v2602 = vpop.f32.mrb[0].mxu0
        %v2603 = vadd.f32 %v2294, %v2602
        %v2604 = vpop.f32.mrb[0].mxu0
        %v2605 = vadd.f32 %v2296, %v2604
        %v2606 = vpop.f32.mrb[0].mxu0
        %v2607 = vadd.f32 %v2298, %v2606
        %2608 = vmatprep.mubr.bf16.mxu0 0
        %2609 = vmatmul.mubr.bf16.gmra.mrb[0].mxu0 %v910
        %v2610 = vpop.f32.mrb[0].mxu0
        %v2611 = vadd.f32 %v2302, %v2610
        %v2612 = vpop.f32.mrb[0].mxu0
        %v2613 = vadd.f32 %v2304, %v2612
        %v2614 = vpop.f32.mrb[0].mxu0
        %v2615 = vadd.f32 %v2306, %v2614
        %v2616 = vpop.f32.mrb[0].mxu0
        %v2617 = vadd.f32 %v2308, %v2616
        %2618 = vmatprep.mubr.bf16.mxu0 0
        %2619 = vmatmul.mubr.bf16.gmra.mrb[0].mxu0 %v911
        %v2620 = vpop.f32.mrb[0].mxu0
        %v2621 = vadd.f32 %v2312, %v2620
        %v2622 = vpop.f32.mrb[0].mxu0
        %v2623 = vadd.f32 %v2314, %v2622
        %v2624 = vpop.f32.mrb[0].mxu0
        %v2625 = vadd.f32 %v2316, %v2624
        %v2626 = vpop.f32.mrb[0].mxu0
        %v2627 = vadd.f32 %v2318, %v2626
        %2628 = vmatprep.mubr.bf16.mxu0 0
        %2629 = vmatmul.mubr.bf16.gmra.mrb[0].mxu0 %v922
        %v2630 = vpop.f32.mrb[0].mxu0
        %v2631 = vadd.f32 %v2322, %v2630
        %v2632 = vpop.f32.mrb[0].mxu0
        %v2633 = vadd.f32 %v2324, %v2632
        %v2634 = vpop.f32.mrb[0].mxu0
        %v2635 = vadd.f32 %v2326, %v2634
        %v2636 = vpop.f32.mrb[0].mxu0
        %v2637 = vadd.f32 %v2328, %v2636
        %2638 = vmatprep.mubr.bf16.mxu0 0
        %2639 = vmatmul.mubr.bf16.gmra.mrb[0].mxu0 %v923
        %v2640 = vpop.f32.mrb[0].mxu0
        %v2641 = vadd.f32 %v2332, %v2640
        %v2642 = vpop.f32.mrb[0].mxu0
        %v2643 = vadd.f32 %v2334, %v2642
        %v2644 = vpop.f32.mrb[0].mxu0
        %v2645 = vadd.f32 %v2336, %v2644
        %v2646 = vpop.f32.mrb[0].mxu0
        %v2647 = vadd.f32 %v2338, %v2646
        %2648 = vmatprep.mubr.bf16.mxu0 0
        %2649 = vmatmul.mubr.bf16.gmra.mrb[0].mxu0 %v934
        %v2650 = vpop.f32.mrb[0].mxu0
        %v2651 = vadd.f32 %v2342, %v2650
        %v2652 = vpop.f32.mrb[0].mxu0
        %v2653 = vpop.f32.mrb[0].mxu0
        %v2654 = vadd.f32 %v2345, %v2653
        %v2655 = vpop.f32.mrb[0].mxu0
        %2656 = vmatprep.mubr.bf16.mxu0 0
        %2657 = vmatmul.mubr.bf16.gmra.mrb[0].mxu0 %v935
        %v2658 = vpop.f32.mrb[0].mxu0
        %v2659 = vadd.f32 %v2350, %v2658
        %v2660 = vpop.f32.mrb[0].mxu0
        %v2661 = vpop.f32.mrb[0].mxu0
        %v2662 = vadd.f32 %v2353, %v2661
        %v2663 = vpop.f32.mrb[0].mxu0
        %2664 = vdwg.mxu0
        %2665 = vmatprep.subr.bf16.mxu0 0
        %2666 = vmatpush1.bf16.msra.mxu0 %v1500
        %2667 = vmatprep.subr.bf16.mxu0 0
        %2668 = vmatpush1.bf16.msra.mxu0 %v1503
        %2669 = vmatprep.subr.bf16.mxu0 0
        %2670 = vmatpush1.bf16.msra.mxu0 %v1506
        %2671 = vmatprep.subr.bf16.mxu0 0
        %2672 = vmatpush1.bf16.msra.mxu0 %v1509
        %2673 = vmatprep.subr.bf16.mxu0 0
        %2674 = vmatpush1.bf16.msra.mxu0 %v1512
        %2675 = vmatprep.subr.bf16.mxu0 0
        %2676 = vmatpush1.bf16.msra.mxu0 %v1515
        %2677 = vmatprep.subr.bf16.mxu0 0
        %2678 = vmatpush1.bf16.msra.mxu0 %v1518
        %2679 = vmatprep.subr.bf16.mxu0 0
        %2680 = vmatpush1.bf16.msra.mxu0 %v1521
        %2681 = vmatprep.subr.bf16.mxu0 0
        %2682 = vmatpush1.bf16.msra.mxu0 %v1524
        %2683 = vmatprep.subr.bf16.mxu0 0
        %2684 = vmatpush1.bf16.msra.mxu0 %v1527
        %2685 = vmatprep.subr.bf16.mxu0 0
        %2686 = vmatpush1.bf16.msra.mxu0 %v1530
        %2687 = vmatprep.subr.bf16.mxu0 0
        %2688 = vmatpush1.bf16.msra.mxu0 %v1533
        %2689 = vmatprep.subr.bf16.mxu0 0
        %2690 = vmatpush1.bf16.msra.mxu0 %v1536
        %2691 = vmatprep.subr.bf16.mxu0 0
        %2692 = vmatpush1.bf16.msra.mxu0 %v1539
        %2693 = vmatprep.subr.bf16.mxu0 0
        %2694 = vmatpush1.bf16.msra.mxu0 %v1542
        %2695 = vmatprep.subr.bf16.mxu0 0
        %2696 = vmatpush1.bf16.msra.mxu0 %v1545
        %2697 = vmatprep.mubr.bf16.mxu0 %v836
        %2698 = vmatmul.mubr.bf16.gmra.mrb[0].mxu0 %v834
        %v2699 = vpop.f32.mrb[0].mxu0
        %v2700 = vadd.f32 0.0, %v2699
        %v2701 = vpop.f32.mrb[0].mxu0
        %v2702 = vpop.f32.mrb[0].mxu0
        %v2703 = vadd.f32 0.0, %v2702
        %v2704 = vpop.f32.mrb[0].mxu0
        %2705 = vmatprep.mubr.bf16.mxu0 %v837
        %2706 = vmatmul.mubr.bf16.gmra.mrb[0].mxu0 %v835
        %v2707 = vpop.f32.mrb[0].mxu0
        %v2708 = vadd.f32 0.0, %v2707
        %v2709 = vpop.f32.mrb[0].mxu0
        %v2710 = vpop.f32.mrb[0].mxu0
        %v2711 = vadd.f32 0.0, %v2710
        %v2712 = vpop.f32.mrb[0].mxu0
        %2713 = vmatprep.mubr.bf16.mxu0 %v838
        %2714 = vmatmul.mubr.bf16.gmra.mrb[0].mxu0 %v836
        %v2715 = vpop.f32.mrb[0].mxu0
        %v2716 = vadd.f32 0.0, %v2715
        %v2717 = vpop.f32.mrb[0].mxu0
        %v2718 = vpop.f32.mrb[0].mxu0
        %v2719 = vadd.f32 0.0, %v2718
        %v2720 = vpop.f32.mrb[0].mxu0
        %2721 = vmatprep.mubr.bf16.mxu0 %v839
        %2722 = vmatmul.mubr.bf16.gmra.mrb[0].mxu0 %v837
        %v2723 = vpop.f32.mrb[0].mxu0
        %v2724 = vadd.f32 0.0, %v2723
        %v2725 = vpop.f32.mrb[0].mxu0
        %v2726 = vpop.f32.mrb[0].mxu0
        %v2727 = vadd.f32 0.0, %v2726
        %v2728 = vpop.f32.mrb[0].mxu0
        %2729 = vmatprep.mubr.bf16.mxu0 %v840
        %2730 = vmatmul.mubr.bf16.gmra.mrb[0].mxu0 %v838
        %v2731 = vpop.f32.mrb[0].mxu0
        %v2732 = vadd.f32 0.0, %v2731
        %v2733 = vpop.f32.mrb[0].mxu0
        %v2734 = vpop.f32.mrb[0].mxu0
        %v2735 = vadd.f32 0.0, %v2734
        %v2736 = vpop.f32.mrb[0].mxu0
        %2737 = vmatprep.mubr.bf16.mxu0 %v841
        %2738 = vmatmul.mubr.bf16.gmra.mrb[0].mxu0 %v839
        %v2739 = vpop.f32.mrb[0].mxu0
        %v2740 = vadd.f32 0.0, %v2739
        %v2741 = vpop.f32.mrb[0].mxu0
        %v2742 = vpop.f32.mrb[0].mxu0
        %v2743 = vadd.f32 0.0, %v2742
        %v2744 = vpop.f32.mrb[0].mxu0
        %2745 = vmatprep.mubr.bf16.mxu0 %v842
        %2746 = vmatmul.mubr.bf16.gmra.mrb[0].mxu0 %v840
        %v2747 = vpop.f32.mrb[0].mxu0
        %v2748 = vadd.f32 0.0, %v2747
        %v2749 = vpop.f32.mrb[0].mxu0
        %v2750 = vpop.f32.mrb[0].mxu0
        %v2751 = vadd.f32 0.0, %v2750
        %v2752 = vpop.f32.mrb[0].mxu0
        %2753 = vmatprep.mubr.bf16.mxu0 %v843
        %2754 = vmatmul.mubr.bf16.gmra.mrb[0].mxu0 %v841
        %v2755 = vpop.f32.mrb[0].mxu0
        %v2756 = vadd.f32 0.0, %v2755
        %v2757 = vpop.f32.mrb[0].mxu0
        %v2758 = vpop.f32.mrb[0].mxu0
        %v2759 = vadd.f32 0.0, %v2758
        %v2760 = vpop.f32.mrb[0].mxu0
        %2761 = vmatprep.mubr.bf16.mxu0 %v844
        %2762 = vmatmul.mubr.bf16.gmra.mrb[0].mxu0 %v842
        %v2763 = vpop.f32.mrb[0].mxu0
        %v2764 = vadd.f32 0.0, %v2763
        %v2765 = vpop.f32.mrb[0].mxu0
        %v2766 = vpop.f32.mrb[0].mxu0
        %v2767 = vadd.f32 0.0, %v2766
        %v2768 = vpop.f32.mrb[0].mxu0
        %2769 = vmatprep.mubr.bf16.mxu0 %v845
        %2770 = vmatmul.mubr.bf16.gmra.mrb[0].mxu0 %v843
        %v2771 = vpop.f32.mrb[0].mxu0
        %v2772 = vadd.f32 0.0, %v2771
        %v2773 = vpop.f32.mrb[0].mxu0
        %v2774 = vpop.f32.mrb[0].mxu0
        %v2775 = vadd.f32 0.0, %v2774
        %v2776 = vpop.f32.mrb[0].mxu0
        %2777 = vmatprep.mubr.bf16.mxu0 %v846
        %2778 = vmatmul.mubr.bf16.gmra.mrb[0].mxu0 %v844
        %v2779 = vpop.f32.mrb[0].mxu0
        %v2780 = vadd.f32 0.0, %v2779
        %v2781 = vpop.f32.mrb[0].mxu0
        %v2782 = vpop.f32.mrb[0].mxu0
        %v2783 = vadd.f32 0.0, %v2782
        %v2784 = vpop.f32.mrb[0].mxu0
        %2785 = vmatprep.mubr.bf16.mxu0 %v847
        %2786 = vmatmul.mubr.bf16.gmra.mrb[0].mxu0 %v845
        %v2787 = vpop.f32.mrb[0].mxu0
        %v2788 = vadd.f32 0.0, %v2787
        %v2789 = vpop.f32.mrb[0].mxu0
        %v2790 = vpop.f32.mrb[0].mxu0
        %v2791 = vadd.f32 0.0, %v2790
        %v2792 = vpop.f32.mrb[0].mxu0
        %2793 = vmatprep.mubr.bf16.mxu0 %v848
        %2794 = vmatmul.mubr.bf16.gmra.mrb[0].mxu0 %v846
        %v2795 = vpop.f32.mrb[0].mxu0
        %v2796 = vadd.f32 0.0, %v2795
        %v2797 = vpop.f32.mrb[0].mxu0
        %v2798 = vpop.f32.mrb[0].mxu0
        %v2799 = vadd.f32 0.0, %v2798
        %v2800 = vpop.f32.mrb[0].mxu0
        %2801 = vmatprep.mubr.bf16.mxu0 %v849
        %2802 = vmatmul.mubr.bf16.gmra.mrb[0].mxu0 %v847
        %v2803 = vpop.f32.mrb[0].mxu0
        %v2804 = vadd.f32 0.0, %v2803
        %v2805 = vpop.f32.mrb[0].mxu0
        %v2806 = vpop.f32.mrb[0].mxu0
        %v2807 = vadd.f32 0.0, %v2806
        %v2808 = vpop.f32.mrb[0].mxu0
        %2809 = vmatprep.mubr.bf16.mxu0 %v850
        %2810 = vmatmul.mubr.bf16.gmra.mrb[0].mxu0 %v848
        %v2811 = vpop.f32.mrb[0].mxu0
        %v2812 = vadd.f32 0.0, %v2811
        %v2813 = vpop.f32.mrb[0].mxu0
        %v2814 = vpop.f32.mrb[0].mxu0
        %v2815 = vadd.f32 0.0, %v2814
        %v2816 = vpop.f32.mrb[0].mxu0
        %2817 = vmatprep.mubr.bf16.mxu0 %v851
        %2818 = vmatmul.mubr.bf16.gmra.mrb[0].mxu0 %v849
        %v2819 = vpop.f32.mrb[0].mxu0
        %v2820 = vadd.f32 0.0, %v2819
        %v2821 = vpop.f32.mrb[0].mxu0
        %v2822 = vpop.f32.mrb[0].mxu0
        %v2823 = vadd.f32 0.0, %v2822
        %v2824 = vpop.f32.mrb[0].mxu0
        %2825 = vmatprep.mubr.bf16.mxu0 %v852
        %2826 = vmatmul.mubr.bf16.gmra.mrb[0].mxu0 %v850
        %v2827 = vpop.f32.mrb[0].mxu0
        %v2828 = vadd.f32 0.0, %v2827
        %v2829 = vpop.f32.mrb[0].mxu0
        %v2830 = vpop.f32.mrb[0].mxu0
        %v2831 = vadd.f32 0.0, %v2830
        %v2832 = vpop.f32.mrb[0].mxu0
        %2833 = vmatprep.mubr.bf16.mxu0 %v853
        %2834 = vmatmul.mubr.bf16.gmra.mrb[0].mxu0 %v851
        %v2835 = vpop.f32.mrb[0].mxu0
        %v2836 = vadd.f32 0.0, %v2835
        %v2837 = vpop.f32.mrb[0].mxu0
        %v2838 = vpop.f32.mrb[0].mxu0
        %v2839 = vadd.f32 0.0, %v2838
        %v2840 = vpop.f32.mrb[0].mxu0
        %2841 = vmatprep.mubr.bf16.mxu0 %v854
        %2842 = vmatmul.mubr.bf16.gmra.mrb[0].mxu0 %v852
        %v2843 = vpop.f32.mrb[0].mxu0
        %v2844 = vadd.f32 0.0, %v2843
        %v2845 = vpop.f32.mrb[0].mxu0
        %v2846 = vpop.f32.mrb[0].mxu0
        %v2847 = vadd.f32 0.0, %v2846
        %v2848 = vpop.f32.mrb[0].mxu0
        %2849 = vmatprep.mubr.bf16.mxu0 %v855
        %2850 = vmatmul.mubr.bf16.gmra.mrb[0].mxu0 %v853
        %v2851 = vpop.f32.mrb[0].mxu0
        %v2852 = vadd.f32 0.0, %v2851
        %v2853 = vpop.f32.mrb[0].mxu0
        %v2854 = vpop.f32.mrb[0].mxu0
        %v2855 = vadd.f32 0.0, %v2854
        %v2856 = vpop.f32.mrb[0].mxu0
        %2857 = vmatprep.mubr.bf16.mxu0 %v856
        %2858 = vmatmul.mubr.bf16.gmra.mrb[0].mxu0 %v854
        %v2859 = vpop.f32.mrb[0].mxu0
        %v2860 = vadd.f32 0.0, %v2859
        %v2861 = vpop.f32.mrb[0].mxu0
        %v2862 = vpop.f32.mrb[0].mxu0
        %v2863 = vadd.f32 0.0, %v2862
        %v2864 = vpop.f32.mrb[0].mxu0
        %2865 = vmatprep.mubr.bf16.mxu0 %v857
        %2866 = vmatmul.mubr.bf16.gmra.mrb[0].mxu0 %v855
        %v2867 = vpop.f32.mrb[0].mxu0
        %v2868 = vadd.f32 0.0, %v2867
        %v2869 = vpop.f32.mrb[0].mxu0
        %v2870 = vpop.f32.mrb[0].mxu0
        %v2871 = vadd.f32 0.0, %v2870
        %v2872 = vpop.f32.mrb[0].mxu0
        %2873 = vmatprep.mubr.bf16.mxu0 %v858
        %2874 = vmatmul.mubr.bf16.gmra.mrb[0].mxu0 %v856
        %v2875 = vpop.f32.mrb[0].mxu0
        %v2876 = vadd.f32 0.0, %v2875
        %v2877 = vpop.f32.mrb[0].mxu0
        %v2878 = vpop.f32.mrb[0].mxu0
        %v2879 = vadd.f32 0.0, %v2878
        %v2880 = vpop.f32.mrb[0].mxu0
        %2881 = vmatprep.mubr.bf16.mxu0 %v859
        %2882 = vmatmul.mubr.bf16.gmra.mrb[0].mxu0 %v857
        %v2883 = vpop.f32.mrb[0].mxu0
        %v2884 = vadd.f32 0.0, %v2883
        %v2885 = vpop.f32.mrb[0].mxu0
        %v2886 = vpop.f32.mrb[0].mxu0
        %v2887 = vadd.f32 0.0, %v2886
        %v2888 = vpop.f32.mrb[0].mxu0
        %2889 = vmatprep.mubr.bf16.mxu0 %v860
        %2890 = vmatmul.mubr.bf16.gmra.mrb[0].mxu0 %v858
        %v2891 = vpop.f32.mrb[0].mxu0
        %v2892 = vpop.f32.mrb[0].mxu0
        %v2893 = vpop.f32.mrb[0].mxu0
        %v2894 = vpop.f32.mrb[0].mxu0
        %2895 = vmatprep.mubr.bf16.mxu0 %v861
        %2896 = vmatmul.mubr.bf16.gmra.mrb[0].mxu0 %v859
        %v2897 = vpop.f32.mrb[0].mxu0
        %v2898 = vpop.f32.mrb[0].mxu0
        %v2899 = vpop.f32.mrb[0].mxu0
        %v2900 = vpop.f32.mrb[0].mxu0
        %2901 = vmatprep.mubr.bf16.mxu0 %v898
        %2902 = vmatmul.mubr.bf16.gmra.mrb[0].mxu0 %v860
        %v2903 = vpop.f32.mrb[0].mxu0
        %v2904 = vpop.f32.mrb[0].mxu0
        %v2905 = vpop.f32.mrb[0].mxu0
        %v2906 = vpop.f32.mrb[0].mxu0
        %2907 = vmatprep.mubr.bf16.mxu0 %v899
        %2908 = vmatmul.mubr.bf16.gmra.mrb[0].mxu0 %v861
        %v2909 = vpop.f32.mrb[0].mxu0
        %v2910 = vpop.f32.mrb[0].mxu0
        %v2911 = vpop.f32.mrb[0].mxu0
        %v2912 = vpop.f32.mrb[0].mxu0
        %2913 = vdwg.mxu0
        %2914 = vmatprep.subr.bf16.mxu0 0
        %2915 = vmatpush1.bf16.msra.mxu0 %v1548
        %2916 = vmatprep.subr.bf16.mxu0 0
        %2917 = vmatpush1.bf16.msra.mxu0 %v1551
        %2918 = vmatprep.subr.bf16.mxu0 0
        %2919 = vmatpush1.bf16.msra.mxu0 %v1554
        %2920 = vmatprep.subr.bf16.mxu0 0
        %2921 = vmatpush1.bf16.msra.mxu0 %v1557
        %2922 = vmatprep.subr.bf16.mxu0 0
        %2923 = vmatpush1.bf16.msra.mxu0 %v1560
        %2924 = vmatprep.subr.bf16.mxu0 0
        %2925 = vmatpush1.bf16.msra.mxu0 %v1563
        %2926 = vmatprep.subr.bf16.mxu0 0
        %2927 = vmatpush1.bf16.msra.mxu0 %v1566
        %2928 = vmatprep.subr.bf16.mxu0 0
        %2929 = vmatpush1.bf16.msra.mxu0 %v1569
        %2930 = vmatprep.subr.bf16.mxu0 0
        %2931 = vmatpush1.bf16.msra.mxu0 %v1572
        %2932 = vmatprep.subr.bf16.mxu0 0
        %2933 = vmatpush1.bf16.msra.mxu0 %v1575
        %2934 = vmatprep.subr.bf16.mxu0 0
        %2935 = vmatpush1.bf16.msra.mxu0 %v1578
        %2936 = vmatprep.subr.bf16.mxu0 0
        %2937 = vmatpush1.bf16.msra.mxu0 %v1581
        %2938 = vmatprep.subr.bf16.mxu0 0
        %2939 = vmatpush1.bf16.msra.mxu0 %v1584
        %2940 = vmatprep.subr.bf16.mxu0 0
        %2941 = vmatpush1.bf16.msra.mxu0 %v1587
        %2942 = vmatprep.subr.bf16.mxu0 0
        %2943 = vmatpush1.bf16.msra.mxu0 %v1590
        %2944 = vmatprep.subr.bf16.mxu0 0
        %2945 = vmatpush1.bf16.msra.mxu0 %v1593
        %2946 = vmatprep.mubr.bf16.mxu0 %v840
        %2947 = vmatmul.mubr.bf16.gmra.mrb[0].mxu0 %v838
        %v2948 = vpop.f32.mrb[0].mxu0
        %v2949 = vadd.f32 %v2700, %v2948
        %v2950 = vpop.f32.mrb[0].mxu0
        %v2951 = vpop.f32.mrb[0].mxu0
        %v2952 = vadd.f32 %v2703, %v2951
        %v2953 = vpop.f32.mrb[0].mxu0
        %2954 = vmatprep.mubr.bf16.mxu0 %v841
        %2955 = vmatmul.mubr.bf16.gmra.mrb[0].mxu0 %v839
        %v2956 = vpop.f32.mrb[0].mxu0
        %v2957 = vadd.f32 %v2708, %v2956
        %v2958 = vpop.f32.mrb[0].mxu0
        %v2959 = vpop.f32.mrb[0].mxu0
        %v2960 = vadd.f32 %v2711, %v2959
        %v2961 = vpop.f32.mrb[0].mxu0
        %2962 = vmatprep.mubr.bf16.mxu0 %v842
        %2963 = vmatmul.mubr.bf16.gmra.mrb[0].mxu0 %v840
        %v2964 = vpop.f32.mrb[0].mxu0
        %v2965 = vadd.f32 %v2716, %v2964
        %v2966 = vpop.f32.mrb[0].mxu0
        %v2967 = vpop.f32.mrb[0].mxu0
        %v2968 = vadd.f32 %v2719, %v2967
        %v2969 = vpop.f32.mrb[0].mxu0
        %2970 = vmatprep.mubr.bf16.mxu0 %v843
        %2971 = vmatmul.mubr.bf16.gmra.mrb[0].mxu0 %v841
        %v2972 = vpop.f32.mrb[0].mxu0
        %v2973 = vadd.f32 %v2724, %v2972
        %v2974 = vpop.f32.mrb[0].mxu0
        %v2975 = vpop.f32.mrb[0].mxu0
        %v2976 = vadd.f32 %v2727, %v2975
        %v2977 = vpop.f32.mrb[0].mxu0
        %2978 = vmatprep.mubr.bf16.mxu0 %v844
        %2979 = vmatmul.mubr.bf16.gmra.mrb[0].mxu0 %v842
        %v2980 = vpop.f32.mrb[0].mxu0
        %v2981 = vadd.f32 %v2732, %v2980
        %v2982 = vpop.f32.mrb[0].mxu0
        %v2983 = vpop.f32.mrb[0].mxu0
        %v2984 = vadd.f32 %v2735, %v2983
        %v2985 = vpop.f32.mrb[0].mxu0
        %2986 = vmatprep.mubr.bf16.mxu0 %v845
        %2987 = vmatmul.mubr.bf16.gmra.mrb[0].mxu0 %v843
        %v2988 = vpop.f32.mrb[0].mxu0
        %v2989 = vadd.f32 %v2740, %v2988
        %v2990 = vpop.f32.mrb[0].mxu0
        %v2991 = vpop.f32.mrb[0].mxu0
        %v2992 = vadd.f32 %v2743, %v2991
        %v2993 = vpop.f32.mrb[0].mxu0
        %2994 = vmatprep.mubr.bf16.mxu0 %v846
        %2995 = vmatmul.mubr.bf16.gmra.mrb[0].mxu0 %v844
        %v2996 = vpop.f32.mrb[0].mxu0
        %v2997 = vadd.f32 %v2748, %v2996
        %v2998 = vpop.f32.mrb[0].mxu0
        %v2999 = vpop.f32.mrb[0].mxu0
        %v3000 = vadd.f32 %v2751, %v2999
        %v3001 = vpop.f32.mrb[0].mxu0
        %3002 = vmatprep.mubr.bf16.mxu0 %v847
        %3003 = vmatmul.mubr.bf16.gmra.mrb[0].mxu0 %v845
        %v3004 = vpop.f32.mrb[0].mxu0
        %v3005 = vadd.f32 %v2756, %v3004
        %v3006 = vpop.f32.mrb[0].mxu0
        %v3007 = vpop.f32.mrb[0].mxu0
        %v3008 = vadd.f32 %v2759, %v3007
        %v3009 = vpop.f32.mrb[0].mxu0
        %3010 = vmatprep.mubr.bf16.mxu0 %v848
        %3011 = vmatmul.mubr.bf16.gmra.mrb[0].mxu0 %v846
        %v3012 = vpop.f32.mrb[0].mxu0
        %v3013 = vadd.f32 %v2764, %v3012
        %v3014 = vpop.f32.mrb[0].mxu0
        %v3015 = vpop.f32.mrb[0].mxu0
        %v3016 = vadd.f32 %v2767, %v3015
        %v3017 = vpop.f32.mrb[0].mxu0
        %3018 = vmatprep.mubr.bf16.mxu0 %v849
        %3019 = vmatmul.mubr.bf16.gmra.mrb[0].mxu0 %v847
        %v3020 = vpop.f32.mrb[0].mxu0
        %v3021 = vadd.f32 %v2772, %v3020
        %v3022 = vpop.f32.mrb[0].mxu0
        %v3023 = vpop.f32.mrb[0].mxu0
        %v3024 = vadd.f32 %v2775, %v3023
        %v3025 = vpop.f32.mrb[0].mxu0
        %3026 = vmatprep.mubr.bf16.mxu0 %v850
        %3027 = vmatmul.mubr.bf16.gmra.mrb[0].mxu0 %v848
        %v3028 = vpop.f32.mrb[0].mxu0
        %v3029 = vadd.f32 %v2780, %v3028
        %v3030 = vpop.f32.mrb[0].mxu0
        %v3031 = vpop.f32.mrb[0].mxu0
        %v3032 = vadd.f32 %v2783, %v3031
        %v3033 = vpop.f32.mrb[0].mxu0
        %3034 = vmatprep.mubr.bf16.mxu0 %v851
        %3035 = vmatmul.mubr.bf16.gmra.mrb[0].mxu0 %v849
        %v3036 = vpop.f32.mrb[0].mxu0
        %v3037 = vadd.f32 %v2788, %v3036
        %v3038 = vpop.f32.mrb[0].mxu0
        %v3039 = vpop.f32.mrb[0].mxu0
        %v3040 = vadd.f32 %v2791, %v3039
        %v3041 = vpop.f32.mrb[0].mxu0
        %3042 = vmatprep.mubr.bf16.mxu0 %v852
        %3043 = vmatmul.mubr.bf16.gmra.mrb[0].mxu0 %v850
        %v3044 = vpop.f32.mrb[0].mxu0
        %v3045 = vadd.f32 %v2796, %v3044
        %v3046 = vpop.f32.mrb[0].mxu0
        %v3047 = vpop.f32.mrb[0].mxu0
        %v3048 = vadd.f32 %v2799, %v3047
        %v3049 = vpop.f32.mrb[0].mxu0
        %3050 = vmatprep.mubr.bf16.mxu0 %v853
        %3051 = vmatmul.mubr.bf16.gmra.mrb[0].mxu0 %v851
        %v3052 = vpop.f32.mrb[0].mxu0
        %v3053 = vadd.f32 %v2804, %v3052
        %v3054 = vpop.f32.mrb[0].mxu0
        %v3055 = vpop.f32.mrb[0].mxu0
        %v3056 = vadd.f32 %v2807, %v3055
        %v3057 = vpop.f32.mrb[0].mxu0
        %3058 = vmatprep.mubr.bf16.mxu0 %v854
        %3059 = vmatmul.mubr.bf16.gmra.mrb[0].mxu0 %v852
        %v3060 = vpop.f32.mrb[0].mxu0
        %v3061 = vadd.f32 %v2812, %v3060
        %v3062 = vpop.f32.mrb[0].mxu0
        %v3063 = vpop.f32.mrb[0].mxu0
        %v3064 = vadd.f32 %v2815, %v3063
        %v3065 = vpop.f32.mrb[0].mxu0
        %3066 = vmatprep.mubr.bf16.mxu0 %v855
        %3067 = vmatmul.mubr.bf16.gmra.mrb[0].mxu0 %v853
        %v3068 = vpop.f32.mrb[0].mxu0
        %v3069 = vadd.f32 %v2820, %v3068
        %v3070 = vpop.f32.mrb[0].mxu0
        %v3071 = vpop.f32.mrb[0].mxu0
        %v3072 = vadd.f32 %v2823, %v3071
        %v3073 = vpop.f32.mrb[0].mxu0
        %3074 = vmatprep.mubr.bf16.mxu0 %v856
        %3075 = vmatmul.mubr.bf16.gmra.mrb[0].mxu0 %v854
        %v3076 = vpop.f32.mrb[0].mxu0
        %v3077 = vadd.f32 %v2828, %v3076
        %v3078 = vpop.f32.mrb[0].mxu0
        %v3079 = vpop.f32.mrb[0].mxu0
        %v3080 = vadd.f32 %v2831, %v3079
        %v3081 = vpop.f32.mrb[0].mxu0
        %3082 = vmatprep.mubr.bf16.mxu0 %v857
        %3083 = vmatmul.mubr.bf16.gmra.mrb[0].mxu0 %v855
        %v3084 = vpop.f32.mrb[0].mxu0
        %v3085 = vadd.f32 %v2836, %v3084
        %v3086 = vpop.f32.mrb[0].mxu0
        %v3087 = vpop.f32.mrb[0].mxu0
        %v3088 = vadd.f32 %v2839, %v3087
        %v3089 = vpop.f32.mrb[0].mxu0
        %3090 = vmatprep.mubr.bf16.mxu0 %v858
        %3091 = vmatmul.mubr.bf16.gmra.mrb[0].mxu0 %v856
        %v3092 = vpop.f32.mrb[0].mxu0
        %v3093 = vadd.f32 %v2844, %v3092
        %v3094 = vpop.f32.mrb[0].mxu0
        %v3095 = vpop.f32.mrb[0].mxu0
        %v3096 = vadd.f32 %v2847, %v3095
        %v3097 = vpop.f32.mrb[0].mxu0
        %3098 = vmatprep.mubr.bf16.mxu0 %v859
        %3099 = vmatmul.mubr.bf16.gmra.mrb[0].mxu0 %v857
        %v3100 = vpop.f32.mrb[0].mxu0
        %v3101 = vadd.f32 %v2852, %v3100
        %v3102 = vpop.f32.mrb[0].mxu0
        %v3103 = vpop.f32.mrb[0].mxu0
        %v3104 = vadd.f32 %v2855, %v3103
        %v3105 = vpop.f32.mrb[0].mxu0
        %3106 = vmatprep.mubr.bf16.mxu0 %v860
        %3107 = vmatmul.mubr.bf16.gmra.mrb[0].mxu0 %v858
        %v3108 = vpop.f32.mrb[0].mxu0
        %v3109 = vadd.f32 %v2860, %v3108
        %v3110 = vpop.f32.mrb[0].mxu0
        %v3111 = vpop.f32.mrb[0].mxu0
        %v3112 = vadd.f32 %v2863, %v3111
        %v3113 = vpop.f32.mrb[0].mxu0
        %3114 = vmatprep.mubr.bf16.mxu0 %v861
        %3115 = vmatmul.mubr.bf16.gmra.mrb[0].mxu0 %v859
        %v3116 = vpop.f32.mrb[0].mxu0
        %v3117 = vadd.f32 %v2868, %v3116
        %v3118 = vpop.f32.mrb[0].mxu0
        %v3119 = vpop.f32.mrb[0].mxu0
        %v3120 = vadd.f32 %v2871, %v3119
        %v3121 = vpop.f32.mrb[0].mxu0
        %3122 = vmatprep.mubr.bf16.mxu0 %v898
        %3123 = vmatmul.mubr.bf16.gmra.mrb[0].mxu0 %v860
        %v3124 = vpop.f32.mrb[0].mxu0
        %v3125 = vadd.f32 %v2876, %v3124
        %v3126 = vpop.f32.mrb[0].mxu0
        %v3127 = vpop.f32.mrb[0].mxu0
        %v3128 = vadd.f32 %v2879, %v3127
        %v3129 = vpop.f32.mrb[0].mxu0
        %3130 = vmatprep.mubr.bf16.mxu0 %v899
        %3131 = vmatmul.mubr.bf16.gmra.mrb[0].mxu0 %v861
        %v3132 = vpop.f32.mrb[0].mxu0
        %v3133 = vadd.f32 %v2884, %v3132
        %v3134 = vpop.f32.mrb[0].mxu0
        %v3135 = vpop.f32.mrb[0].mxu0
        %v3136 = vadd.f32 %v2887, %v3135
        %v3137 = vpop.f32.mrb[0].mxu0
        %3138 = vmatprep.mubr.bf16.mxu0 %v910
        %3139 = vmatmul.mubr.bf16.gmra.mrb[0].mxu0 %v898
        %v3140 = vpop.f32.mrb[0].mxu0
        %v3141 = vpop.f32.mrb[0].mxu0
        %v3142 = vpop.f32.mrb[0].mxu0
        %v3143 = vpop.f32.mrb[0].mxu0
        %3144 = vmatprep.mubr.bf16.mxu0 %v911
        %3145 = vmatmul.mubr.bf16.gmra.mrb[0].mxu0 %v899
        %v3146 = vpop.f32.mrb[0].mxu0
        %v3147 = vpop.f32.mrb[0].mxu0
        %v3148 = vpop.f32.mrb[0].mxu0
        %v3149 = vpop.f32.mrb[0].mxu0
        %3150 = vmatprep.mubr.bf16.mxu0 %v922
        %3151 = vmatmul.mubr.bf16.gmra.mrb[0].mxu0 %v910
        %v3152 = vpop.f32.mrb[0].mxu0
        %v3153 = vpop.f32.mrb[0].mxu0
        %v3154 = vpop.f32.mrb[0].mxu0
        %v3155 = vpop.f32.mrb[0].mxu0
        %3156 = vmatprep.mubr.bf16.mxu0 %v923
        %3157 = vmatmul.mubr.bf16.gmra.mrb[0].mxu0 %v911
        %v3158 = vpop.f32.mrb[0].mxu0
        %v3159 = vpop.f32.mrb[0].mxu0
        %v3160 = vpop.f32.mrb[0].mxu0
        %v3161 = vpop.f32.mrb[0].mxu0
        %3162 = vdwg.mxu0
        %3163 = vmatprep.subr.bf16.mxu0 0
        %3164 = vmatpush1.bf16.msra.mxu0 %v1596
        %3165 = vmatprep.subr.bf16.mxu0 0
        %3166 = vmatpush1.bf16.msra.mxu0 %v1599
        %3167 = vmatprep.subr.bf16.mxu0 0
        %3168 = vmatpush1.bf16.msra.mxu0 %v1602
        %3169 = vmatprep.subr.bf16.mxu0 0
        %3170 = vmatpush1.bf16.msra.mxu0 %v1605
        %3171 = vmatprep.subr.bf16.mxu0 0
        %3172 = vmatpush1.bf16.msra.mxu0 %v1608
        %3173 = vmatprep.subr.bf16.mxu0 0
        %3174 = vmatpush1.bf16.msra.mxu0 %v1611
        %3175 = vmatprep.subr.bf16.mxu0 0
        %3176 = vmatpush1.bf16.msra.mxu0 %v1614
        %3177 = vmatprep.subr.bf16.mxu0 0
        %3178 = vmatpush1.bf16.msra.mxu0 %v1617
        %3179 = vmatprep.subr.bf16.mxu0 0
        %3180 = vmatpush1.bf16.msra.mxu0 0
        %3181 = vmatprep.subr.bf16.mxu0 0
        %3182 = vmatpush1.bf16.msra.mxu0 0
        %3183 = vmatprep.subr.bf16.mxu0 0
        %3184 = vmatpush1.bf16.msra.mxu0 0
        %3185 = vmatprep.subr.bf16.mxu0 0
        %3186 = vmatpush1.bf16.msra.mxu0 0
        %3187 = vmatprep.subr.bf16.mxu0 0
        %3188 = vmatpush1.bf16.msra.mxu0 0
        %3189 = vmatprep.subr.bf16.mxu0 0
        %3190 = vmatpush1.bf16.msra.mxu0 0
        %3191 = vmatprep.subr.bf16.mxu0 0
        %3192 = vmatpush1.bf16.msra.mxu0 0
        %3193 = vmatprep.subr.bf16.mxu0 0
        %3194 = vmatpush1.bf16.msra.mxu0 0
        %3195 = vmatprep.mubr.bf16.mxu0 0
        %3196 = vmatmul.mubr.bf16.gmra.mrb[0].mxu0 %v842
        %v3197 = vpop.f32.mrb[0].mxu0
        %v3198 = vadd.f32 %v2949, %v3197
        %v3199 = vpop.f32.mrb[0].mxu0
        %v3200 = vpop.f32.mrb[0].mxu0
        %v3201 = vadd.f32 %v2952, %v3200
        %v3202 = vpop.f32.mrb[0].mxu0
        %3203 = vmatprep.mubr.bf16.mxu0 0
        %3204 = vmatmul.mubr.bf16.gmra.mrb[0].mxu0 %v843
        %v3205 = vpop.f32.mrb[0].mxu0
        %v3206 = vadd.f32 %v2957, %v3205
        %v3207 = vpop.f32.mrb[0].mxu0
        %v3208 = vpop.f32.mrb[0].mxu0
        %v3209 = vadd.f32 %v2960, %v3208
        %v3210 = vpop.f32.mrb[0].mxu0
        %3211 = vmatprep.mubr.bf16.mxu0 0
        %3212 = vmatmul.mubr.bf16.gmra.mrb[0].mxu0 %v844
        %v3213 = vpop.f32.mrb[0].mxu0
        %v3214 = vadd.f32 %v2965, %v3213
        %v3215 = vpop.f32.mrb[0].mxu0
        %v3216 = vpop.f32.mrb[0].mxu0
        %v3217 = vadd.f32 %v2968, %v3216
        %v3218 = vpop.f32.mrb[0].mxu0
        %3219 = vmatprep.mubr.bf16.mxu0 0
        %3220 = vmatmul.mubr.bf16.gmra.mrb[0].mxu0 %v845
        %v3221 = vpop.f32.mrb[0].mxu0
        %v3222 = vadd.f32 %v2973, %v3221
        %v3223 = vpop.f32.mrb[0].mxu0
        %v3224 = vpop.f32.mrb[0].mxu0
        %v3225 = vadd.f32 %v2976, %v3224
        %v3226 = vpop.f32.mrb[0].mxu0
        %3227 = vmatprep.mubr.bf16.mxu0 0
        %3228 = vmatmul.mubr.bf16.gmra.mrb[0].mxu0 %v846
        %v3229 = vpop.f32.mrb[0].mxu0
        %v3230 = vadd.f32 %v2981, %v3229
        %v3231 = vpop.f32.mrb[0].mxu0
        %v3232 = vpop.f32.mrb[0].mxu0
        %v3233 = vadd.f32 %v2984, %v3232
        %v3234 = vpop.f32.mrb[0].mxu0
        %3235 = vmatprep.mubr.bf16.mxu0 0
        %3236 = vmatmul.mubr.bf16.gmra.mrb[0].mxu0 %v847
        %v3237 = vpop.f32.mrb[0].mxu0
        %v3238 = vadd.f32 %v2989, %v3237
        %v3239 = vpop.f32.mrb[0].mxu0
        %v3240 = vpop.f32.mrb[0].mxu0
        %v3241 = vadd.f32 %v2992, %v3240
        %v3242 = vpop.f32.mrb[0].mxu0
        %3243 = vmatprep.mubr.bf16.mxu0 0
        %3244 = vmatmul.mubr.bf16.gmra.mrb[0].mxu0 %v848
        %v3245 = vpop.f32.mrb[0].mxu0
        %v3246 = vadd.f32 %v2997, %v3245
        %v3247 = vpop.f32.mrb[0].mxu0
        %v3248 = vpop.f32.mrb[0].mxu0
        %v3249 = vadd.f32 %v3000, %v3248
        %v3250 = vpop.f32.mrb[0].mxu0
        %3251 = vmatprep.mubr.bf16.mxu0 0
        %3252 = vmatmul.mubr.bf16.gmra.mrb[0].mxu0 %v849
        %v3253 = vpop.f32.mrb[0].mxu0
        %v3254 = vadd.f32 %v3005, %v3253
        %v3255 = vpop.f32.mrb[0].mxu0
        %v3256 = vpop.f32.mrb[0].mxu0
        %v3257 = vadd.f32 %v3008, %v3256
        %v3258 = vpop.f32.mrb[0].mxu0
        %3259 = vmatprep.mubr.bf16.mxu0 0
        %3260 = vmatmul.mubr.bf16.gmra.mrb[0].mxu0 %v850
        %v3261 = vpop.f32.mrb[0].mxu0
        %v3262 = vadd.f32 %v3013, %v3261
        %v3263 = vpop.f32.mrb[0].mxu0
        %v3264 = vpop.f32.mrb[0].mxu0
        %v3265 = vadd.f32 %v3016, %v3264
        %v3266 = vpop.f32.mrb[0].mxu0
        %3267 = vmatprep.mubr.bf16.mxu0 0
        %3268 = vmatmul.mubr.bf16.gmra.mrb[0].mxu0 %v851
        %v3269 = vpop.f32.mrb[0].mxu0
        %v3270 = vadd.f32 %v3021, %v3269
        %v3271 = vpop.f32.mrb[0].mxu0
        %v3272 = vpop.f32.mrb[0].mxu0
        %v3273 = vadd.f32 %v3024, %v3272
        %v3274 = vpop.f32.mrb[0].mxu0
        %3275 = vmatprep.mubr.bf16.mxu0 0
        %3276 = vmatmul.mubr.bf16.gmra.mrb[0].mxu0 %v852
        %v3277 = vpop.f32.mrb[0].mxu0
        %v3278 = vadd.f32 %v3029, %v3277
        %v3279 = vpop.f32.mrb[0].mxu0
        %v3280 = vpop.f32.mrb[0].mxu0
        %v3281 = vadd.f32 %v3032, %v3280
        %v3282 = vpop.f32.mrb[0].mxu0
        %3283 = vmatprep.mubr.bf16.mxu0 0
        %3284 = vmatmul.mubr.bf16.gmra.mrb[0].mxu0 %v853
        %v3285 = vpop.f32.mrb[0].mxu0
        %v3286 = vadd.f32 %v3037, %v3285
        %v3287 = vpop.f32.mrb[0].mxu0
        %v3288 = vpop.f32.mrb[0].mxu0
        %v3289 = vadd.f32 %v3040, %v3288
        %v3290 = vpop.f32.mrb[0].mxu0
        %3291 = vmatprep.mubr.bf16.mxu0 0
        %3292 = vmatmul.mubr.bf16.gmra.mrb[0].mxu0 %v854
        %v3293 = vpop.f32.mrb[0].mxu0
        %v3294 = vadd.f32 %v3045, %v3293
        %v3295 = vpop.f32.mrb[0].mxu0
        %v3296 = vpop.f32.mrb[0].mxu0
        %v3297 = vadd.f32 %v3048, %v3296
        %v3298 = vpop.f32.mrb[0].mxu0
        %3299 = vmatprep.mubr.bf16.mxu0 0
        %3300 = vmatmul.mubr.bf16.gmra.mrb[0].mxu0 %v855
        %v3301 = vpop.f32.mrb[0].mxu0
        %v3302 = vadd.f32 %v3053, %v3301
        %v3303 = vpop.f32.mrb[0].mxu0
        %v3304 = vpop.f32.mrb[0].mxu0
        %v3305 = vadd.f32 %v3056, %v3304
        %v3306 = vpop.f32.mrb[0].mxu0
        %3307 = vmatprep.mubr.bf16.mxu0 0
        %3308 = vmatmul.mubr.bf16.gmra.mrb[0].mxu0 %v856
        %v3309 = vpop.f32.mrb[0].mxu0
        %v3310 = vadd.f32 %v3061, %v3309
        %v3311 = vpop.f32.mrb[0].mxu0
        %v3312 = vpop.f32.mrb[0].mxu0
        %v3313 = vadd.f32 %v3064, %v3312
        %v3314 = vpop.f32.mrb[0].mxu0
        %3315 = vmatprep.mubr.bf16.mxu0 0
        %3316 = vmatmul.mubr.bf16.gmra.mrb[0].mxu0 %v857
        %v3317 = vpop.f32.mrb[0].mxu0
        %v3318 = vadd.f32 %v3069, %v3317
        %v3319 = vpop.f32.mrb[0].mxu0
        %v3320 = vpop.f32.mrb[0].mxu0
        %v3321 = vadd.f32 %v3072, %v3320
        %v3322 = vpop.f32.mrb[0].mxu0
        %3323 = vmatprep.mubr.bf16.mxu0 0
        %3324 = vmatmul.mubr.bf16.gmra.mrb[0].mxu0 %v858
        %v3325 = vpop.f32.mrb[0].mxu0
        %v3326 = vadd.f32 %v3077, %v3325
        %v3327 = vpop.f32.mrb[0].mxu0
        %v3328 = vpop.f32.mrb[0].mxu0
        %v3329 = vadd.f32 %v3080, %v3328
        %v3330 = vpop.f32.mrb[0].mxu0
        %3331 = vmatprep.mubr.bf16.mxu0 0
        %3332 = vmatmul.mubr.bf16.gmra.mrb[0].mxu0 %v859
        %v3333 = vpop.f32.mrb[0].mxu0
        %v3334 = vadd.f32 %v3085, %v3333
        %v3335 = vpop.f32.mrb[0].mxu0
        %v3336 = vpop.f32.mrb[0].mxu0
        %v3337 = vadd.f32 %v3088, %v3336
        %v3338 = vpop.f32.mrb[0].mxu0
        %3339 = vmatprep.mubr.bf16.mxu0 0
        %3340 = vmatmul.mubr.bf16.gmra.mrb[0].mxu0 %v860
        %v3341 = vpop.f32.mrb[0].mxu0
        %v3342 = vadd.f32 %v3093, %v3341
        %v3343 = vpop.f32.mrb[0].mxu0
        %v3344 = vpop.f32.mrb[0].mxu0
        %v3345 = vadd.f32 %v3096, %v3344
        %v3346 = vpop.f32.mrb[0].mxu0
        %3347 = vmatprep.mubr.bf16.mxu0 0
        %3348 = vmatmul.mubr.bf16.gmra.mrb[0].mxu0 %v861
        %v3349 = vpop.f32.mrb[0].mxu0
        %v3350 = vadd.f32 %v3101, %v3349
        %v3351 = vpop.f32.mrb[0].mxu0
        %v3352 = vpop.f32.mrb[0].mxu0
        %v3353 = vadd.f32 %v3104, %v3352
        %v3354 = vpop.f32.mrb[0].mxu0
        %3355 = vmatprep.mubr.bf16.mxu0 0
        %3356 = vmatmul.mubr.bf16.gmra.mrb[0].mxu0 %v898
        %v3357 = vpop.f32.mrb[0].mxu0
        %v3358 = vadd.f32 %v3109, %v3357
        %v3359 = vpop.f32.mrb[0].mxu0
        %v3360 = vpop.f32.mrb[0].mxu0
        %v3361 = vadd.f32 %v3112, %v3360
        %v3362 = vpop.f32.mrb[0].mxu0
        %3363 = vmatprep.mubr.bf16.mxu0 0
        %3364 = vmatmul.mubr.bf16.gmra.mrb[0].mxu0 %v899
        %v3365 = vpop.f32.mrb[0].mxu0
        %v3366 = vadd.f32 %v3117, %v3365
        %v3367 = vpop.f32.mrb[0].mxu0
        %v3368 = vpop.f32.mrb[0].mxu0
        %v3369 = vadd.f32 %v3120, %v3368
        %v3370 = vpop.f32.mrb[0].mxu0
        %3371 = vmatprep.mubr.bf16.mxu0 0
        %3372 = vmatmul.mubr.bf16.gmra.mrb[0].mxu0 %v910
        %v3373 = vpop.f32.mrb[0].mxu0
        %v3374 = vadd.f32 %v3125, %v3373
        %v3375 = vpop.f32.mrb[0].mxu0
        %v3376 = vpop.f32.mrb[0].mxu0
        %v3377 = vadd.f32 %v3128, %v3376
        %v3378 = vpop.f32.mrb[0].mxu0
        %3379 = vmatprep.mubr.bf16.mxu0 0
        %3380 = vmatmul.mubr.bf16.gmra.mrb[0].mxu0 %v911
        %v3381 = vpop.f32.mrb[0].mxu0
        %v3382 = vadd.f32 %v3133, %v3381
        %v3383 = vpop.f32.mrb[0].mxu0
        %v3384 = vpop.f32.mrb[0].mxu0
        %v3385 = vadd.f32 %v3136, %v3384
        %v3386 = vpop.f32.mrb[0].mxu0
        %3387 = vmatprep.mubr.bf16.mxu0 0
        %3388 = vmatmul.mubr.bf16.gmra.mrb[0].mxu0 %v922
        %v3389 = vpop.f32.mrb[0].mxu0
        %v3390 = vpop.f32.mrb[0].mxu0
        %v3391 = vpop.f32.mrb[0].mxu0
        %v3392 = vpop.f32.mrb[0].mxu0
        %3393 = vmatprep.mubr.bf16.mxu0 0
        %3394 = vmatmul.mubr.bf16.gmra.mrb[0].mxu0 %v923
        %v3395 = vpop.f32.mrb[0].mxu0
        %v3396 = vpop.f32.mrb[0].mxu0
        %v3397 = vpop.f32.mrb[0].mxu0
        %v3398 = vpop.f32.mrb[0].mxu0
        %3399 = vmatprep.mubr.bf16.mxu0 0
        %3400 = vmatmul.mubr.bf16.gmra.mrb[0].mxu0 %v934
        %v3401 = vpop.f32.mrb[0].mxu0
        %v3402 = vpop.f32.mrb[0].mxu0
        %v3403 = vpop.f32.mrb[0].mxu0
        %v3404 = vpop.f32.mrb[0].mxu0
        %3405 = vmatprep.mubr.bf16.mxu0 0
        %3406 = vmatmul.mubr.bf16.gmra.mrb[0].mxu0 %v935
        %v3407 = vpop.f32.mrb[0].mxu0
        %v3408 = vpop.f32.mrb[0].mxu0
        %v3409 = vpop.f32.mrb[0].mxu0
        %v3410 = vpop.f32.mrb[0].mxu0
        %3411 = vdwg.mxu0
        %v3412 = vmax.f32 %v2391, %v2411
        %v3413 = vmax.f32 %v3412, %v2431
        %v3414 = vmax.f32 %v3413, %v2451
        %v3415 = vmax.f32 %v3414, %v2471
        %v3416 = vmax.f32 %v3415, %v2491
        %v3417 = vmax.f32 %v3416, %v2511
        %v3418 = vmax.f32 %v3417, %v2531
        %v3419 = vmax.f32 %v3418, %v2551
        %v3420 = vmax.f32 %v3419, %v2571
        %v3421 = vmax.f32 %v3420, %v2591
        %v3422 = vmax.f32 %v3421, %v2611
        %v3423 = vmax.f32 %v3422, %v2631
        %v3424 = vmax.f32 %v3423, %v2651
        %v3425 = vmax.f32 %v2395, %v2415
        %v3426 = vmax.f32 %v3425, %v2435
        %v3427 = vmax.f32 %v3426, %v2455
        %v3428 = vmax.f32 %v3427, %v2475
        %v3429 = vmax.f32 %v3428, %v2495
        %v3430 = vmax.f32 %v3429, %v2515
        %v3431 = vmax.f32 %v3430, %v2535
        %v3432 = vmax.f32 %v3431, %v2555
        %v3433 = vmax.f32 %v3432, %v2575
        %v3434 = vmax.f32 %v3433, %v2595
        %v3435 = vmax.f32 %v3434, %v2615
        %v3436 = vmax.f32 %v3435, %v2635
        %v3437 = vmax.f32 %v3436, %v2654
        %v3438 = vmax.f32 %v2401, %v2421
        %v3439 = vmax.f32 %v3438, %v2441
        %v3440 = vmax.f32 %v3439, %v2461
        %v3441 = vmax.f32 %v3440, %v2481
        %v3442 = vmax.f32 %v3441, %v2501
        %v3443 = vmax.f32 %v3442, %v2521
        %v3444 = vmax.f32 %v3443, %v2541
        %v3445 = vmax.f32 %v3444, %v2561
        %v3446 = vmax.f32 %v3445, %v2581
        %v3447 = vmax.f32 %v3446, %v2601
        %v3448 = vmax.f32 %v3447, %v2621
        %v3449 = vmax.f32 %v3448, %v2641
        %v3450 = vmax.f32 %v3449, %v2659
        %v3451 = vmax.f32 %v2405, %v2425
        %v3452 = vmax.f32 %v3451, %v2445
        %v3453 = vmax.f32 %v3452, %v2465
        %v3454 = vmax.f32 %v3453, %v2485
        %v3455 = vmax.f32 %v3454, %v2505
        %v3456 = vmax.f32 %v3455, %v2525
        %v3457 = vmax.f32 %v3456, %v2545
        %v3458 = vmax.f32 %v3457, %v2565
        %v3459 = vmax.f32 %v3458, %v2585
        %v3460 = vmax.f32 %v3459, %v2605
        %v3461 = vmax.f32 %v3460, %v2625
        %v3462 = vmax.f32 %v3461, %v2645
        %v3463 = vmax.f32 %v3462, %v2662
        %v3464 = vmax.f32 %v2393, %v2413
        %v3465 = vmax.f32 %v3464, %v2433
        %v3466 = vmax.f32 %v3465, %v2453
        %v3467 = vmax.f32 %v3466, %v2473
        %v3468 = vmax.f32 %v3467, %v2493
        %v3469 = vmax.f32 %v3468, %v2513
        %v3470 = vmax.f32 %v3469, %v2533
        %v3471 = vmax.f32 %v3470, %v2553
        %v3472 = vmax.f32 %v3471, %v2573
        %v3473 = vmax.f32 %v3472, %v2593
        %v3474 = vmax.f32 %v3473, %v2613
        %v3475 = vmax.f32 %v3474, %v2633
        %v3476 = vmax.f32 %v2397, %v2417
        %v3477 = vmax.f32 %v3476, %v2437
        %v3478 = vmax.f32 %v3477, %v2457
        %v3479 = vmax.f32 %v3478, %v2477
        %v3480 = vmax.f32 %v3479, %v2497
        %v3481 = vmax.f32 %v3480, %v2517
        %v3482 = vmax.f32 %v3481, %v2537
        %v3483 = vmax.f32 %v3482, %v2557
        %v3484 = vmax.f32 %v3483, %v2577
        %v3485 = vmax.f32 %v3484, %v2597
        %v3486 = vmax.f32 %v3485, %v2617
        %v3487 = vmax.f32 %v3486, %v2637
        %v3488 = vmax.f32 %v2403, %v2423
        %v3489 = vmax.f32 %v3488, %v2443
        %v3490 = vmax.f32 %v3489, %v2463
        %v3491 = vmax.f32 %v3490, %v2483
        %v3492 = vmax.f32 %v3491, %v2503
        %v3493 = vmax.f32 %v3492, %v2523
        %v3494 = vmax.f32 %v3493, %v2543
        %v3495 = vmax.f32 %v3494, %v2563
        %v3496 = vmax.f32 %v3495, %v2583
        %v3497 = vmax.f32 %v3496, %v2603
        %v3498 = vmax.f32 %v3497, %v2623
        %v3499 = vmax.f32 %v3498, %v2643
        %v3500 = vmax.f32 %v2407, %v2427
        %v3501 = vmax.f32 %v3500, %v2447
        %v3502 = vmax.f32 %v3501, %v2467
        %v3503 = vmax.f32 %v3502, %v2487
        %v3504 = vmax.f32 %v3503, %v2507
        %v3505 = vmax.f32 %v3504, %v2527
        %v3506 = vmax.f32 %v3505, %v2547
        %v3507 = vmax.f32 %v3506, %v2567
        %v3508 = vmax.f32 %v3507, %v2587
        %v3509 = vmax.f32 %v3508, %v2607
        %v3510 = vmax.f32 %v3509, %v2627
        %v3511 = vmax.f32 %v3510, %v2647
        %v3512 = vmax.f32 %v3198, %v3214
        %v3513 = vmax.f32 %v3512, %v3230
        %v3514 = vmax.f32 %v3513, %v3246
        %v3515 = vmax.f32 %v3514, %v3262
        %v3516 = vmax.f32 %v3515, %v3278
        %v3517 = vmax.f32 %v3516, %v3294
        %v3518 = vmax.f32 %v3517, %v3310
        %v3519 = vmax.f32 %v3518, %v3326
        %v3520 = vmax.f32 %v3519, %v3342
        %v3521 = vmax.f32 %v3520, %v3358
        %v3522 = vmax.f32 %v3521, %v3374
        %v3523 = vmax.f32 %v3201, %v3217
        %v3524 = vmax.f32 %v3523, %v3233
        %v3525 = vmax.f32 %v3524, %v3249
        %v3526 = vmax.f32 %v3525, %v3265
        %v3527 = vmax.f32 %v3526, %v3281
        %v3528 = vmax.f32 %v3527, %v3297
        %v3529 = vmax.f32 %v3528, %v3313
        %v3530 = vmax.f32 %v3529, %v3329
        %v3531 = vmax.f32 %v3530, %v3345
        %v3532 = vmax.f32 %v3531, %v3361
        %v3533 = vmax.f32 %v3532, %v3377
        %v3534 = vmax.f32 %v3206, %v3222
        %v3535 = vmax.f32 %v3534, %v3238
        %v3536 = vmax.f32 %v3535, %v3254
        %v3537 = vmax.f32 %v3536, %v3270
        %v3538 = vmax.f32 %v3537, %v3286
        %v3539 = vmax.f32 %v3538, %v3302
        %v3540 = vmax.f32 %v3539, %v3318
        %v3541 = vmax.f32 %v3540, %v3334
        %v3542 = vmax.f32 %v3541, %v3350
        %v3543 = vmax.f32 %v3542, %v3366
        %v3544 = vmax.f32 %v3543, %v3382
        %v3545 = vmax.f32 %v3209, %v3225
        %v3546 = vmax.f32 %v3545, %v3241
        %v3547 = vmax.f32 %v3546, %v3257
        %v3548 = vmax.f32 %v3547, %v3273
        %v3549 = vmax.f32 %v3548, %v3289
        %v3550 = vmax.f32 %v3549, %v3305
        %v3551 = vmax.f32 %v3550, %v3321
        %v3552 = vmax.f32 %v3551, %v3337
        %v3553 = vmax.f32 %v3552, %v3353
        %v3554 = vmax.f32 %v3553, %v3369
        %v3555 = vmax.f32 %v3554, %v3385
        %v3556 = vld [vmem:[%s2] sm:$0x7]
        %v3558 = vlaneseq
        %v3559 = vshrl.u32 %v3558, 7
        %v3560 = vsub.s32 0, %v3559
        %v3561 = vrot.slane %v3556, %v3560
        %v3562 = vlaneseq
        %v3563 = vshrl.u32 %v3562, 7
        %v3564 = vsub.s32 1, %v3563
        %v3565 = vrot.slane %v3556, %v3564
        %v3566 = vlaneseq
        %v3567 = vshrl.u32 %v3566, 7
        %v3568 = vsub.s32 2, %v3567
        %v3569 = vrot.slane %v3556, %v3568
        %v3573 = vadd.f32 %v3424, %v3561
        %v3574 = vadd.f32 %v3475, %v3565
        %v3575 = vadd.f32 %v3522, %v3569
        %v3576 = vadd.f32 %v3437, %v3561
        %v3577 = vadd.f32 %v3487, %v3565
        %v3578 = vadd.f32 %v3533, %v3569
        %v3579 = vadd.f32 %v3450, %v3561
        %v3580 = vadd.f32 %v3499, %v3565
        %v3581 = vadd.f32 %v3544, %v3569
        %v3582 = vadd.f32 %v3463, %v3561
        %v3583 = vadd.f32 %v3511, %v3565
        %v3584 = vadd.f32 %v3555, %v3569
        %v3585 = vmax.f32 %v3573, 0.0
        %v3586 = vmax.f32 %v3574, 0.0
        %v3587 = vmax.f32 %v3575, 0.0
        %v3588 = vmax.f32 %v3576, 0.0
        %v3589 = vmax.f32 %v3577, 0.0
        %v3590 = vmax.f32 %v3578, 0.0
        %v3591 = vmax.f32 %v3579, 0.0
        %v3592 = vmax.f32 %v3580, 0.0
        %v3593 = vmax.f32 %v3581, 0.0
        %v3594 = vmax.f32 %v3582, 0.0
        %v3595 = vmax.f32 %v3583, 0.0
        %v3596 = vmax.f32 %v3584, 0.0
        %v3597 = vpack.c.bf16 %v3588, %v3585
        %v3598 = vpack.c.bf16 %v3589, %v3586
        %v3599 = vpack.c.bf16 %v3590, %v3587
        %v3600 = vpack.c.bf16 %v3594, %v3591
        %v3601 = vpack.c.bf16 %v3595, %v3592
        %v3602 = vpack.c.bf16 %v3596, %v3593
        %v3603 = vld [vmem:[%s3] sm:$0xf]
        %v3604 = vld [vmem:[%s3 + $0x4] sm:$0xf]
        %v3605 = vld [vmem:[%s3 + $0x8] sm:$0xf]
        %v3606 = vld [vmem:[%s3 + $0xc] sm:$0xf]
        %v3607 = vld [vmem:[%s3 + $0x10] sm:$0xf]
        %v3608 = vld [vmem:[%s3 + $0x14] sm:$0xf]
        %v3609 = vld [vmem:[%s3 + $0x18] sm:$0xf]
        %v3610 = vld [vmem:[%s3 + $0x1c] sm:$0xf]
        %v3611 = vld [vmem:[%s3 + $0x20] sm:$0xf]
        %v3612 = vld [vmem:[%s3 + $0x24] sm:$0xf]
        %v3613 = vld [vmem:[%s3 + $0x28] sm:$0xf]
        %v3614 = vld [vmem:[%s3 + $0x2c] sm:$0xf]
        %v3615 = vld [vmem:[%s3 + $0x30] sm:$0xf]
        %v3616 = vld [vmem:[%s3 + $0x34] sm:$0xf]
        %v3617 = vld [vmem:[%s3 + $0x38] sm:$0xf]
        %v3618 = vld [vmem:[%s3 + $0x3c] sm:$0xf]
        %v3619 = vld [vmem:[%s3 + $0x40] sm:$0xf]
        %v3620 = vld [vmem:[%s3 + $0x44] sm:$0xf]
        %v3621 = vld [vmem:[%s3 + $0x48] sm:$0xf]
        %v3622 = vld [vmem:[%s3 + $0x4c] sm:$0xf]
        %v3623 = vld [vmem:[%s3 + $0x50] sm:$0xf]
        %v3624 = vld [vmem:[%s3 + $0x54] sm:$0xf]
        %v3625 = vld [vmem:[%s3 + $0x58] sm:$0xf]
        %v3626 = vld [vmem:[%s3 + $0x5c] sm:$0xf]
        %v3627 = vld [vmem:[%s3 + $0x60] sm:$0xf]
        %v3628 = vld [vmem:[%s3 + $0x64] sm:$0xf]
        %v3629 = vld [vmem:[%s3 + $0x68] sm:$0xf]
        %v3630 = vld [vmem:[%s3 + $0x6c] sm:$0xf]
        %v3631 = vld [vmem:[%s3 + $0x70] sm:$0xf]
        %v3632 = vld [vmem:[%s3 + $0x74] sm:$0xf]
        %v3633 = vld [vmem:[%s3 + $0x78] sm:$0xf]
        %v3634 = vld [vmem:[%s3 + $0x7c] sm:$0xf]
        %v3635 = vld [vmem:[%s3 + $0x80] sm:$0xf]
        %v3636 = vld [vmem:[%s3 + $0x84] sm:$0xf]
        %v3637 = vld [vmem:[%s3 + $0x88] sm:$0xf]
        %v3638 = vld [vmem:[%s3 + $0x8c] sm:$0xf]
        %v3639 = vld [vmem:[%s3 + $0x90] sm:$0xf]
        %v3640 = vld [vmem:[%s3 + $0x94] sm:$0xf]
        %v3641 = vld [vmem:[%s3 + $0x98] sm:$0xf]
        %v3642 = vld [vmem:[%s3 + $0x9c] sm:$0xf]
        %v3643 = vld [vmem:[%s3 + $0xa0] sm:$0xf]
        %v3644 = vld [vmem:[%s3 + $0xa4] sm:$0xf]
        %v3645 = vld [vmem:[%s3 + $0xa8] sm:$0xf]
        %v3646 = vld [vmem:[%s3 + $0xac] sm:$0xf]
        %v3647 = vld [vmem:[%s3 + $0xb0] sm:$0xf]
        %v3648 = vld [vmem:[%s3 + $0xb4] sm:$0xf]
        %v3649 = vld [vmem:[%s3 + $0xb8] sm:$0xf]
        %v3650 = vld [vmem:[%s3 + $0xbc] sm:$0xf]
        %v3651 = vld [vmem:[%s4] sm:$0x1]
        %v3653 = vlaneseq
        %v3654 = vshrl.u32 %v3653, 7
        %v3655 = vsub.s32 0, %v3654
        %v3656 = vrot.slane %v3651, %v3655
        %v3706 = vunpack.c.l.b16 %v3603
        %v3707 = vunpack.c.l.b16 %v3604
        %v3708 = vunpack.c.l.b16 %v3605
        %v3709 = vunpack.c.l.b16 %v3606
        %v3710 = vunpack.c.l.b16 %v3607
        %v3711 = vunpack.c.l.b16 %v3608
        %v3712 = vunpack.c.l.b16 %v3609
        %v3713 = vunpack.c.l.b16 %v3610
        %v3714 = vunpack.c.l.b16 %v3611
        %v3715 = vunpack.c.l.b16 %v3612
        %v3716 = vunpack.c.l.b16 %v3613
        %v3717 = vunpack.c.l.b16 %v3614
        %v3718 = vunpack.c.l.b16 %v3615
        %v3719 = vunpack.c.l.b16 %v3616
        %v3720 = vunpack.c.l.b16 %v3617
        %v3721 = vunpack.c.l.b16 %v3618
        %v3722 = vunpack.c.l.b16 %v3619
        %v3723 = vunpack.c.l.b16 %v3620
        %v3724 = vunpack.c.l.b16 %v3621
        %v3725 = vunpack.c.l.b16 %v3622
        %v3726 = vunpack.c.l.b16 %v3623
        %v3727 = vunpack.c.l.b16 %v3624
        %v3728 = vunpack.c.l.b16 %v3625
        %v3729 = vunpack.c.l.b16 %v3626
        %v3730 = vunpack.c.l.b16 %v3627
        %v3731 = vunpack.c.l.b16 %v3628
        %v3732 = vunpack.c.l.b16 %v3629
        %v3733 = vunpack.c.l.b16 %v3630
        %v3734 = vunpack.c.l.b16 %v3631
        %v3735 = vunpack.c.l.b16 %v3632
        %v3736 = vunpack.c.l.b16 %v3633
        %v3737 = vunpack.c.l.b16 %v3634
        %v3738 = vunpack.c.l.b16 %v3635
        %v3739 = vunpack.c.l.b16 %v3636
        %v3740 = vunpack.c.l.b16 %v3637
        %v3741 = vunpack.c.l.b16 %v3638
        %v3742 = vunpack.c.l.b16 %v3639
        %v3743 = vunpack.c.l.b16 %v3640
        %v3744 = vunpack.c.l.b16 %v3641
        %v3745 = vunpack.c.l.b16 %v3642
        %v3746 = vunpack.c.l.b16 %v3643
        %v3747 = vunpack.c.l.b16 %v3644
        %v3748 = vunpack.c.l.b16 %v3645
        %v3749 = vunpack.c.l.b16 %v3646
        %v3750 = vunpack.c.l.b16 %v3647
        %v3751 = vunpack.c.l.b16 %v3648
        %v3752 = vunpack.c.l.b16 %v3649
        %v3753 = vunpack.c.l.b16 %v3650
        %v3754 = vpack.c.b16 %v3707, %v3706
        %v3755 = vpack.c.b16 %v3709, %v3708
        %v3756 = vpack.c.b16 %v3711, %v3710
        %v3757 = vpack.c.b16 %v3713, %v3712
        %v3758 = vpack.c.b16 %v3715, %v3714
        %v3759 = vpack.c.b16 %v3717, %v3716
        %v3760 = vpack.c.b16 %v3719, %v3718
        %v3761 = vpack.c.b16 %v3721, %v3720
        %v3762 = vpack.c.b16 %v3723, %v3722
        %v3763 = vpack.c.b16 %v3725, %v3724
        %v3764 = vpack.c.b16 %v3727, %v3726
        %v3765 = vpack.c.b16 %v3729, %v3728
        %v3766 = vpack.c.b16 %v3731, %v3730
        %v3767 = vpack.c.b16 %v3733, %v3732
        %v3768 = vpack.c.b16 %v3735, %v3734
        %v3769 = vpack.c.b16 %v3737, %v3736
        %v3770 = vpack.c.b16 %v3739, %v3738
        %v3771 = vpack.c.b16 %v3741, %v3740
        %v3772 = vpack.c.b16 %v3743, %v3742
        %v3773 = vpack.c.b16 %v3745, %v3744
        %v3774 = vpack.c.b16 %v3747, %v3746
        %v3775 = vpack.c.b16 %v3749, %v3748
        %v3776 = vpack.c.b16 %v3751, %v3750
        %v3777 = vpack.c.b16 %v3753, %v3752
        %3802 = vmatprep.subr.bf16.mxu0 0
        %3803 = vmatpush1.bf16.msra.mxu0 %v3754
        %3804 = vmatprep.subr.bf16.mxu0 0
        %3805 = vmatpush1.bf16.msra.mxu0 %v3755
        %3806 = vmatprep.subr.bf16.mxu0 0
        %3807 = vmatpush1.bf16.msra.mxu0 %v3756
        %3808 = vmatprep.subr.bf16.mxu0 0
        %3809 = vmatpush1.bf16.msra.mxu0 %v3757
        %3810 = vmatprep.subr.bf16.mxu0 0
        %3811 = vmatpush1.bf16.msra.mxu0 %v3758
        %3812 = vmatprep.subr.bf16.mxu0 0
        %3813 = vmatpush1.bf16.msra.mxu0 %v3759
        %3814 = vmatprep.subr.bf16.mxu0 0
        %3815 = vmatpush1.bf16.msra.mxu0 %v3760
        %3816 = vmatprep.subr.bf16.mxu0 0
        %3817 = vmatpush1.bf16.msra.mxu0 %v3761
        %3818 = vmatprep.subr.bf16.mxu0 0
        %3819 = vmatpush1.bf16.msra.mxu0 %v3762
        %3820 = vmatprep.subr.bf16.mxu0 0
        %3821 = vmatpush1.bf16.msra.mxu0 %v3763
        %3822 = vmatprep.subr.bf16.mxu0 0
        %3823 = vmatpush1.bf16.msra.mxu0 %v3764
        %3824 = vmatprep.subr.bf16.mxu0 0
        %3825 = vmatpush1.bf16.msra.mxu0 %v3765
        %3826 = vmatprep.subr.bf16.mxu0 0
        %3827 = vmatpush1.bf16.msra.mxu0 %v3766
        %3828 = vmatprep.subr.bf16.mxu0 0
        %3829 = vmatpush1.bf16.msra.mxu0 %v3767
        %3830 = vmatprep.subr.bf16.mxu0 0
        %3831 = vmatpush1.bf16.msra.mxu0 %v3768
        %3832 = vmatprep.subr.bf16.mxu0 0
        %3833 = vmatpush1.bf16.msra.mxu0 %v3769
        %3834 = vmatprep.mubr.bf16.mxu0 %v3598
        %3835 = vmatmul.mubr.bf16.gmra.mrb[0].mxu0 %v3597
        %v3836 = vpop.f32.mrb[0].mxu0
        %v3837 = vadd.f32 %v3656, %v3836
        %v3838 = vpop.f32.mrb[0].mxu0
        %v3839 = vpop.f32.mrb[0].mxu0
        %v3840 = vadd.f32 %v3656, %v3839
        %v3841 = vpop.f32.mrb[0].mxu0
        %3842 = vmatprep.mubr.bf16.mxu0 %v3601
        %3843 = vmatmul.mubr.bf16.gmra.mrb[0].mxu0 %v3600
        %v3844 = vpop.f32.mrb[0].mxu0
        %v3845 = vadd.f32 %v3656, %v3844
        %v3846 = vpop.f32.mrb[0].mxu0
        %v3847 = vpop.f32.mrb[0].mxu0
        %v3848 = vadd.f32 %v3656, %v3847
        %v3849 = vpop.f32.mrb[0].mxu0
        %3850 = vdwg.mxu0
        %3851 = vmatprep.subr.bf16.mxu0 0
        %3852 = vmatpush1.bf16.msra.mxu0 %v3770
        %3853 = vmatprep.subr.bf16.mxu0 0
        %3854 = vmatpush1.bf16.msra.mxu0 %v3771
        %3855 = vmatprep.subr.bf16.mxu0 0
        %3856 = vmatpush1.bf16.msra.mxu0 %v3772
        %3857 = vmatprep.subr.bf16.mxu0 0
        %3858 = vmatpush1.bf16.msra.mxu0 %v3773
        %3859 = vmatprep.subr.bf16.mxu0 0
        %3860 = vmatpush1.bf16.msra.mxu0 %v3774
        %3861 = vmatprep.subr.bf16.mxu0 0
        %3862 = vmatpush1.bf16.msra.mxu0 %v3775
        %3863 = vmatprep.subr.bf16.mxu0 0
        %3864 = vmatpush1.bf16.msra.mxu0 %v3776
        %3865 = vmatprep.subr.bf16.mxu0 0
        %3866 = vmatpush1.bf16.msra.mxu0 %v3777
        %3867 = vmatprep.subr.bf16.mxu0 0
        %3868 = vmatpush1.bf16.msra.mxu0 0
        %3869 = vmatprep.subr.bf16.mxu0 0
        %3870 = vmatpush1.bf16.msra.mxu0 0
        %3871 = vmatprep.subr.bf16.mxu0 0
        %3872 = vmatpush1.bf16.msra.mxu0 0
        %3873 = vmatprep.subr.bf16.mxu0 0
        %3874 = vmatpush1.bf16.msra.mxu0 0
        %3875 = vmatprep.subr.bf16.mxu0 0
        %3876 = vmatpush1.bf16.msra.mxu0 0
        %3877 = vmatprep.subr.bf16.mxu0 0
        %3878 = vmatpush1.bf16.msra.mxu0 0
        %3879 = vmatprep.subr.bf16.mxu0 0
        %3880 = vmatpush1.bf16.msra.mxu0 0
        %3881 = vmatprep.subr.bf16.mxu0 0
        %3882 = vmatpush1.bf16.msra.mxu0 0
        %3883 = vmatprep.mubr.bf16.mxu0 0
        %3884 = vmatmul.mubr.bf16.gmra.mrb[0].mxu0 %v3599
        %v3885 = vpop.f32.mrb[0].mxu0
        %v3886 = vadd.f32 %v3837, %v3885
        %v3887 = vpop.f32.mrb[0].mxu0
        %v3888 = vpop.f32.mrb[0].mxu0
        %v3889 = vadd.f32 %v3840, %v3888
        %v3890 = vpop.f32.mrb[0].mxu0
        %3891 = vmatprep.mubr.bf16.mxu0 0
        %3892 = vmatmul.mubr.bf16.gmra.mrb[0].mxu0 %v3602
        %v3893 = vpop.f32.mrb[0].mxu0
        %v3894 = vadd.f32 %v3845, %v3893
        %v3895 = vpop.f32.mrb[0].mxu0
        %v3896 = vpop.f32.mrb[0].mxu0
        %v3897 = vadd.f32 %v3848, %v3896
        %v3898 = vpop.f32.mrb[0].mxu0
        %3899 = vdwg.mxu0
        %3900 = vst [vmem:[%s647] sm:$0xff] %v3886
        %3901 = vst [vmem:[%s647 + $0x8] sm:$0xff] %v3889
        %3902 = vst [vmem:[%s647 + $0x10] sm:$0xff] %v3894
        %3903 = vst [vmem:[%s647 + $0x18] sm:$0xff] %v3897
        %s3904 = smul.u32 4, %s16
        %p3905 = scmp.lt.s32.totalorder %s3904, 7
        %s3906 = scalar_select %p3905, %s3904, 7
        %s3907 = smul.addr %s3906, 8
        %s3908 = scalar_lea.vmem %s5, %s3907
        // Predicated region
        $region82: #{re_cnn_forward.1} parent=76 // pred_check
          %p3909 = pneg %p144
        $region83: #{re_cnn_forward.1} parent=76 // pred_check_branch
          %3911 = sbr.rel (%p3909) target = $region85
        $region84: #{re_cnn_forward.1} parent=76 // pred_region
          %s3912 = smul.u32 4, %s16
        $region85: #{re_cnn_forward.1} parent=76 // pred_fallthru
          _
      $region77: #{re_cnn_forward.1} parent=5 // pred_fallthru
        _
      %p3913 = scmp.le.s32.totalorder 2, %s11
      // Predicated region
      $region86: #{re_cnn_forward.1} parent=5 // pred_check
        %p3914 = pneg %p3913
      $region87: #{re_cnn_forward.1} parent=5 // pred_check_branch
        %3916 = sbr.rel (%p3914) target = $region89
      $region88: #{re_cnn_forward.1} parent=5 // pred_region
        %s3917 = ssub.s32 %s11, 2
        // Predicated region
        $region90: #{re_cnn_forward.1} parent=88 // pred_check
          %p3918 = pneg %p150
        $region91: #{re_cnn_forward.1} parent=88 // pred_check_branch
          %3920 = sbr.rel (%p3918) target = $region93
        $region92: #{re_cnn_forward.1} parent=88 // pred_region
          %s3921 = smul.u32 4, %s17
          %p3922 = scmp.lt.s32.totalorder %s3921, 7
          %s3923 = scalar_select %p3922, %s3921, 7
          %s3924 = smul.addr %s3923, 8
          %s3925 = scalar_lea.vmem %s5, %s3924
        $region93: #{re_cnn_forward.1} parent=88 // pred_fallthru
          _
      $region89: #{re_cnn_forward.1} parent=5 // pred_fallthru
        _
    $region6: #{re_cnn_forward.1} parent=1 // loop_footer
      %s15 = sadd.s32 1, %s11
    $region7: #{re_cnn_forward.1} parent=1 // loop_footer_branch
      %10 = sbr.rel target = $region3
    $region8: #{re_cnn_forward.1} parent=1 // loop_exit
      _

</llo_original>
